<compile_context>
chip_gen: v6e
topology: v6e:2x2x1
jax: 0.10.0
libtpu: 0.0.40
codegen_flags: <defaults>
</compile_context>

<pallas_src>
import math

import jax
import jax.numpy as jnp
from jax.experimental import pallas as pl
from jax.experimental.pallas import tpu as pltpu

# ----- small synthetic ELECTRA config -----
B = 2            # batch
S = 8            # sequence length
H = 32           # hidden_size (== embedding_size, so no embeddings_project)
NH = 4           # num attention heads
DH = H // NH     # head dim
I = 64           # intermediate size
L = 2            # num_labels (forward's loss path uses .view(-1, 2))
NUM_LAYERS = 2
VOCAB = 100
MAX_POS = 32
TYPE_VOCAB = 2
LN_EPS = 1e-12
OUT_PAD = 128    # lane-dense classifier output width (sliced back to L outside)

BS = B * S


def _layernorm(x, g, b):
    mu = jnp.mean(x, axis=-1, keepdims=True)
    var = jnp.mean(jnp.square(x - mu), axis=-1, keepdims=True)
    return (x - mu) * jax.lax.rsqrt(var + LN_EPS) * g + b


# ---------------- single fused Pallas kernel ----------------

def electra_forward_kernel(emb_ref, bias_ref, embln_ref,
                           wqkv_ref, bqkv_ref, wo_ref, w1_ref, b1_ref, w2_ref,
                           vec_ref, clsw_ref, clsb_ref, out_ref):
    inv_sqrt_dh = 1.0 / math.sqrt(DH)

    embln = embln_ref[...]                                   # [2, H]  (gamma, beta)
    x = _layernorm(emb_ref[...], embln[0:1, :], embln[1:2, :])  # [BS, H] f32
    bias = bias_ref[...]                                     # [B, S] additive key mask

    for layer in range(NUM_LAYERS):        # static unroll; all weights stay in VMEM
        wqkv = wqkv_ref[layer]             # [H, 3H]      bf16 (Wq|Wk|Wv)
        bqkv = bqkv_ref[layer]             # [1, 3H]      f32
        wo_h = wo_ref[layer]               # [NH, DH, H]  bf16 (per-head out-proj)
        w1 = w1_ref[layer]                 # [H, I]       bf16
        b1 = b1_ref[layer]                 # [1, I]       f32
        w2 = w2_ref[layer]                 # [I, H]       bf16
        vecs = vec_ref[layer]              # [6, H] f32: bo, ln1_g, ln1_b, b2, ln2_g, ln2_b

        # fused QKV projection with batch folded into the MXU M dimension
        qkv = jnp.dot(x.astype(jnp.bfloat16), wqkv,
                      preferred_element_type=jnp.float32) + bqkv      # [BS, 3H] f32

        attn = jnp.zeros((BS, H), jnp.float32)
        for h in range(NH):                # static unroll over heads
            qh = qkv[:, h * DH:(h + 1) * DH].reshape(B, S, DH)
            kh = qkv[:, H + h * DH:H + (h + 1) * DH].reshape(B, S, DH)
            vh = qkv[:, 2 * H + h * DH:2 * H + (h + 1) * DH].reshape(B, S, DH)
            s = jnp.einsum('bqd,bkd->bqk', qh, kh,
                           preferred_element_type=jnp.float32) * inv_sqrt_dh
            s = s + bias[:, None, :]       # broadcast over queries (padding mask)
            p = jax.nn.softmax(s, axis=-1)
            ctx = jnp.einsum('bqk,bkd->bqd', p, vh,
                             preferred_element_type=jnp.float32)      # [B, S, DH]
            # per-head output projection accumulated directly into [BS, H]
            attn = attn + jnp.dot(ctx.reshape(BS, DH).astype(jnp.bfloat16),
                                  wo_h[h],
                                  preferred_element_type=jnp.float32)
        attn = attn + vecs[0:1, :]                                    # bo
        h1 = _layernorm(attn + x, vecs[1:2, :], vecs[2:3, :])

        # TODO(synk): HF ELECTRA "gelu" is erf-based; tanh approximation used here.
        inter = jax.nn.gelu(
            jnp.dot(h1.astype(jnp.bfloat16), w1,
                    preferred_element_type=jnp.float32) + b1,
            approximate=True)
        ffn = jnp.dot(inter.astype(jnp.bfloat16), w2,
                      preferred_element_type=jnp.float32) + vecs[3:4, :]
        x = _layernorm(ffn + h1, vecs[4:5, :], vecs[5:6, :])

    # classifier head: module only consumes logits[:, 0] -> only token-0 rows.
    # Write a lane-dense [B, OUT_PAD] slab (sliced back to L outside the kernel).
    x_cls = jnp.concatenate([x[b * S:b * S + 1, :] for b in range(B)], axis=0)  # [B, H]
    out_ref[...] = (jnp.dot(x_cls.astype(jnp.bfloat16), clsw_ref[...],
                            preferred_element_type=jnp.float32) + clsb_ref[...])


# ---------------- parameters & forward ----------------

def init_params(key):
    keys = iter(jax.random.split(key, 3 + 6 * NUM_LAYERS + 1))

    def nrm(shape):
        return 0.02 * jax.random.normal(next(keys), shape, jnp.float32)

    word_emb = nrm((VOCAB, H))
    pos_emb = nrm((MAX_POS, H))
    tok_emb = nrm((TYPE_VOCAB, H))

    wqkv, bqkv, wo, w1, b1, w2, vecs = [], [], [], [], [], [], []
    for _ in range(NUM_LAYERS):
        wq, wk, wv = nrm((H, H)), nrm((H, H)), nrm((H, H))
        wqkv.append(jnp.concatenate([wq, wk, wv], axis=1))        # [H, 3H]
        bqkv.append(jnp.zeros((1, 3 * H), jnp.float32))
        wo.append(nrm((H, H)).reshape(NH, DH, H))                 # per-head slices
        w1.append(nrm((H, I)))
        b1.append(jnp.zeros((1, I), jnp.float32))
        w2.append(nrm((I, H)))
        vecs.append(jnp.stack([
            jnp.zeros((H,), jnp.float32),   # attention output bias (bo)
            jnp.ones((H,), jnp.float32),    # LN1 gamma
            jnp.zeros((H,), jnp.float32),   # LN1 beta
            jnp.zeros((H,), jnp.float32),   # FFN output bias (b2)
            jnp.ones((H,), jnp.float32),    # LN2 gamma
            jnp.zeros((H,), jnp.float32),   # LN2 beta
        ], axis=0))                                               # [6, H]

    cls_w = nrm((H, L))

    return {
        'word_emb': word_emb,
        'pos_emb': pos_emb,
        'tok_emb': tok_emb,
        'emb_ln': jnp.stack([jnp.ones((H,), jnp.float32),
                             jnp.zeros((H,), jnp.float32)], axis=0),   # [2, H]
        'wqkv': jnp.stack(wqkv).astype(jnp.bfloat16),     # [NUM_LAYERS, H, 3H]
        'bqkv': jnp.stack(bqkv),                          # [NUM_LAYERS, 1, 3H]
        'wo':   jnp.stack(wo).astype(jnp.bfloat16),       # [NUM_LAYERS, NH, DH, H]
        'w1':   jnp.stack(w1).astype(jnp.bfloat16),       # [NUM_LAYERS, H, I]
        'b1':   jnp.stack(b1),                            # [NUM_LAYERS, 1, I]
        'w2':   jnp.stack(w2).astype(jnp.bfloat16),       # [NUM_LAYERS, I, H]
        'vecs': jnp.stack(vecs),                          # [NUM_LAYERS, 6, H]
        'cls_w_pad': jnp.pad(cls_w, ((0, 0), (0, OUT_PAD - L))).astype(jnp.bfloat16),
        'cls_b_pad': jnp.zeros((1, OUT_PAD), jnp.float32),
    }


def electra_for_token_classification(params, input_ids, attention_mask,
                                     token_type_ids=None):
    if token_type_ids is None:
        token_type_ids = jnp.zeros_like(input_ids)
    pos_ids = jnp.arange(input_ids.shape[1])[None, :]

    # --- embeddings (gather is glue); LayerNorm runs inside the fused kernel ---
    emb = (params['word_emb'][input_ids]
           + params['pos_emb'][pos_ids]
           + params['tok_emb'][token_type_ids])                      # [B, S, H]
    emb2 = emb.reshape(B * S, H).astype(jnp.float32)

    # extended additive attention mask: (1 - mask) * -10000, shape [B, S]
    attn_bias = (1.0 - attention_mask.astype(jnp.float32)) * -10000.0

    vmem_spec = [pl.BlockSpec(memory_space=pltpu.MemorySpace.VMEM) for _ in range(12)]
    logits_pad = pl.pallas_call(
        electra_forward_kernel,
        out_shape=jax.ShapeDtypeStruct((B, OUT_PAD), jnp.float32),
        in_specs=vmem_spec,
        out_specs=pl.BlockSpec(memory_space=pltpu.MemorySpace.VMEM),
    )(emb2, attn_bias, params['emb_ln'],
      params['wqkv'], params['bqkv'], params['wo'],
      params['w1'], params['b1'], params['w2'], params['vecs'],
      params['cls_w_pad'], params['cls_b_pad'])

    logits_head = logits_pad[:, :L]                                  # [B, L]

    # labels=None path, output_hidden_states=False -> output tuple is (logits_head,)
    return (logits_head,)


if __name__ == "__main__":
    key = jax.random.PRNGKey(0)
    pkey, ikey = jax.random.split(key)
    params = init_params(pkey)

    input_ids = jax.random.randint(ikey, (B, S), 0, VOCAB, dtype=jnp.int32)
    attention_mask = jnp.ones((B, S), jnp.int32)
    token_type_ids = jnp.zeros((B, S), jnp.int32)

    out = electra_for_token_classification(params, input_ids, attention_mask,
                                           token_type_ids)
    logits_head = jax.block_until_ready(out[0])
    assert logits_head.shape == (B, L), logits_head.shape
    assert bool(jnp.all(jnp.isfinite(logits_head)))
    print("KERNEL_OK")
</pallas_src>

<mosaic_0001>
module attributes {stable_mosaic.version = 11 : i64} {
  func.func @electra_forward_kernel(%arg0: memref<16x32xf32, #tpu.memory_space<vmem>>, %arg1: memref<2x8xf32, #tpu.memory_space<vmem>>, %arg2: memref<2x32xf32, #tpu.memory_space<vmem>>, %arg3: memref<2x32x96xbf16, #tpu.memory_space<vmem>>, %arg4: memref<2x1x96xf32, #tpu.memory_space<vmem>>, %arg5: memref<2x4x8x32xbf16, #tpu.memory_space<vmem>>, %arg6: memref<2x32x64xbf16, #tpu.memory_space<vmem>>, %arg7: memref<2x1x64xf32, #tpu.memory_space<vmem>>, %arg8: memref<2x64x32xbf16, #tpu.memory_space<vmem>>, %arg9: memref<2x6x32xf32, #tpu.memory_space<vmem>>, %arg10: memref<32x128xbf16, #tpu.memory_space<vmem>>, %arg11: memref<1x128xf32, #tpu.memory_space<vmem>>, %arg12: memref<2x128xf32, #tpu.memory_space<vmem>>) attributes {dimension_semantics = [], scalar_prefetch = 0 : i64, scratch_operands = 0 : i64, tpu.core_type = #tpu.core_type<tc>} {
    %c0 = arith.constant 0 : index
    %c0_0 = arith.constant 0 : index
    %0 = vector.load %arg2[%c0, %c0_0] : memref<2x32xf32, #tpu.memory_space<vmem>>, vector<2x32xf32>
    %c0_1 = arith.constant 0 : index
    %c0_2 = arith.constant 0 : index
    %1 = vector.load %arg0[%c0_1, %c0_2] : memref<16x32xf32, #tpu.memory_space<vmem>>, vector<16x32xf32>
    %2 = vector.extract_strided_slice %0 {offsets = [0, 0], sizes = [1, 32], strides = [1, 1]} : vector<2x32xf32> to vector<1x32xf32>
    %3 = vector.extract_strided_slice %0 {offsets = [1, 0], sizes = [1, 32], strides = [1, 1]} : vector<2x32xf32> to vector<1x32xf32>
    %cst = arith.constant dense<0.000000e+00> : vector<16xf32>
    %4 = vector.multi_reduction <add>, %1, %cst [1] : vector<16x32xf32> to vector<16xf32>
    %5 = vector.shape_cast %4 : vector<16xf32> to vector<16x1xf32>
    %cst_3 = arith.constant 3.200000e+01 : f32
    %6 = vector.broadcast %cst_3 : f32 to vector<16x1xf32>
    %7 = arith.divf %5, %6 : vector<16x1xf32>
    %8 = vector.broadcast %7 : vector<16x1xf32> to vector<16x32xf32>
    %9 = arith.subf %1, %8 : vector<16x32xf32>
    %10 = arith.mulf %9, %9 : vector<16x32xf32>
    %cst_4 = arith.constant dense<0.000000e+00> : vector<16xf32>
    %11 = vector.multi_reduction <add>, %10, %cst_4 [1] : vector<16x32xf32> to vector<16xf32>
    %12 = vector.shape_cast %11 : vector<16xf32> to vector<16x1xf32>
    %cst_5 = arith.constant 3.200000e+01 : f32
    %13 = vector.broadcast %cst_5 : f32 to vector<16x1xf32>
    %14 = arith.divf %12, %13 : vector<16x1xf32>
    %15 = vector.broadcast %7 : vector<16x1xf32> to vector<16x32xf32>
    %16 = arith.subf %1, %15 : vector<16x32xf32>
    %cst_6 = arith.constant 9.99999996E-13 : f32
    %17 = vector.broadcast %cst_6 : f32 to vector<16x1xf32>
    %18 = arith.addf %14, %17 : vector<16x1xf32>
    %19 = math.rsqrt %18 : vector<16x1xf32>
    %20 = vector.broadcast %19 : vector<16x1xf32> to vector<16x32xf32>
    %21 = arith.mulf %16, %20 : vector<16x32xf32>
    %22 = vector.broadcast %2 : vector<1x32xf32> to vector<16x32xf32>
    %23 = arith.mulf %21, %22 : vector<16x32xf32>
    %24 = vector.broadcast %3 : vector<1x32xf32> to vector<16x32xf32>
    %25 = arith.addf %23, %24 : vector<16x32xf32>
    %c0_7 = arith.constant 0 : index
    %c0_8 = arith.constant 0 : index
    %26 = vector.load %arg1[%c0_7, %c0_8] : memref<2x8xf32, #tpu.memory_space<vmem>>, vector<2x8xf32>
    %c0_9 = arith.constant 0 : index
    %c0_10 = arith.constant 0 : index
    %c0_11 = arith.constant 0 : index
    %27 = vector.load %arg3[%c0_9, %c0_10, %c0_11] : memref<2x32x96xbf16, #tpu.memory_space<vmem>>, vector<1x32x96xbf16>
    %28 = vector.shape_cast %27 : vector<1x32x96xbf16> to vector<32x96xbf16>
    %c0_12 = arith.constant 0 : index
    %c0_13 = arith.constant 0 : index
    %c0_14 = arith.constant 0 : index
    %29 = vector.load %arg4[%c0_12, %c0_13, %c0_14] : memref<2x1x96xf32, #tpu.memory_space<vmem>>, vector<1x1x96xf32>
    %30 = vector.shape_cast %29 : vector<1x1x96xf32> to vector<1x96xf32>
    %c0_15 = arith.constant 0 : index
    %c0_16 = arith.constant 0 : index
    %c0_17 = arith.constant 0 : index
    %c0_18 = arith.constant 0 : index
    %31 = vector.load %arg5[%c0_15, %c0_16, %c0_17, %c0_18] : memref<2x4x8x32xbf16, #tpu.memory_space<vmem>>, vector<1x4x8x32xbf16>
    %32 = vector.shape_cast %31 : vector<1x4x8x32xbf16> to vector<4x8x32xbf16>
    %c0_19 = arith.constant 0 : index
    %c0_20 = arith.constant 0 : index
    %c0_21 = arith.constant 0 : index
    %33 = vector.load %arg6[%c0_19, %c0_20, %c0_21] : memref<2x32x64xbf16, #tpu.memory_space<vmem>>, vector<1x32x64xbf16>
    %34 = vector.shape_cast %33 : vector<1x32x64xbf16> to vector<32x64xbf16>
    %c0_22 = arith.constant 0 : index
    %c0_23 = arith.constant 0 : index
    %c0_24 = arith.constant 0 : index
    %35 = vector.load %arg7[%c0_22, %c0_23, %c0_24] : memref<2x1x64xf32, #tpu.memory_space<vmem>>, vector<1x1x64xf32>
    %36 = vector.shape_cast %35 : vector<1x1x64xf32> to vector<1x64xf32>
    %c0_25 = arith.constant 0 : index
    %c0_26 = arith.constant 0 : index
    %c0_27 = arith.constant 0 : index
    %37 = vector.load %arg8[%c0_25, %c0_26, %c0_27] : memref<2x64x32xbf16, #tpu.memory_space<vmem>>, vector<1x64x32xbf16>
    %38 = vector.shape_cast %37 : vector<1x64x32xbf16> to vector<64x32xbf16>
    %c0_28 = arith.constant 0 : index
    %c0_29 = arith.constant 0 : index
    %c0_30 = arith.constant 0 : index
    %39 = vector.load %arg9[%c0_28, %c0_29, %c0_30] : memref<2x6x32xf32, #tpu.memory_space<vmem>>, vector<1x6x32xf32>
    %40 = vector.shape_cast %39 : vector<1x6x32xf32> to vector<6x32xf32>
    %41 = arith.truncf %25 : vector<16x32xf32> to vector<16x32xbf16>
    %cst_31 = arith.constant dense<0.000000e+00> : vector<16x96xf32>
    %42 = tpu.matmul %41, %28, %cst_31 {dimension_numbers = #tpu.dot_dimension_numbers<[1], [0], [0], [1], [0, 0, 1, 1], [], []>} : vector<16x32xbf16>, vector<32x96xbf16>, vector<16x96xf32> -> vector<16x96xf32>
    %43 = vector.broadcast %30 : vector<1x96xf32> to vector<16x96xf32>
    %44 = arith.addf %42, %43 : vector<16x96xf32>
    %cst_32 = arith.constant 0.000000e+00 : f32
    %45 = vector.broadcast %cst_32 : f32 to vector<16x32xf32>
    %46 = vector.extract_strided_slice %44 {offsets = [0, 0], sizes = [16, 8], strides = [1, 1]} : vector<16x96xf32> to vector<16x8xf32>
    %47 = vector.shape_cast %46 : vector<16x8xf32> to vector<2x8x8xf32>
    %48 = vector.extract_strided_slice %44 {offsets = [0, 32], sizes = [16, 8], strides = [1, 1]} : vector<16x96xf32> to vector<16x8xf32>
    %49 = vector.shape_cast %48 : vector<16x8xf32> to vector<2x8x8xf32>
    %50 = vector.extract_strided_slice %44 {offsets = [0, 64], sizes = [16, 8], strides = [1, 1]} : vector<16x96xf32> to vector<16x8xf32>
    %51 = vector.shape_cast %50 : vector<16x8xf32> to vector<2x8x8xf32>
    "tpu.trace_start"() <{level = 10 : i32, message = "bqd,bkd->bqk"}> : () -> ()
    %cst_33 = arith.constant dense<0.000000e+00> : vector<2x8x8xf32>
    %52 = tpu.matmul %47, %49, %cst_33 {dimension_numbers = #tpu.dot_dimension_numbers<[2], [2], [1], [1], [0, 0, 0, 1, 1, 1], [0], [0]>} : vector<2x8x8xf32>, vector<2x8x8xf32>, vector<2x8x8xf32> -> vector<2x8x8xf32>
    "tpu.trace_stop"() : () -> ()
    %cst_34 = arith.constant 0.353553385 : f32
    %53 = vector.broadcast %cst_34 : f32 to vector<2x8x8xf32>
    %54 = arith.mulf %52, %53 : vector<2x8x8xf32>
    %55 = vector.shape_cast %26 : vector<2x8xf32> to vector<2x1x8xf32>
    %56 = vector.broadcast %55 : vector<2x1x8xf32> to vector<2x8x8xf32>
    %57 = arith.addf %54, %56 : vector<2x8x8xf32>
    %cst_35 = arith.constant dense<0xFF800000> : vector<2x8xf32>
    %58 = vector.multi_reduction <maximumf>, %57, %cst_35 [2] : vector<2x8x8xf32> to vector<2x8xf32>
    %cst_36 = arith.constant 0xFF800000 : f32
    %59 = vector.broadcast %cst_36 : f32 to vector<2x8xf32>
    %60 = arith.maximumf %59, %58 : vector<2x8xf32>
    %61 = vector.shape_cast %60 : vector<2x8xf32> to vector<2x8x1xf32>
    %62 = vector.broadcast %61 : vector<2x8x1xf32> to vector<2x8x8xf32>
    %63 = arith.subf %57, %62 : vector<2x8x8xf32>
    %64 = math.exp %63 : vector<2x8x8xf32>
    %cst_37 = arith.constant dense<0.000000e+00> : vector<2x8xf32>
    %65 = vector.multi_reduction <add>, %64, %cst_37 [2] : vector<2x8x8xf32> to vector<2x8xf32>
    %66 = vector.shape_cast %65 : vector<2x8xf32> to vector<2x8x1xf32>
    %67 = vector.broadcast %66 : vector<2x8x1xf32> to vector<2x8x8xf32>
    %68 = arith.divf %64, %67 : vector<2x8x8xf32>
    "tpu.trace_start"() <{level = 10 : i32, message = "bqk,bkd->bqd"}> : () -> ()
    %cst_38 = arith.constant dense<0.000000e+00> : vector<2x8x8xf32>
    %69 = tpu.matmul %68, %51, %cst_38 {dimension_numbers = #tpu.dot_dimension_numbers<[2], [1], [1], [2], [0, 0, 0, 1, 1, 2], [0], [0]>} : vector<2x8x8xf32>, vector<2x8x8xf32>, vector<2x8x8xf32> -> vector<2x8x8xf32>
    "tpu.trace_stop"() : () -> ()
    %70 = vector.shape_cast %69 : vector<2x8x8xf32> to vector<16x8xf32>
    %71 = arith.truncf %70 : vector<16x8xf32> to vector<16x8xbf16>
    %72 = vector.extract_strided_slice %32 {offsets = [0, 0, 0], sizes = [1, 8, 32], strides = [1, 1, 1]} : vector<4x8x32xbf16> to vector<1x8x32xbf16>
    %73 = vector.shape_cast %72 : vector<1x8x32xbf16> to vector<8x32xbf16>
    %cst_39 = arith.constant dense<0.000000e+00> : vector<16x32xf32>
    %74 = tpu.matmul %71, %73, %cst_39 {dimension_numbers = #tpu.dot_dimension_numbers<[1], [0], [0], [1], [0, 0, 1, 1], [], []>} : vector<16x8xbf16>, vector<8x32xbf16>, vector<16x32xf32> -> vector<16x32xf32>
    %75 = arith.addf %45, %74 : vector<16x32xf32>
    %76 = vector.extract_strided_slice %44 {offsets = [0, 8], sizes = [16, 8], strides = [1, 1]} : vector<16x96xf32> to vector<16x8xf32>
    %77 = vector.shape_cast %76 : vector<16x8xf32> to vector<2x8x8xf32>
    %78 = vector.extract_strided_slice %44 {offsets = [0, 40], sizes = [16, 8], strides = [1, 1]} : vector<16x96xf32> to vector<16x8xf32>
    %79 = vector.shape_cast %78 : vector<16x8xf32> to vector<2x8x8xf32>
    %80 = vector.extract_strided_slice %44 {offsets = [0, 72], sizes = [16, 8], strides = [1, 1]} : vector<16x96xf32> to vector<16x8xf32>
    %81 = vector.shape_cast %80 : vector<16x8xf32> to vector<2x8x8xf32>
    "tpu.trace_start"() <{level = 10 : i32, message = "bqd,bkd->bqk"}> : () -> ()
    %cst_40 = arith.constant dense<0.000000e+00> : vector<2x8x8xf32>
    %82 = tpu.matmul %77, %79, %cst_40 {dimension_numbers = #tpu.dot_dimension_numbers<[2], [2], [1], [1], [0, 0, 0, 1, 1, 1], [0], [0]>} : vector<2x8x8xf32>, vector<2x8x8xf32>, vector<2x8x8xf32> -> vector<2x8x8xf32>
    "tpu.trace_stop"() : () -> ()
    %cst_41 = arith.constant 0.353553385 : f32
    %83 = vector.broadcast %cst_41 : f32 to vector<2x8x8xf32>
    %84 = arith.mulf %82, %83 : vector<2x8x8xf32>
    %85 = vector.shape_cast %26 : vector<2x8xf32> to vector<2x1x8xf32>
    %86 = vector.broadcast %85 : vector<2x1x8xf32> to vector<2x8x8xf32>
    %87 = arith.addf %84, %86 : vector<2x8x8xf32>
    %cst_42 = arith.constant dense<0xFF800000> : vector<2x8xf32>
    %88 = vector.multi_reduction <maximumf>, %87, %cst_42 [2] : vector<2x8x8xf32> to vector<2x8xf32>
    %cst_43 = arith.constant 0xFF800000 : f32
    %89 = vector.broadcast %cst_43 : f32 to vector<2x8xf32>
    %90 = arith.maximumf %89, %88 : vector<2x8xf32>
    %91 = vector.shape_cast %90 : vector<2x8xf32> to vector<2x8x1xf32>
    %92 = vector.broadcast %91 : vector<2x8x1xf32> to vector<2x8x8xf32>
    %93 = arith.subf %87, %92 : vector<2x8x8xf32>
    %94 = math.exp %93 : vector<2x8x8xf32>
    %cst_44 = arith.constant dense<0.000000e+00> : vector<2x8xf32>
    %95 = vector.multi_reduction <add>, %94, %cst_44 [2] : vector<2x8x8xf32> to vector<2x8xf32>
    %96 = vector.shape_cast %95 : vector<2x8xf32> to vector<2x8x1xf32>
    %97 = vector.broadcast %96 : vector<2x8x1xf32> to vector<2x8x8xf32>
    %98 = arith.divf %94, %97 : vector<2x8x8xf32>
    "tpu.trace_start"() <{level = 10 : i32, message = "bqk,bkd->bqd"}> : () -> ()
    %cst_45 = arith.constant dense<0.000000e+00> : vector<2x8x8xf32>
    %99 = tpu.matmul %98, %81, %cst_45 {dimension_numbers = #tpu.dot_dimension_numbers<[2], [1], [1], [2], [0, 0, 0, 1, 1, 2], [0], [0]>} : vector<2x8x8xf32>, vector<2x8x8xf32>, vector<2x8x8xf32> -> vector<2x8x8xf32>
    "tpu.trace_stop"() : () -> ()
    %100 = vector.shape_cast %99 : vector<2x8x8xf32> to vector<16x8xf32>
    %101 = arith.truncf %100 : vector<16x8xf32> to vector<16x8xbf16>
    %102 = vector.extract_strided_slice %32 {offsets = [1, 0, 0], sizes = [1, 8, 32], strides = [1, 1, 1]} : vector<4x8x32xbf16> to vector<1x8x32xbf16>
    %103 = vector.shape_cast %102 : vector<1x8x32xbf16> to vector<8x32xbf16>
    %cst_46 = arith.constant dense<0.000000e+00> : vector<16x32xf32>
    %104 = tpu.matmul %101, %103, %cst_46 {dimension_numbers = #tpu.dot_dimension_numbers<[1], [0], [0], [1], [0, 0, 1, 1], [], []>} : vector<16x8xbf16>, vector<8x32xbf16>, vector<16x32xf32> -> vector<16x32xf32>
    %105 = arith.addf %75, %104 : vector<16x32xf32>
    %106 = vector.extract_strided_slice %44 {offsets = [0, 16], sizes = [16, 8], strides = [1, 1]} : vector<16x96xf32> to vector<16x8xf32>
    %107 = vector.shape_cast %106 : vector<16x8xf32> to vector<2x8x8xf32>
    %108 = vector.extract_strided_slice %44 {offsets = [0, 48], sizes = [16, 8], strides = [1, 1]} : vector<16x96xf32> to vector<16x8xf32>
    %109 = vector.shape_cast %108 : vector<16x8xf32> to vector<2x8x8xf32>
    %110 = vector.extract_strided_slice %44 {offsets = [0, 80], sizes = [16, 8], strides = [1, 1]} : vector<16x96xf32> to vector<16x8xf32>
    %111 = vector.shape_cast %110 : vector<16x8xf32> to vector<2x8x8xf32>
    "tpu.trace_start"() <{level = 10 : i32, message = "bqd,bkd->bqk"}> : () -> ()
    %cst_47 = arith.constant dense<0.000000e+00> : vector<2x8x8xf32>
    %112 = tpu.matmul %107, %109, %cst_47 {dimension_numbers = #tpu.dot_dimension_numbers<[2], [2], [1], [1], [0, 0, 0, 1, 1, 1], [0], [0]>} : vector<2x8x8xf32>, vector<2x8x8xf32>, vector<2x8x8xf32> -> vector<2x8x8xf32>
    "tpu.trace_stop"() : () -> ()
    %cst_48 = arith.constant 0.353553385 : f32
    %113 = vector.broadcast %cst_48 : f32 to vector<2x8x8xf32>
    %114 = arith.mulf %112, %113 : vector<2x8x8xf32>
    %115 = vector.shape_cast %26 : vector<2x8xf32> to vector<2x1x8xf32>
    %116 = vector.broadcast %115 : vector<2x1x8xf32> to vector<2x8x8xf32>
    %117 = arith.addf %114, %116 : vector<2x8x8xf32>
    %cst_49 = arith.constant dense<0xFF800000> : vector<2x8xf32>
    %118 = vector.multi_reduction <maximumf>, %117, %cst_49 [2] : vector<2x8x8xf32> to vector<2x8xf32>
    %cst_50 = arith.constant 0xFF800000 : f32
    %119 = vector.broadcast %cst_50 : f32 to vector<2x8xf32>
    %120 = arith.maximumf %119, %118 : vector<2x8xf32>
    %121 = vector.shape_cast %120 : vector<2x8xf32> to vector<2x8x1xf32>
    %122 = vector.broadcast %121 : vector<2x8x1xf32> to vector<2x8x8xf32>
    %123 = arith.subf %117, %122 : vector<2x8x8xf32>
    %124 = math.exp %123 : vector<2x8x8xf32>
    %cst_51 = arith.constant dense<0.000000e+00> : vector<2x8xf32>
    %125 = vector.multi_reduction <add>, %124, %cst_51 [2] : vector<2x8x8xf32> to vector<2x8xf32>
    %126 = vector.shape_cast %125 : vector<2x8xf32> to vector<2x8x1xf32>
    %127 = vector.broadcast %126 : vector<2x8x1xf32> to vector<2x8x8xf32>
    %128 = arith.divf %124, %127 : vector<2x8x8xf32>
    "tpu.trace_start"() <{level = 10 : i32, message = "bqk,bkd->bqd"}> : () -> ()
    %cst_52 = arith.constant dense<0.000000e+00> : vector<2x8x8xf32>
    %129 = tpu.matmul %128, %111, %cst_52 {dimension_numbers = #tpu.dot_dimension_numbers<[2], [1], [1], [2], [0, 0, 0, 1, 1, 2], [0], [0]>} : vector<2x8x8xf32>, vector<2x8x8xf32>, vector<2x8x8xf32> -> vector<2x8x8xf32>
    "tpu.trace_stop"() : () -> ()
    %130 = vector.shape_cast %129 : vector<2x8x8xf32> to vector<16x8xf32>
    %131 = arith.truncf %130 : vector<16x8xf32> to vector<16x8xbf16>
    %132 = vector.extract_strided_slice %32 {offsets = [2, 0, 0], sizes = [1, 8, 32], strides = [1, 1, 1]} : vector<4x8x32xbf16> to vector<1x8x32xbf16>
    %133 = vector.shape_cast %132 : vector<1x8x32xbf16> to vector<8x32xbf16>
    %cst_53 = arith.constant dense<0.000000e+00> : vector<16x32xf32>
    %134 = tpu.matmul %131, %133, %cst_53 {dimension_numbers = #tpu.dot_dimension_numbers<[1], [0], [0], [1], [0, 0, 1, 1], [], []>} : vector<16x8xbf16>, vector<8x32xbf16>, vector<16x32xf32> -> vector<16x32xf32>
    %135 = arith.addf %105, %134 : vector<16x32xf32>
    %136 = vector.extract_strided_slice %44 {offsets = [0, 24], sizes = [16, 8], strides = [1, 1]} : vector<16x96xf32> to vector<16x8xf32>
    %137 = vector.shape_cast %136 : vector<16x8xf32> to vector<2x8x8xf32>
    %138 = vector.extract_strided_slice %44 {offsets = [0, 56], sizes = [16, 8], strides = [1, 1]} : vector<16x96xf32> to vector<16x8xf32>
    %139 = vector.shape_cast %138 : vector<16x8xf32> to vector<2x8x8xf32>
    %140 = vector.extract_strided_slice %44 {offsets = [0, 88], sizes = [16, 8], strides = [1, 1]} : vector<16x96xf32> to vector<16x8xf32>
    %141 = vector.shape_cast %140 : vector<16x8xf32> to vector<2x8x8xf32>
    "tpu.trace_start"() <{level = 10 : i32, message = "bqd,bkd->bqk"}> : () -> ()
    %cst_54 = arith.constant dense<0.000000e+00> : vector<2x8x8xf32>
    %142 = tpu.matmul %137, %139, %cst_54 {dimension_numbers = #tpu.dot_dimension_numbers<[2], [2], [1], [1], [0, 0, 0, 1, 1, 1], [0], [0]>} : vector<2x8x8xf32>, vector<2x8x8xf32>, vector<2x8x8xf32> -> vector<2x8x8xf32>
    "tpu.trace_stop"() : () -> ()
    %cst_55 = arith.constant 0.353553385 : f32
    %143 = vector.broadcast %cst_55 : f32 to vector<2x8x8xf32>
    %144 = arith.mulf %142, %143 : vector<2x8x8xf32>
    %145 = vector.shape_cast %26 : vector<2x8xf32> to vector<2x1x8xf32>
    %146 = vector.broadcast %145 : vector<2x1x8xf32> to vector<2x8x8xf32>
    %147 = arith.addf %144, %146 : vector<2x8x8xf32>
    %cst_56 = arith.constant dense<0xFF800000> : vector<2x8xf32>
    %148 = vector.multi_reduction <maximumf>, %147, %cst_56 [2] : vector<2x8x8xf32> to vector<2x8xf32>
    %cst_57 = arith.constant 0xFF800000 : f32
    %149 = vector.broadcast %cst_57 : f32 to vector<2x8xf32>
    %150 = arith.maximumf %149, %148 : vector<2x8xf32>
    %151 = vector.shape_cast %150 : vector<2x8xf32> to vector<2x8x1xf32>
    %152 = vector.broadcast %151 : vector<2x8x1xf32> to vector<2x8x8xf32>
    %153 = arith.subf %147, %152 : vector<2x8x8xf32>
    %154 = math.exp %153 : vector<2x8x8xf32>
    %cst_58 = arith.constant dense<0.000000e+00> : vector<2x8xf32>
    %155 = vector.multi_reduction <add>, %154, %cst_58 [2] : vector<2x8x8xf32> to vector<2x8xf32>
    %156 = vector.shape_cast %155 : vector<2x8xf32> to vector<2x8x1xf32>
    %157 = vector.broadcast %156 : vector<2x8x1xf32> to vector<2x8x8xf32>
    %158 = arith.divf %154, %157 : vector<2x8x8xf32>
    "tpu.trace_start"() <{level = 10 : i32, message = "bqk,bkd->bqd"}> : () -> ()
    %cst_59 = arith.constant dense<0.000000e+00> : vector<2x8x8xf32>
    %159 = tpu.matmul %158, %141, %cst_59 {dimension_numbers = #tpu.dot_dimension_numbers<[2], [1], [1], [2], [0, 0, 0, 1, 1, 2], [0], [0]>} : vector<2x8x8xf32>, vector<2x8x8xf32>, vector<2x8x8xf32> -> vector<2x8x8xf32>
    "tpu.trace_stop"() : () -> ()
    %160 = vector.shape_cast %159 : vector<2x8x8xf32> to vector<16x8xf32>
    %161 = arith.truncf %160 : vector<16x8xf32> to vector<16x8xbf16>
    %162 = vector.extract_strided_slice %32 {offsets = [3, 0, 0], sizes = [1, 8, 32], strides = [1, 1, 1]} : vector<4x8x32xbf16> to vector<1x8x32xbf16>
    %163 = vector.shape_cast %162 : vector<1x8x32xbf16> to vector<8x32xbf16>
    %cst_60 = arith.constant dense<0.000000e+00> : vector<16x32xf32>
    %164 = tpu.matmul %161, %163, %cst_60 {dimension_numbers = #tpu.dot_dimension_numbers<[1], [0], [0], [1], [0, 0, 1, 1], [], []>} : vector<16x8xbf16>, vector<8x32xbf16>, vector<16x32xf32> -> vector<16x32xf32>
    %165 = arith.addf %135, %164 : vector<16x32xf32>
    %166 = vector.extract_strided_slice %40 {offsets = [0, 0], sizes = [1, 32], strides = [1, 1]} : vector<6x32xf32> to vector<1x32xf32>
    %167 = vector.broadcast %166 : vector<1x32xf32> to vector<16x32xf32>
    %168 = arith.addf %165, %167 : vector<16x32xf32>
    %169 = arith.addf %168, %25 : vector<16x32xf32>
    %170 = vector.extract_strided_slice %40 {offsets = [1, 0], sizes = [1, 32], strides = [1, 1]} : vector<6x32xf32> to vector<1x32xf32>
    %171 = vector.extract_strided_slice %40 {offsets = [2, 0], sizes = [1, 32], strides = [1, 1]} : vector<6x32xf32> to vector<1x32xf32>
    %cst_61 = arith.constant dense<0.000000e+00> : vector<16xf32>
    %172 = vector.multi_reduction <add>, %169, %cst_61 [1] : vector<16x32xf32> to vector<16xf32>
    %173 = vector.shape_cast %172 : vector<16xf32> to vector<16x1xf32>
    %cst_62 = arith.constant 3.200000e+01 : f32
    %174 = vector.broadcast %cst_62 : f32 to vector<16x1xf32>
    %175 = arith.divf %173, %174 : vector<16x1xf32>
    %176 = vector.broadcast %175 : vector<16x1xf32> to vector<16x32xf32>
    %177 = arith.subf %169, %176 : vector<16x32xf32>
    %178 = arith.mulf %177, %177 : vector<16x32xf32>
    %cst_63 = arith.constant dense<0.000000e+00> : vector<16xf32>
    %179 = vector.multi_reduction <add>, %178, %cst_63 [1] : vector<16x32xf32> to vector<16xf32>
    %180 = vector.shape_cast %179 : vector<16xf32> to vector<16x1xf32>
    %cst_64 = arith.constant 3.200000e+01 : f32
    %181 = vector.broadcast %cst_64 : f32 to vector<16x1xf32>
    %182 = arith.divf %180, %181 : vector<16x1xf32>
    %183 = vector.broadcast %175 : vector<16x1xf32> to vector<16x32xf32>
    %184 = arith.subf %169, %183 : vector<16x32xf32>
    %cst_65 = arith.constant 9.99999996E-13 : f32
    %185 = vector.broadcast %cst_65 : f32 to vector<16x1xf32>
    %186 = arith.addf %182, %185 : vector<16x1xf32>
    %187 = math.rsqrt %186 : vector<16x1xf32>
    %188 = vector.broadcast %187 : vector<16x1xf32> to vector<16x32xf32>
    %189 = arith.mulf %184, %188 : vector<16x32xf32>
    %190 = vector.broadcast %170 : vector<1x32xf32> to vector<16x32xf32>
    %191 = arith.mulf %189, %190 : vector<16x32xf32>
    %192 = vector.broadcast %171 : vector<1x32xf32> to vector<16x32xf32>
    %193 = arith.addf %191, %192 : vector<16x32xf32>
    %194 = arith.truncf %193 : vector<16x32xf32> to vector<16x32xbf16>
    %cst_66 = arith.constant dense<0.000000e+00> : vector<16x64xf32>
    %195 = tpu.matmul %194, %34, %cst_66 {dimension_numbers = #tpu.dot_dimension_numbers<[1], [0], [0], [1], [0, 0, 1, 1], [], []>} : vector<16x32xbf16>, vector<32x64xbf16>, vector<16x64xf32> -> vector<16x64xf32>
    %196 = vector.broadcast %36 : vector<1x64xf32> to vector<16x64xf32>
    %197 = arith.addf %195, %196 : vector<16x64xf32>
    %198 = arith.mulf %197, %197 : vector<16x64xf32>
    %199 = arith.mulf %197, %198 : vector<16x64xf32>
    %cst_67 = arith.constant 4.471500e-02 : f32
    %200 = vector.broadcast %cst_67 : f32 to vector<16x64xf32>
    %201 = arith.mulf %200, %199 : vector<16x64xf32>
    %202 = arith.addf %197, %201 : vector<16x64xf32>
    %cst_68 = arith.constant 0.797884583 : f32
    %203 = vector.broadcast %cst_68 : f32 to vector<16x64xf32>
    %204 = arith.mulf %203, %202 : vector<16x64xf32>
    %205 = math.tanh %204 : vector<16x64xf32>
    %cst_69 = arith.constant 1.000000e+00 : f32
    %206 = vector.broadcast %cst_69 : f32 to vector<16x64xf32>
    %207 = arith.addf %206, %205 : vector<16x64xf32>
    %cst_70 = arith.constant 5.000000e-01 : f32
    %208 = vector.broadcast %cst_70 : f32 to vector<16x64xf32>
    %209 = arith.mulf %208, %207 : vector<16x64xf32>
    %210 = arith.mulf %197, %209 : vector<16x64xf32>
    %211 = arith.truncf %210 : vector<16x64xf32> to vector<16x64xbf16>
    %cst_71 = arith.constant dense<0.000000e+00> : vector<16x32xf32>
    %212 = tpu.matmul %211, %38, %cst_71 {dimension_numbers = #tpu.dot_dimension_numbers<[1], [0], [0], [1], [0, 0, 1, 1], [], []>} : vector<16x64xbf16>, vector<64x32xbf16>, vector<16x32xf32> -> vector<16x32xf32>
    %213 = vector.extract_strided_slice %40 {offsets = [3, 0], sizes = [1, 32], strides = [1, 1]} : vector<6x32xf32> to vector<1x32xf32>
    %214 = vector.broadcast %213 : vector<1x32xf32> to vector<16x32xf32>
    %215 = arith.addf %212, %214 : vector<16x32xf32>
    %216 = arith.addf %215, %193 : vector<16x32xf32>
    %217 = vector.extract_strided_slice %40 {offsets = [4, 0], sizes = [1, 32], strides = [1, 1]} : vector<6x32xf32> to vector<1x32xf32>
    %218 = vector.extract_strided_slice %40 {offsets = [5, 0], sizes = [1, 32], strides = [1, 1]} : vector<6x32xf32> to vector<1x32xf32>
    %cst_72 = arith.constant dense<0.000000e+00> : vector<16xf32>
    %219 = vector.multi_reduction <add>, %216, %cst_72 [1] : vector<16x32xf32> to vector<16xf32>
    %220 = vector.shape_cast %219 : vector<16xf32> to vector<16x1xf32>
    %cst_73 = arith.constant 3.200000e+01 : f32
    %221 = vector.broadcast %cst_73 : f32 to vector<16x1xf32>
    %222 = arith.divf %220, %221 : vector<16x1xf32>
    %223 = vector.broadcast %222 : vector<16x1xf32> to vector<16x32xf32>
    %224 = arith.subf %216, %223 : vector<16x32xf32>
    %225 = arith.mulf %224, %224 : vector<16x32xf32>
    %cst_74 = arith.constant dense<0.000000e+00> : vector<16xf32>
    %226 = vector.multi_reduction <add>, %225, %cst_74 [1] : vector<16x32xf32> to vector<16xf32>
    %227 = vector.shape_cast %226 : vector<16xf32> to vector<16x1xf32>
    %cst_75 = arith.constant 3.200000e+01 : f32
    %228 = vector.broadcast %cst_75 : f32 to vector<16x1xf32>
    %229 = arith.divf %227, %228 : vector<16x1xf32>
    %230 = vector.broadcast %222 : vector<16x1xf32> to vector<16x32xf32>
    %231 = arith.subf %216, %230 : vector<16x32xf32>
    %cst_76 = arith.constant 9.99999996E-13 : f32
    %232 = vector.broadcast %cst_76 : f32 to vector<16x1xf32>
    %233 = arith.addf %229, %232 : vector<16x1xf32>
    %234 = math.rsqrt %233 : vector<16x1xf32>
    %235 = vector.broadcast %234 : vector<16x1xf32> to vector<16x32xf32>
    %236 = arith.mulf %231, %235 : vector<16x32xf32>
    %237 = vector.broadcast %217 : vector<1x32xf32> to vector<16x32xf32>
    %238 = arith.mulf %236, %237 : vector<16x32xf32>
    %239 = vector.broadcast %218 : vector<1x32xf32> to vector<16x32xf32>
    %240 = arith.addf %238, %239 : vector<16x32xf32>
    %c1 = arith.constant 1 : index
    %c0_77 = arith.constant 0 : index
    %c0_78 = arith.constant 0 : index
    %241 = vector.load %arg3[%c1, %c0_77, %c0_78] : memref<2x32x96xbf16, #tpu.memory_space<vmem>>, vector<1x32x96xbf16>
    %242 = vector.shape_cast %241 : vector<1x32x96xbf16> to vector<32x96xbf16>
    %c1_79 = arith.constant 1 : index
    %c0_80 = arith.constant 0 : index
    %c0_81 = arith.constant 0 : index
    %243 = vector.load %arg4[%c1_79, %c0_80, %c0_81] : memref<2x1x96xf32, #tpu.memory_space<vmem>>, vector<1x1x96xf32>
    %244 = vector.shape_cast %243 : vector<1x1x96xf32> to vector<1x96xf32>
    %c1_82 = arith.constant 1 : index
    %c0_83 = arith.constant 0 : index
    %c0_84 = arith.constant 0 : index
    %c0_85 = arith.constant 0 : index
    %245 = vector.load %arg5[%c1_82, %c0_83, %c0_84, %c0_85] : memref<2x4x8x32xbf16, #tpu.memory_space<vmem>>, vector<1x4x8x32xbf16>
    %246 = vector.shape_cast %245 : vector<1x4x8x32xbf16> to vector<4x8x32xbf16>
    %c1_86 = arith.constant 1 : index
    %c0_87 = arith.constant 0 : index
    %c0_88 = arith.constant 0 : index
    %247 = vector.load %arg6[%c1_86, %c0_87, %c0_88] : memref<2x32x64xbf16, #tpu.memory_space<vmem>>, vector<1x32x64xbf16>
    %248 = vector.shape_cast %247 : vector<1x32x64xbf16> to vector<32x64xbf16>
    %c1_89 = arith.constant 1 : index
    %c0_90 = arith.constant 0 : index
    %c0_91 = arith.constant 0 : index
    %249 = vector.load %arg7[%c1_89, %c0_90, %c0_91] : memref<2x1x64xf32, #tpu.memory_space<vmem>>, vector<1x1x64xf32>
    %250 = vector.shape_cast %249 : vector<1x1x64xf32> to vector<1x64xf32>
    %c1_92 = arith.constant 1 : index
    %c0_93 = arith.constant 0 : index
    %c0_94 = arith.constant 0 : index
    %251 = vector.load %arg8[%c1_92, %c0_93, %c0_94] : memref<2x64x32xbf16, #tpu.memory_space<vmem>>, vector<1x64x32xbf16>
    %252 = vector.shape_cast %251 : vector<1x64x32xbf16> to vector<64x32xbf16>
    %c1_95 = arith.constant 1 : index
    %c0_96 = arith.constant 0 : index
    %c0_97 = arith.constant 0 : index
    %253 = vector.load %arg9[%c1_95, %c0_96, %c0_97] : memref<2x6x32xf32, #tpu.memory_space<vmem>>, vector<1x6x32xf32>
    %254 = vector.shape_cast %253 : vector<1x6x32xf32> to vector<6x32xf32>
    %255 = arith.truncf %240 : vector<16x32xf32> to vector<16x32xbf16>
    %cst_98 = arith.constant dense<0.000000e+00> : vector<16x96xf32>
    %256 = tpu.matmul %255, %242, %cst_98 {dimension_numbers = #tpu.dot_dimension_numbers<[1], [0], [0], [1], [0, 0, 1, 1], [], []>} : vector<16x32xbf16>, vector<32x96xbf16>, vector<16x96xf32> -> vector<16x96xf32>
    %257 = vector.broadcast %244 : vector<1x96xf32> to vector<16x96xf32>
    %258 = arith.addf %256, %257 : vector<16x96xf32>
    %cst_99 = arith.constant 0.000000e+00 : f32
    %259 = vector.broadcast %cst_99 : f32 to vector<16x32xf32>
    %260 = vector.extract_strided_slice %258 {offsets = [0, 0], sizes = [16, 8], strides = [1, 1]} : vector<16x96xf32> to vector<16x8xf32>
    %261 = vector.shape_cast %260 : vector<16x8xf32> to vector<2x8x8xf32>
    %262 = vector.extract_strided_slice %258 {offsets = [0, 32], sizes = [16, 8], strides = [1, 1]} : vector<16x96xf32> to vector<16x8xf32>
    %263 = vector.shape_cast %262 : vector<16x8xf32> to vector<2x8x8xf32>
    %264 = vector.extract_strided_slice %258 {offsets = [0, 64], sizes = [16, 8], strides = [1, 1]} : vector<16x96xf32> to vector<16x8xf32>
    %265 = vector.shape_cast %264 : vector<16x8xf32> to vector<2x8x8xf32>
    "tpu.trace_start"() <{level = 10 : i32, message = "bqd,bkd->bqk"}> : () -> ()
    %cst_100 = arith.constant dense<0.000000e+00> : vector<2x8x8xf32>
    %266 = tpu.matmul %261, %263, %cst_100 {dimension_numbers = #tpu.dot_dimension_numbers<[2], [2], [1], [1], [0, 0, 0, 1, 1, 1], [0], [0]>} : vector<2x8x8xf32>, vector<2x8x8xf32>, vector<2x8x8xf32> -> vector<2x8x8xf32>
    "tpu.trace_stop"() : () -> ()
    %cst_101 = arith.constant 0.353553385 : f32
    %267 = vector.broadcast %cst_101 : f32 to vector<2x8x8xf32>
    %268 = arith.mulf %266, %267 : vector<2x8x8xf32>
    %269 = vector.shape_cast %26 : vector<2x8xf32> to vector<2x1x8xf32>
    %270 = vector.broadcast %269 : vector<2x1x8xf32> to vector<2x8x8xf32>
    %271 = arith.addf %268, %270 : vector<2x8x8xf32>
    %cst_102 = arith.constant dense<0xFF800000> : vector<2x8xf32>
    %272 = vector.multi_reduction <maximumf>, %271, %cst_102 [2] : vector<2x8x8xf32> to vector<2x8xf32>
    %cst_103 = arith.constant 0xFF800000 : f32
    %273 = vector.broadcast %cst_103 : f32 to vector<2x8xf32>
    %274 = arith.maximumf %273, %272 : vector<2x8xf32>
    %275 = vector.shape_cast %274 : vector<2x8xf32> to vector<2x8x1xf32>
    %276 = vector.broadcast %275 : vector<2x8x1xf32> to vector<2x8x8xf32>
    %277 = arith.subf %271, %276 : vector<2x8x8xf32>
    %278 = math.exp %277 : vector<2x8x8xf32>
    %cst_104 = arith.constant dense<0.000000e+00> : vector<2x8xf32>
    %279 = vector.multi_reduction <add>, %278, %cst_104 [2] : vector<2x8x8xf32> to vector<2x8xf32>
    %280 = vector.shape_cast %279 : vector<2x8xf32> to vector<2x8x1xf32>
    %281 = vector.broadcast %280 : vector<2x8x1xf32> to vector<2x8x8xf32>
    %282 = arith.divf %278, %281 : vector<2x8x8xf32>
    "tpu.trace_start"() <{level = 10 : i32, message = "bqk,bkd->bqd"}> : () -> ()
    %cst_105 = arith.constant dense<0.000000e+00> : vector<2x8x8xf32>
    %283 = tpu.matmul %282, %265, %cst_105 {dimension_numbers = #tpu.dot_dimension_numbers<[2], [1], [1], [2], [0, 0, 0, 1, 1, 2], [0], [0]>} : vector<2x8x8xf32>, vector<2x8x8xf32>, vector<2x8x8xf32> -> vector<2x8x8xf32>
    "tpu.trace_stop"() : () -> ()
    %284 = vector.shape_cast %283 : vector<2x8x8xf32> to vector<16x8xf32>
    %285 = arith.truncf %284 : vector<16x8xf32> to vector<16x8xbf16>
    %286 = vector.extract_strided_slice %246 {offsets = [0, 0, 0], sizes = [1, 8, 32], strides = [1, 1, 1]} : vector<4x8x32xbf16> to vector<1x8x32xbf16>
    %287 = vector.shape_cast %286 : vector<1x8x32xbf16> to vector<8x32xbf16>
    %cst_106 = arith.constant dense<0.000000e+00> : vector<16x32xf32>
    %288 = tpu.matmul %285, %287, %cst_106 {dimension_numbers = #tpu.dot_dimension_numbers<[1], [0], [0], [1], [0, 0, 1, 1], [], []>} : vector<16x8xbf16>, vector<8x32xbf16>, vector<16x32xf32> -> vector<16x32xf32>
    %289 = arith.addf %259, %288 : vector<16x32xf32>
    %290 = vector.extract_strided_slice %258 {offsets = [0, 8], sizes = [16, 8], strides = [1, 1]} : vector<16x96xf32> to vector<16x8xf32>
    %291 = vector.shape_cast %290 : vector<16x8xf32> to vector<2x8x8xf32>
    %292 = vector.extract_strided_slice %258 {offsets = [0, 40], sizes = [16, 8], strides = [1, 1]} : vector<16x96xf32> to vector<16x8xf32>
    %293 = vector.shape_cast %292 : vector<16x8xf32> to vector<2x8x8xf32>
    %294 = vector.extract_strided_slice %258 {offsets = [0, 72], sizes = [16, 8], strides = [1, 1]} : vector<16x96xf32> to vector<16x8xf32>
    %295 = vector.shape_cast %294 : vector<16x8xf32> to vector<2x8x8xf32>
    "tpu.trace_start"() <{level = 10 : i32, message = "bqd,bkd->bqk"}> : () -> ()
    %cst_107 = arith.constant dense<0.000000e+00> : vector<2x8x8xf32>
    %296 = tpu.matmul %291, %293, %cst_107 {dimension_numbers = #tpu.dot_dimension_numbers<[2], [2], [1], [1], [0, 0, 0, 1, 1, 1], [0], [0]>} : vector<2x8x8xf32>, vector<2x8x8xf32>, vector<2x8x8xf32> -> vector<2x8x8xf32>
    "tpu.trace_stop"() : () -> ()
    %cst_108 = arith.constant 0.353553385 : f32
    %297 = vector.broadcast %cst_108 : f32 to vector<2x8x8xf32>
    %298 = arith.mulf %296, %297 : vector<2x8x8xf32>
    %299 = vector.shape_cast %26 : vector<2x8xf32> to vector<2x1x8xf32>
    %300 = vector.broadcast %299 : vector<2x1x8xf32> to vector<2x8x8xf32>
    %301 = arith.addf %298, %300 : vector<2x8x8xf32>
    %cst_109 = arith.constant dense<0xFF800000> : vector<2x8xf32>
    %302 = vector.multi_reduction <maximumf>, %301, %cst_109 [2] : vector<2x8x8xf32> to vector<2x8xf32>
    %cst_110 = arith.constant 0xFF800000 : f32
    %303 = vector.broadcast %cst_110 : f32 to vector<2x8xf32>
    %304 = arith.maximumf %303, %302 : vector<2x8xf32>
    %305 = vector.shape_cast %304 : vector<2x8xf32> to vector<2x8x1xf32>
    %306 = vector.broadcast %305 : vector<2x8x1xf32> to vector<2x8x8xf32>
    %307 = arith.subf %301, %306 : vector<2x8x8xf32>
    %308 = math.exp %307 : vector<2x8x8xf32>
    %cst_111 = arith.constant dense<0.000000e+00> : vector<2x8xf32>
    %309 = vector.multi_reduction <add>, %308, %cst_111 [2] : vector<2x8x8xf32> to vector<2x8xf32>
    %310 = vector.shape_cast %309 : vector<2x8xf32> to vector<2x8x1xf32>
    %311 = vector.broadcast %310 : vector<2x8x1xf32> to vector<2x8x8xf32>
    %312 = arith.divf %308, %311 : vector<2x8x8xf32>
    "tpu.trace_start"() <{level = 10 : i32, message = "bqk,bkd->bqd"}> : () -> ()
    %cst_112 = arith.constant dense<0.000000e+00> : vector<2x8x8xf32>
    %313 = tpu.matmul %312, %295, %cst_112 {dimension_numbers = #tpu.dot_dimension_numbers<[2], [1], [1], [2], [0, 0, 0, 1, 1, 2], [0], [0]>} : vector<2x8x8xf32>, vector<2x8x8xf32>, vector<2x8x8xf32> -> vector<2x8x8xf32>
    "tpu.trace_stop"() : () -> ()
    %314 = vector.shape_cast %313 : vector<2x8x8xf32> to vector<16x8xf32>
    %315 = arith.truncf %314 : vector<16x8xf32> to vector<16x8xbf16>
    %316 = vector.extract_strided_slice %246 {offsets = [1, 0, 0], sizes = [1, 8, 32], strides = [1, 1, 1]} : vector<4x8x32xbf16> to vector<1x8x32xbf16>
    %317 = vector.shape_cast %316 : vector<1x8x32xbf16> to vector<8x32xbf16>
    %cst_113 = arith.constant dense<0.000000e+00> : vector<16x32xf32>
    %318 = tpu.matmul %315, %317, %cst_113 {dimension_numbers = #tpu.dot_dimension_numbers<[1], [0], [0], [1], [0, 0, 1, 1], [], []>} : vector<16x8xbf16>, vector<8x32xbf16>, vector<16x32xf32> -> vector<16x32xf32>
    %319 = arith.addf %289, %318 : vector<16x32xf32>
    %320 = vector.extract_strided_slice %258 {offsets = [0, 16], sizes = [16, 8], strides = [1, 1]} : vector<16x96xf32> to vector<16x8xf32>
    %321 = vector.shape_cast %320 : vector<16x8xf32> to vector<2x8x8xf32>
    %322 = vector.extract_strided_slice %258 {offsets = [0, 48], sizes = [16, 8], strides = [1, 1]} : vector<16x96xf32> to vector<16x8xf32>
    %323 = vector.shape_cast %322 : vector<16x8xf32> to vector<2x8x8xf32>
    %324 = vector.extract_strided_slice %258 {offsets = [0, 80], sizes = [16, 8], strides = [1, 1]} : vector<16x96xf32> to vector<16x8xf32>
    %325 = vector.shape_cast %324 : vector<16x8xf32> to vector<2x8x8xf32>
    "tpu.trace_start"() <{level = 10 : i32, message = "bqd,bkd->bqk"}> : () -> ()
    %cst_114 = arith.constant dense<0.000000e+00> : vector<2x8x8xf32>
    %326 = tpu.matmul %321, %323, %cst_114 {dimension_numbers = #tpu.dot_dimension_numbers<[2], [2], [1], [1], [0, 0, 0, 1, 1, 1], [0], [0]>} : vector<2x8x8xf32>, vector<2x8x8xf32>, vector<2x8x8xf32> -> vector<2x8x8xf32>
    "tpu.trace_stop"() : () -> ()
    %cst_115 = arith.constant 0.353553385 : f32
    %327 = vector.broadcast %cst_115 : f32 to vector<2x8x8xf32>
    %328 = arith.mulf %326, %327 : vector<2x8x8xf32>
    %329 = vector.shape_cast %26 : vector<2x8xf32> to vector<2x1x8xf32>
    %330 = vector.broadcast %329 : vector<2x1x8xf32> to vector<2x8x8xf32>
    %331 = arith.addf %328, %330 : vector<2x8x8xf32>
    %cst_116 = arith.constant dense<0xFF800000> : vector<2x8xf32>
    %332 = vector.multi_reduction <maximumf>, %331, %cst_116 [2] : vector<2x8x8xf32> to vector<2x8xf32>
    %cst_117 = arith.constant 0xFF800000 : f32
    %333 = vector.broadcast %cst_117 : f32 to vector<2x8xf32>
    %334 = arith.maximumf %333, %332 : vector<2x8xf32>
    %335 = vector.shape_cast %334 : vector<2x8xf32> to vector<2x8x1xf32>
    %336 = vector.broadcast %335 : vector<2x8x1xf32> to vector<2x8x8xf32>
    %337 = arith.subf %331, %336 : vector<2x8x8xf32>
    %338 = math.exp %337 : vector<2x8x8xf32>
    %cst_118 = arith.constant dense<0.000000e+00> : vector<2x8xf32>
    %339 = vector.multi_reduction <add>, %338, %cst_118 [2] : vector<2x8x8xf32> to vector<2x8xf32>
    %340 = vector.shape_cast %339 : vector<2x8xf32> to vector<2x8x1xf32>
    %341 = vector.broadcast %340 : vector<2x8x1xf32> to vector<2x8x8xf32>
    %342 = arith.divf %338, %341 : vector<2x8x8xf32>
    "tpu.trace_start"() <{level = 10 : i32, message = "bqk,bkd->bqd"}> : () -> ()
    %cst_119 = arith.constant dense<0.000000e+00> : vector<2x8x8xf32>
    %343 = tpu.matmul %342, %325, %cst_119 {dimension_numbers = #tpu.dot_dimension_numbers<[2], [1], [1], [2], [0, 0, 0, 1, 1, 2], [0], [0]>} : vector<2x8x8xf32>, vector<2x8x8xf32>, vector<2x8x8xf32> -> vector<2x8x8xf32>
    "tpu.trace_stop"() : () -> ()
    %344 = vector.shape_cast %343 : vector<2x8x8xf32> to vector<16x8xf32>
    %345 = arith.truncf %344 : vector<16x8xf32> to vector<16x8xbf16>
    %346 = vector.extract_strided_slice %246 {offsets = [2, 0, 0], sizes = [1, 8, 32], strides = [1, 1, 1]} : vector<4x8x32xbf16> to vector<1x8x32xbf16>
    %347 = vector.shape_cast %346 : vector<1x8x32xbf16> to vector<8x32xbf16>
    %cst_120 = arith.constant dense<0.000000e+00> : vector<16x32xf32>
    %348 = tpu.matmul %345, %347, %cst_120 {dimension_numbers = #tpu.dot_dimension_numbers<[1], [0], [0], [1], [0, 0, 1, 1], [], []>} : vector<16x8xbf16>, vector<8x32xbf16>, vector<16x32xf32> -> vector<16x32xf32>
    %349 = arith.addf %319, %348 : vector<16x32xf32>
    %350 = vector.extract_strided_slice %258 {offsets = [0, 24], sizes = [16, 8], strides = [1, 1]} : vector<16x96xf32> to vector<16x8xf32>
    %351 = vector.shape_cast %350 : vector<16x8xf32> to vector<2x8x8xf32>
    %352 = vector.extract_strided_slice %258 {offsets = [0, 56], sizes = [16, 8], strides = [1, 1]} : vector<16x96xf32> to vector<16x8xf32>
    %353 = vector.shape_cast %352 : vector<16x8xf32> to vector<2x8x8xf32>
    %354 = vector.extract_strided_slice %258 {offsets = [0, 88], sizes = [16, 8], strides = [1, 1]} : vector<16x96xf32> to vector<16x8xf32>
    %355 = vector.shape_cast %354 : vector<16x8xf32> to vector<2x8x8xf32>
    "tpu.trace_start"() <{level = 10 : i32, message = "bqd,bkd->bqk"}> : () -> ()
    %cst_121 = arith.constant dense<0.000000e+00> : vector<2x8x8xf32>
    %356 = tpu.matmul %351, %353, %cst_121 {dimension_numbers = #tpu.dot_dimension_numbers<[2], [2], [1], [1], [0, 0, 0, 1, 1, 1], [0], [0]>} : vector<2x8x8xf32>, vector<2x8x8xf32>, vector<2x8x8xf32> -> vector<2x8x8xf32>
    "tpu.trace_stop"() : () -> ()
    %cst_122 = arith.constant 0.353553385 : f32
    %357 = vector.broadcast %cst_122 : f32 to vector<2x8x8xf32>
    %358 = arith.mulf %356, %357 : vector<2x8x8xf32>
    %359 = vector.shape_cast %26 : vector<2x8xf32> to vector<2x1x8xf32>
    %360 = vector.broadcast %359 : vector<2x1x8xf32> to vector<2x8x8xf32>
    %361 = arith.addf %358, %360 : vector<2x8x8xf32>
    %cst_123 = arith.constant dense<0xFF800000> : vector<2x8xf32>
    %362 = vector.multi_reduction <maximumf>, %361, %cst_123 [2] : vector<2x8x8xf32> to vector<2x8xf32>
    %cst_124 = arith.constant 0xFF800000 : f32
    %363 = vector.broadcast %cst_124 : f32 to vector<2x8xf32>
    %364 = arith.maximumf %363, %362 : vector<2x8xf32>
    %365 = vector.shape_cast %364 : vector<2x8xf32> to vector<2x8x1xf32>
    %366 = vector.broadcast %365 : vector<2x8x1xf32> to vector<2x8x8xf32>
    %367 = arith.subf %361, %366 : vector<2x8x8xf32>
    %368 = math.exp %367 : vector<2x8x8xf32>
    %cst_125 = arith.constant dense<0.000000e+00> : vector<2x8xf32>
    %369 = vector.multi_reduction <add>, %368, %cst_125 [2] : vector<2x8x8xf32> to vector<2x8xf32>
    %370 = vector.shape_cast %369 : vector<2x8xf32> to vector<2x8x1xf32>
    %371 = vector.broadcast %370 : vector<2x8x1xf32> to vector<2x8x8xf32>
    %372 = arith.divf %368, %371 : vector<2x8x8xf32>
    "tpu.trace_start"() <{level = 10 : i32, message = "bqk,bkd->bqd"}> : () -> ()
    %cst_126 = arith.constant dense<0.000000e+00> : vector<2x8x8xf32>
    %373 = tpu.matmul %372, %355, %cst_126 {dimension_numbers = #tpu.dot_dimension_numbers<[2], [1], [1], [2], [0, 0, 0, 1, 1, 2], [0], [0]>} : vector<2x8x8xf32>, vector<2x8x8xf32>, vector<2x8x8xf32> -> vector<2x8x8xf32>
    "tpu.trace_stop"() : () -> ()
    %374 = vector.shape_cast %373 : vector<2x8x8xf32> to vector<16x8xf32>
    %375 = arith.truncf %374 : vector<16x8xf32> to vector<16x8xbf16>
    %376 = vector.extract_strided_slice %246 {offsets = [3, 0, 0], sizes = [1, 8, 32], strides = [1, 1, 1]} : vector<4x8x32xbf16> to vector<1x8x32xbf16>
    %377 = vector.shape_cast %376 : vector<1x8x32xbf16> to vector<8x32xbf16>
    %cst_127 = arith.constant dense<0.000000e+00> : vector<16x32xf32>
    %378 = tpu.matmul %375, %377, %cst_127 {dimension_numbers = #tpu.dot_dimension_numbers<[1], [0], [0], [1], [0, 0, 1, 1], [], []>} : vector<16x8xbf16>, vector<8x32xbf16>, vector<16x32xf32> -> vector<16x32xf32>
    %379 = arith.addf %349, %378 : vector<16x32xf32>
    %380 = vector.extract_strided_slice %254 {offsets = [0, 0], sizes = [1, 32], strides = [1, 1]} : vector<6x32xf32> to vector<1x32xf32>
    %381 = vector.broadcast %380 : vector<1x32xf32> to vector<16x32xf32>
    %382 = arith.addf %379, %381 : vector<16x32xf32>
    %383 = arith.addf %382, %240 : vector<16x32xf32>
    %384 = vector.extract_strided_slice %254 {offsets = [1, 0], sizes = [1, 32], strides = [1, 1]} : vector<6x32xf32> to vector<1x32xf32>
    %385 = vector.extract_strided_slice %254 {offsets = [2, 0], sizes = [1, 32], strides = [1, 1]} : vector<6x32xf32> to vector<1x32xf32>
    %cst_128 = arith.constant dense<0.000000e+00> : vector<16xf32>
    %386 = vector.multi_reduction <add>, %383, %cst_128 [1] : vector<16x32xf32> to vector<16xf32>
    %387 = vector.shape_cast %386 : vector<16xf32> to vector<16x1xf32>
    %cst_129 = arith.constant 3.200000e+01 : f32
    %388 = vector.broadcast %cst_129 : f32 to vector<16x1xf32>
    %389 = arith.divf %387, %388 : vector<16x1xf32>
    %390 = vector.broadcast %389 : vector<16x1xf32> to vector<16x32xf32>
    %391 = arith.subf %383, %390 : vector<16x32xf32>
    %392 = arith.mulf %391, %391 : vector<16x32xf32>
    %cst_130 = arith.constant dense<0.000000e+00> : vector<16xf32>
    %393 = vector.multi_reduction <add>, %392, %cst_130 [1] : vector<16x32xf32> to vector<16xf32>
    %394 = vector.shape_cast %393 : vector<16xf32> to vector<16x1xf32>
    %cst_131 = arith.constant 3.200000e+01 : f32
    %395 = vector.broadcast %cst_131 : f32 to vector<16x1xf32>
    %396 = arith.divf %394, %395 : vector<16x1xf32>
    %397 = vector.broadcast %389 : vector<16x1xf32> to vector<16x32xf32>
    %398 = arith.subf %383, %397 : vector<16x32xf32>
    %cst_132 = arith.constant 9.99999996E-13 : f32
    %399 = vector.broadcast %cst_132 : f32 to vector<16x1xf32>
    %400 = arith.addf %396, %399 : vector<16x1xf32>
    %401 = math.rsqrt %400 : vector<16x1xf32>
    %402 = vector.broadcast %401 : vector<16x1xf32> to vector<16x32xf32>
    %403 = arith.mulf %398, %402 : vector<16x32xf32>
    %404 = vector.broadcast %384 : vector<1x32xf32> to vector<16x32xf32>
    %405 = arith.mulf %403, %404 : vector<16x32xf32>
    %406 = vector.broadcast %385 : vector<1x32xf32> to vector<16x32xf32>
    %407 = arith.addf %405, %406 : vector<16x32xf32>
    %408 = arith.truncf %407 : vector<16x32xf32> to vector<16x32xbf16>
    %cst_133 = arith.constant dense<0.000000e+00> : vector<16x64xf32>
    %409 = tpu.matmul %408, %248, %cst_133 {dimension_numbers = #tpu.dot_dimension_numbers<[1], [0], [0], [1], [0, 0, 1, 1], [], []>} : vector<16x32xbf16>, vector<32x64xbf16>, vector<16x64xf32> -> vector<16x64xf32>
    %410 = vector.broadcast %250 : vector<1x64xf32> to vector<16x64xf32>
    %411 = arith.addf %409, %410 : vector<16x64xf32>
    %412 = arith.mulf %411, %411 : vector<16x64xf32>
    %413 = arith.mulf %411, %412 : vector<16x64xf32>
    %cst_134 = arith.constant 4.471500e-02 : f32
    %414 = vector.broadcast %cst_134 : f32 to vector<16x64xf32>
    %415 = arith.mulf %414, %413 : vector<16x64xf32>
    %416 = arith.addf %411, %415 : vector<16x64xf32>
    %cst_135 = arith.constant 0.797884583 : f32
    %417 = vector.broadcast %cst_135 : f32 to vector<16x64xf32>
    %418 = arith.mulf %417, %416 : vector<16x64xf32>
    %419 = math.tanh %418 : vector<16x64xf32>
    %cst_136 = arith.constant 1.000000e+00 : f32
    %420 = vector.broadcast %cst_136 : f32 to vector<16x64xf32>
    %421 = arith.addf %420, %419 : vector<16x64xf32>
    %cst_137 = arith.constant 5.000000e-01 : f32
    %422 = vector.broadcast %cst_137 : f32 to vector<16x64xf32>
    %423 = arith.mulf %422, %421 : vector<16x64xf32>
    %424 = arith.mulf %411, %423 : vector<16x64xf32>
    %425 = arith.truncf %424 : vector<16x64xf32> to vector<16x64xbf16>
    %cst_138 = arith.constant dense<0.000000e+00> : vector<16x32xf32>
    %426 = tpu.matmul %425, %252, %cst_138 {dimension_numbers = #tpu.dot_dimension_numbers<[1], [0], [0], [1], [0, 0, 1, 1], [], []>} : vector<16x64xbf16>, vector<64x32xbf16>, vector<16x32xf32> -> vector<16x32xf32>
    %427 = vector.extract_strided_slice %254 {offsets = [3, 0], sizes = [1, 32], strides = [1, 1]} : vector<6x32xf32> to vector<1x32xf32>
    %428 = vector.broadcast %427 : vector<1x32xf32> to vector<16x32xf32>
    %429 = arith.addf %426, %428 : vector<16x32xf32>
    %430 = arith.addf %429, %407 : vector<16x32xf32>
    %431 = vector.extract_strided_slice %254 {offsets = [4, 0], sizes = [1, 32], strides = [1, 1]} : vector<6x32xf32> to vector<1x32xf32>
    %432 = vector.extract_strided_slice %254 {offsets = [5, 0], sizes = [1, 32], strides = [1, 1]} : vector<6x32xf32> to vector<1x32xf32>
    %cst_139 = arith.constant dense<0.000000e+00> : vector<16xf32>
    %433 = vector.multi_reduction <add>, %430, %cst_139 [1] : vector<16x32xf32> to vector<16xf32>
    %434 = vector.shape_cast %433 : vector<16xf32> to vector<16x1xf32>
    %cst_140 = arith.constant 3.200000e+01 : f32
    %435 = vector.broadcast %cst_140 : f32 to vector<16x1xf32>
    %436 = arith.divf %434, %435 : vector<16x1xf32>
    %437 = vector.broadcast %436 : vector<16x1xf32> to vector<16x32xf32>
    %438 = arith.subf %430, %437 : vector<16x32xf32>
    %439 = arith.mulf %438, %438 : vector<16x32xf32>
    %cst_141 = arith.constant dense<0.000000e+00> : vector<16xf32>
    %440 = vector.multi_reduction <add>, %439, %cst_141 [1] : vector<16x32xf32> to vector<16xf32>
    %441 = vector.shape_cast %440 : vector<16xf32> to vector<16x1xf32>
    %cst_142 = arith.constant 3.200000e+01 : f32
    %442 = vector.broadcast %cst_142 : f32 to vector<16x1xf32>
    %443 = arith.divf %441, %442 : vector<16x1xf32>
    %444 = vector.broadcast %436 : vector<16x1xf32> to vector<16x32xf32>
    %445 = arith.subf %430, %444 : vector<16x32xf32>
    %cst_143 = arith.constant 9.99999996E-13 : f32
    %446 = vector.broadcast %cst_143 : f32 to vector<16x1xf32>
    %447 = arith.addf %443, %446 : vector<16x1xf32>
    %448 = math.rsqrt %447 : vector<16x1xf32>
    %449 = vector.broadcast %448 : vector<16x1xf32> to vector<16x32xf32>
    %450 = arith.mulf %445, %449 : vector<16x32xf32>
    %451 = vector.broadcast %431 : vector<1x32xf32> to vector<16x32xf32>
    %452 = arith.mulf %450, %451 : vector<16x32xf32>
    %453 = vector.broadcast %432 : vector<1x32xf32> to vector<16x32xf32>
    %454 = arith.addf %452, %453 : vector<16x32xf32>
    %455 = vector.extract_strided_slice %454 {offsets = [0, 0], sizes = [1, 32], strides = [1, 1]} : vector<16x32xf32> to vector<1x32xf32>
    %456 = vector.extract_strided_slice %454 {offsets = [8, 0], sizes = [1, 32], strides = [1, 1]} : vector<16x32xf32> to vector<1x32xf32>
    %457 = tpu.concatenate %455, %456 in 0 : vector<1x32xf32>, vector<1x32xf32> -> vector<2x32xf32>
    %458 = arith.truncf %457 : vector<2x32xf32> to vector<2x32xbf16>
    %c0_144 = arith.constant 0 : index
    %c0_145 = arith.constant 0 : index
    %459 = vector.load %arg10[%c0_144, %c0_145] : memref<32x128xbf16, #tpu.memory_space<vmem>>, vector<32x128xbf16>
    %cst_146 = arith.constant dense<0.000000e+00> : vector<2x128xf32>
    %460 = tpu.matmul %458, %459, %cst_146 {dimension_numbers = #tpu.dot_dimension_numbers<[1], [0], [0], [1], [0, 0, 1, 1], [], []>} : vector<2x32xbf16>, vector<32x128xbf16>, vector<2x128xf32> -> vector<2x128xf32>
    %c0_147 = arith.constant 0 : index
    %c0_148 = arith.constant 0 : index
    %461 = vector.load %arg11[%c0_147, %c0_148] : memref<1x128xf32, #tpu.memory_space<vmem>>, vector<1x128xf32>
    %462 = vector.broadcast %461 : vector<1x128xf32> to vector<2x128xf32>
    %463 = arith.addf %460, %462 : vector<2x128xf32>
    %c0_149 = arith.constant 0 : index
    %c0_150 = arith.constant 0 : index
    %464 = vector.load %arg12[%c0_149, %c0_150] : memref<2x128xf32, #tpu.memory_space<vmem>>, vector<2x128xf32>
    tpu.vector_store %arg12[%c0_149, %c0_150], %463 {strides = array<i32>} : memref<2x128xf32, #tpu.memory_space<vmem>>, vector<2x128xf32>,
    return
  }
}

</mosaic_0001>

<llo_original>
// kernel: tpu_custom_call.1
$region0: #{tpu_custom_call.1}
  #allocation0 [shape = 'u32[]', space=smem, size = 0x4, offset = 0x4, fixed_abs, tag = 'smem constant byte address 0x4 - core index']
  #allocation1 [shape = 'u32[144,128]{1,0:T(1,128)}', space=vmem, size = 0x12000, scoped, tag = 'internal scratch']
  %s0 = inlined_call_operand.hbm [shape: f32[16,32], index: 0, kind: input, shape index: {}]
  %s1 = inlined_call_operand.hbm [shape: f32[2,8], index: 1, kind: input, shape index: {}]
  %s2 = inlined_call_operand.hbm [shape: f32[2,32], index: 2, kind: input, shape index: {}]
  %s3 = inlined_call_operand.vmem [shape: bf16[2,32,96], index: 3, kind: input, shape index: {}]
  %s4 = inlined_call_operand.hbm [shape: f32[2,1,96], index: 4, kind: input, shape index: {}]
  %s5 = inlined_call_operand.vmem [shape: bf16[2,4,8,32], index: 5, kind: input, shape index: {}]
  %s6 = inlined_call_operand.vmem [shape: bf16[2,32,64], index: 6, kind: input, shape index: {}]
  %s7 = inlined_call_operand.hbm [shape: f32[2,1,64], index: 7, kind: input, shape index: {}]
  %s8 = inlined_call_operand.vmem [shape: bf16[2,64,32], index: 8, kind: input, shape index: {}]
  %s9 = inlined_call_operand.vmem [shape: f32[2,6,32], index: 9, kind: input, shape index: {}]
  %s10 = inlined_call_operand.hbm [shape: bf16[32,128], index: 10, kind: input, shape index: {}]
  %s11 = inlined_call_operand.vmem [shape: f32[1,128], index: 11, kind: input, shape index: {}]
  %s12 = inlined_call_operand.hbm [shape: f32[2,128], index: 12, kind: output, shape index: {}]
  %s13 = sld [smem:[#allocation0]]
  $region82: #{tpu_custom_call.1} parent=0
    _
  %s15 = ssub.s32 1, %s13
  %s16 = scalar_select 0, %s15, %s13
  $region1: #{tpu_custom_call.1} parent=0
    #allocation2 [shape = 'u8[8192]{0}', space=vmem, size = 0x2000, scoped, tag = 'input window, operand 0, single buffered']
    #allocation3 [shape = 's32[1]{0}', space=sflag, size = 0x4, scoped, tag = 'scoped memory for tpu_custom_call.1']
    #allocation4 [shape = 's32[1]{0}', space=sflag, size = 0x4, scoped, tag = 'scoped memory for tpu_custom_call.1']
    #allocation5 [shape = 'u8[1024]{0}', space=vmem, size = 0x400, scoped, tag = 'input window, operand 1, single buffered']
    #allocation6 [shape = 's32[1]{0}', space=sflag, size = 0x4, scoped, tag = 'scoped memory for tpu_custom_call.1']
    #allocation7 [shape = 'u8[1024]{0}', space=vmem, size = 0x400, scoped, tag = 'input window, operand 2, single buffered']
    #allocation8 [shape = 'u8[1024]{0}', space=vmem, size = 0x400, scoped, tag = 'input window, operand 4, single buffered']
    #allocation9 [shape = 's32[1]{0}', space=sflag, size = 0x4, scoped, tag = 'scoped memory for tpu_custom_call.1']
    #allocation10 [shape = 'u8[1024]{0}', space=vmem, size = 0x400, scoped, tag = 'input window, operand 7, single buffered']
    #allocation11 [shape = 'u8[8192]{0}', space=vmem, size = 0x2000, scoped, tag = 'input window, operand 10, single buffered']
    #allocation12 [shape = 's32[1]{0}', space=sflag, size = 0x4, scoped, tag = 'scoped memory for tpu_custom_call.1']
    #allocation13 [shape = 'u8[1024]{0}', space=vmem, size = 0x400, scoped, tag = 'output window, operand 0, single buffered']
    %17 = vsyncpa [#allocation3], 0
    %18 = vsyncpa [#allocation6], 0
    %19 = vsyncpa [#allocation9], 0
    %20 = vsyncpa [#allocation12], 0
    %21 = vsyncpa [#allocation4], 0
    // Predicated region
    $region2: #{tpu_custom_call.1} parent=1 // pred_check
      _
    $region3: #{tpu_custom_call.1} parent=1 // pred_check_branch
      %23 = sbr.rel (0) target = $region5
    $region4: #{tpu_custom_call.1} parent=1 // pred_region
      %s25 = ssub.s32 256, 256
      %26 = vsyncadd [#allocation3], %s25
      %s27 = sshll.u32 [#allocation2], 4
      %s28 = int_to_ptr.vmem [resolvable:$true] %s27
      %33 = dma.hbm_to_vmem [thread:$0]  %s0, 256, %s28, [#allocation3], 128, 128, 8
    $region5: #{tpu_custom_call.1} parent=1 // pred_fallthru
      _
    // Predicated region
    $region6: #{tpu_custom_call.1} parent=1 // pred_check
      _
    $region7: #{tpu_custom_call.1} parent=1 // pred_check_branch
      %35 = sbr.rel (0) target = $region9
    $region8: #{tpu_custom_call.1} parent=1 // pred_region
      %s37 = ssub.s32 32, 32
      %38 = vsyncadd [#allocation6], %s37
      %s40 = sshll.u32 [#allocation5], 4
      %s41 = int_to_ptr.vmem [resolvable:$true] %s40
      %43 = dma.hbm_to_vmem [thread:$0]  %s1, 32, %s41, [#allocation6]
    $region9: #{tpu_custom_call.1} parent=1 // pred_fallthru
      _
    // Predicated region
    $region10: #{tpu_custom_call.1} parent=1 // pred_check
      _
    $region11: #{tpu_custom_call.1} parent=1 // pred_check_branch
      %45 = sbr.rel (0) target = $region13
    $region12: #{tpu_custom_call.1} parent=1 // pred_region
      %s47 = ssub.s32 32, 32
      %48 = vsyncadd [#allocation6], %s47
      %s50 = sshll.u32 [#allocation7], 4
      %s51 = int_to_ptr.vmem [resolvable:$true] %s50
      %53 = dma.hbm_to_vmem [thread:$0]  %s2, 32, %s51, [#allocation6]
    $region13: #{tpu_custom_call.1} parent=1 // pred_fallthru
      _
    // Predicated region
    $region14: #{tpu_custom_call.1} parent=1 // pred_check
      _
    $region15: #{tpu_custom_call.1} parent=1 // pred_check_branch
      %55 = sbr.rel (0) target = $region17
    $region16: #{tpu_custom_call.1} parent=1 // pred_region
      _
    $region17: #{tpu_custom_call.1} parent=1 // pred_fallthru
      _
    // Predicated region
    $region18: #{tpu_custom_call.1} parent=1 // pred_check
      _
    $region19: #{tpu_custom_call.1} parent=1 // pred_check_branch
      %57 = sbr.rel (0) target = $region21
    $region20: #{tpu_custom_call.1} parent=1 // pred_region
      %s59 = ssub.s32 32, 32
      %60 = vsyncadd [#allocation9], %s59
      %s61 = sshll.u32 [#allocation8], 4
      %s62 = int_to_ptr.vmem [resolvable:$true] %s61
      %67 = dma.hbm_to_vmem [thread:$0]  %s4, 32, %s62, [#allocation9], 16, 16, 1
    $region21: #{tpu_custom_call.1} parent=1 // pred_fallthru
      _
    // Predicated region
    $region22: #{tpu_custom_call.1} parent=1 // pred_check
      _
    $region23: #{tpu_custom_call.1} parent=1 // pred_check_branch
      %69 = sbr.rel (0) target = $region25
    $region24: #{tpu_custom_call.1} parent=1 // pred_region
      _
    $region25: #{tpu_custom_call.1} parent=1 // pred_fallthru
      _
    // Predicated region
    $region26: #{tpu_custom_call.1} parent=1 // pred_check
      _
    $region27: #{tpu_custom_call.1} parent=1 // pred_check_branch
      %71 = sbr.rel (0) target = $region29
    $region28: #{tpu_custom_call.1} parent=1 // pred_region
      _
    $region29: #{tpu_custom_call.1} parent=1 // pred_fallthru
      _
    // Predicated region
    $region30: #{tpu_custom_call.1} parent=1 // pred_check
      _
    $region31: #{tpu_custom_call.1} parent=1 // pred_check_branch
      %73 = sbr.rel (0) target = $region33
    $region32: #{tpu_custom_call.1} parent=1 // pred_region
      %s75 = ssub.s32 32, 32
      %76 = vsyncadd [#allocation9], %s75
      %s77 = sshll.u32 [#allocation10], 4
      %s78 = int_to_ptr.vmem [resolvable:$true] %s77
      %83 = dma.hbm_to_vmem [thread:$0]  %s7, 32, %s78, [#allocation9], 16, 16, 1
    $region33: #{tpu_custom_call.1} parent=1 // pred_fallthru
      _
    // Predicated region
    $region34: #{tpu_custom_call.1} parent=1 // pred_check
      _
    $region35: #{tpu_custom_call.1} parent=1 // pred_check_branch
      %85 = sbr.rel (0) target = $region37
    $region36: #{tpu_custom_call.1} parent=1 // pred_region
      _
    $region37: #{tpu_custom_call.1} parent=1 // pred_fallthru
      _
    // Predicated region
    $region38: #{tpu_custom_call.1} parent=1 // pred_check
      _
    $region39: #{tpu_custom_call.1} parent=1 // pred_check_branch
      %87 = sbr.rel (0) target = $region41
    $region40: #{tpu_custom_call.1} parent=1 // pred_region
      _
    $region41: #{tpu_custom_call.1} parent=1 // pred_fallthru
      _
    // Predicated region
    $region42: #{tpu_custom_call.1} parent=1 // pred_check
      _
    $region43: #{tpu_custom_call.1} parent=1 // pred_check_branch
      %89 = sbr.rel (0) target = $region45
    $region44: #{tpu_custom_call.1} parent=1 // pred_region
      %s91 = ssub.s32 256, 256
      %92 = vsyncadd [#allocation12], %s91
      %s93 = sshll.u32 [#allocation11], 4
      %s94 = int_to_ptr.vmem [resolvable:$true] %s93
      %99 = dma.hbm_to_vmem [thread:$0]  %s10, 256, %s94, [#allocation12], 64, 64, 4
    $region45: #{tpu_custom_call.1} parent=1 // pred_fallthru
      _
    // Predicated region
    $region46: #{tpu_custom_call.1} parent=1 // pred_check
      _
    $region47: #{tpu_custom_call.1} parent=1 // pred_check_branch
      %101 = sbr.rel (0) target = $region49
    $region48: #{tpu_custom_call.1} parent=1 // pred_region
      _
    $region49: #{tpu_custom_call.1} parent=1 // pred_fallthru
      _
    // Predicated region
    $region50: #{tpu_custom_call.1} parent=1 // pred_check
      _
    $region51: #{tpu_custom_call.1} parent=1 // pred_check_branch
      %103 = sbr.rel (0) target = $region53
    $region52: #{tpu_custom_call.1} parent=1 // pred_region
      %104 = dma.done [#allocation3], 256
    $region53: #{tpu_custom_call.1} parent=1 // pred_fallthru
      _
    // Predicated region
    $region54: #{tpu_custom_call.1} parent=1 // pred_check
      _
    $region55: #{tpu_custom_call.1} parent=1 // pred_check_branch
      %106 = sbr.rel (0) target = $region57
    $region56: #{tpu_custom_call.1} parent=1 // pred_region
      %107 = dma.done [#allocation6], 32
    $region57: #{tpu_custom_call.1} parent=1 // pred_fallthru
      _
    // Predicated region
    $region58: #{tpu_custom_call.1} parent=1 // pred_check
      _
    $region59: #{tpu_custom_call.1} parent=1 // pred_check_branch
      %109 = sbr.rel (0) target = $region61
    $region60: #{tpu_custom_call.1} parent=1 // pred_region
      %110 = dma.done [#allocation6], 32
    $region61: #{tpu_custom_call.1} parent=1 // pred_fallthru
      _
    // Predicated region
    $region62: #{tpu_custom_call.1} parent=1 // pred_check
      _
    $region63: #{tpu_custom_call.1} parent=1 // pred_check_branch
      %112 = sbr.rel (0) target = $region65
    $region64: #{tpu_custom_call.1} parent=1 // pred_region
      %113 = dma.done [#allocation9], 32
    $region65: #{tpu_custom_call.1} parent=1 // pred_fallthru
      _
    // Predicated region
    $region66: #{tpu_custom_call.1} parent=1 // pred_check
      _
    $region67: #{tpu_custom_call.1} parent=1 // pred_check_branch
      %115 = sbr.rel (0) target = $region69
    $region68: #{tpu_custom_call.1} parent=1 // pred_region
      %116 = dma.done [#allocation9], 32
    $region69: #{tpu_custom_call.1} parent=1 // pred_fallthru
      _
    // Predicated region
    $region70: #{tpu_custom_call.1} parent=1 // pred_check
      _
    $region71: #{tpu_custom_call.1} parent=1 // pred_check_branch
      %118 = sbr.rel (0) target = $region73
    $region72: #{tpu_custom_call.1} parent=1 // pred_region
      %119 = dma.done [#allocation12], 256
    $region73: #{tpu_custom_call.1} parent=1 // pred_fallthru
      _
    %v121 = vld [vmem:[#allocation7] sm:$0x3]
    %v122 = vld [vmem:[#allocation2] sm:$0xff]
    %v123 = vld [vmem:[#allocation2 + $0x8] sm:$0xff]
    %vm124 = vcmask 261120
    %v125 = vsel %vm124, %v122, 0.0
    %126 = vadd.xlane.f32.xlu0 %v125
    %v127 = vpop.xlane.xlu0 %126
    %v128 = vsel %vm124, %v123, 0.0
    %129 = vadd.xlane.f32.xlu0 %v128
    %v130 = vpop.xlane.xlu0 %129
    %v131 = vrcp.pop 32.0
    %v132 = vmul.f32 %v127, %v131
    %v133 = vmul.f32 %v130, %v131
    %v134 = vsub.f32 %v122, %v132
    %v135 = vsub.f32 %v123, %v133
    %v136 = vmul.f32 %v134, %v134
    %v137 = vmul.f32 %v135, %v135
    %v138 = vsel %vm124, %v136, 0.0
    %139 = vadd.xlane.f32.xlu0 %v138
    %v140 = vpop.xlane.xlu0 %139
    %v141 = vsel %vm124, %v137, 0.0
    %142 = vadd.xlane.f32.xlu0 %v141
    %v143 = vpop.xlane.xlu0 %142
    %v144 = vmul.f32 %v140, %v131
    %v145 = vmul.f32 %v143, %v131
    %v146 = vadd.f32 %v144, 1e-12
    %v147 = vadd.f32 %v145, 1e-12
    %v148 = vrsqrt.pop %v146
    %v149 = vrsqrt.pop %v147
    %v150 = vmul.f32 %v134, %v148
    %v151 = vmul.f32 %v135, %v149
    %v152 = vlaneseq
    %v153 = vshrl.u32 %v152, 7
    %v154 = vsub.s32 0, %v153
    %v155 = vrot.slane %v121, %v154
    %v156 = vmul.f32 %v150, %v155
    %v157 = vmul.f32 %v151, %v155
    %v158 = vlaneseq
    %v159 = vshrl.u32 %v158, 7
    %v160 = vsub.s32 1, %v159
    %v161 = vrot.slane %v121, %v160
    %v162 = vadd.f32 %v156, %v161
    %v163 = vadd.f32 %v157, %v161
    %v164 = vld [vmem:[#allocation5] sm:$0x3]
    %v165 = vld [vmem:[%s3] sm:$0xf]
    %v166 = vld [vmem:[%s3 + $0x4] sm:$0xf]
    %v167 = vld [vmem:[%s3 + $0x8] sm:$0xf]
    %v168 = vld [vmem:[%s3 + $0xc] sm:$0xf]
    %v169 = vld [vmem:[#allocation8] sm:$0x1]
    %v170 = vld [vmem:[%s5] sm:$0xf]
    %v171 = vld [vmem:[%s5 + $0x4] sm:$0xf]
    %v172 = vld [vmem:[%s5 + $0x8] sm:$0xf]
    %v173 = vld [vmem:[%s5 + $0xc] sm:$0xf]
    %v174 = vld [vmem:[%s6] sm:$0xf]
    %v175 = vld [vmem:[%s6 + $0x4] sm:$0xf]
    %v176 = vld [vmem:[%s6 + $0x8] sm:$0xf]
    %v177 = vld [vmem:[%s6 + $0xc] sm:$0xf]
    %v178 = vld [vmem:[#allocation10] sm:$0x1]
    %v179 = vld [vmem:[%s8] sm:$0xf]
    %v180 = vld [vmem:[%s8 + $0x4] sm:$0xf]
    %v181 = vld [vmem:[%s8 + $0x8] sm:$0xf]
    %v182 = vld [vmem:[%s8 + $0xc] sm:$0xf]
    %v183 = vld [vmem:[%s8 + $0x10] sm:$0xf]
    %v184 = vld [vmem:[%s8 + $0x14] sm:$0xf]
    %v185 = vld [vmem:[%s8 + $0x18] sm:$0xf]
    %v186 = vld [vmem:[%s8 + $0x1c] sm:$0xf]
    %v187 = vld [vmem:[%s9] sm:$0x3f]
    %v188 = vpack.c.bf16 %v163, %v162
    %v190 = vlaneseq
    %v191 = vshrl.u32 %v190, 7
    %v192 = vsub.s32 0, %v191
    %v193 = vrot.slane %v169, %v192
    %v199 = vunpack.c.l.b16 %v165
    %v200 = vunpack.c.l.b16 %v166
    %v201 = vunpack.c.l.b16 %v167
    %v202 = vunpack.c.l.b16 %v168
    %v203 = vpack.c.b16 %v200, %v199
    %v204 = vpack.c.b16 %v202, %v201
    %v208 = vsel %vm124, %v188, 0
    %210 = vmatprep.subr.bf16.mxu0 0
    %211 = vmatpush1.bf16.msra.mxu0 0
    %212 = vmatprep.subr.bf16.mxu0 0
    %213 = vmatpush1.bf16.msra.mxu0 0
    %214 = vmatprep.subr.bf16.mxu0 0
    %215 = vmatpush1.bf16.msra.mxu0 0
    %216 = vmatprep.subr.bf16.mxu0 0
    %217 = vmatpush1.bf16.msra.mxu0 0
    %218 = vmatprep.subr.bf16.mxu0 0
    %219 = vmatpush1.bf16.msra.mxu0 0
    %220 = vmatprep.subr.bf16.mxu0 0
    %221 = vmatpush1.bf16.msra.mxu0 0
    %222 = vmatprep.subr.bf16.mxu0 0
    %223 = vmatpush1.bf16.msra.mxu0 %v204
    %224 = vmatprep.subr.bf16.mxu0 0
    %225 = vmatpush1.bf16.msra.mxu0 %v203
    %226 = vmatprep.subr.bf16.mxu0 0
    %227 = vmatpush2.bf16.msra.mxu0 0
    %228 = vmatprep.subr.bf16.mxu0 0
    %229 = vmatpush2.bf16.msra.mxu0 0
    %230 = vmatprep.subr.bf16.mxu0 0
    %231 = vmatpush2.bf16.msra.mxu0 0
    %232 = vmatprep.subr.bf16.mxu0 0
    %233 = vmatpush2.bf16.msra.mxu0 0
    %234 = vmatprep.subr.bf16.mxu0 0
    %235 = vmatpush2.bf16.msra.mxu0 0
    %236 = vmatprep.subr.bf16.mxu0 0
    %237 = vmatpush2.bf16.msra.mxu0 0
    %238 = vmatprep.subr.bf16.mxu0 0
    %239 = vmatpush2.bf16.msra.mxu0 0
    %240 = vmatprep.subr.bf16.mxu0 0
    %241 = vmatpush2.bf16.msra.mxu0 0
    %242 = vmatprep.mubr.bf16.mxu0 0
    %243 = vmatmul.mubr.bf16.gmra.mxu0 %v208
    %v244 = vpop.f32.mrf.mxu0
    %v245 = vadd.f32 %v193, %v244
    %v246 = vpop.f32.mrf.mxu0
    %v247 = vpop.f32.mrf.mxu0
    %v248 = vadd.f32 %v193, %v247
    %v249 = vpop.f32.mrf.mxu0
    %250 = vdwg.mxu0
    %252 = vrot.lane.b32.xlu0 %v245, 96
    %v253 = vpop.permute.xlu0 %252
    %vm254 = vcmask 64512
    %v255 = vsel %vm254, %v245, 0
    %v257 = vsel %vm254, %v253, 0
    %259 = vmatprep.subr.mxu0 0.0
    %260 = vmatpush1.xpose.msra.mxu0 0.0
    %261 = vmatprep.subr.mxu0 0.0
    %262 = vmatpush1.xpose.msra.mxu0 0.0
    %263 = vmatprep.subr.mxu0 0.0
    %264 = vmatpush1.xpose.msra.mxu0 0.0
    %265 = vmatprep.subr.mxu0 0.0
    %266 = vmatpush1.xpose.msra.mxu0 0.0
    %267 = vmatprep.subr.mxu0 0.0
    %268 = vmatpush1.xpose.msra.mxu0 0.0
    %269 = vmatprep.subr.mxu0 0.0
    %270 = vmatpush1.xpose.msra.mxu0 0.0
    %271 = vmatprep.subr.mxu0 0.0
    %272 = vmatpush1.xpose.msra.mxu0 0.0
    %273 = vmatprep.subr.mxu0 0.0
    %274 = vmatpush1.xpose.msra.mxu0 0.0
    %275 = vmatprep.subr.mxu0 0.0
    %276 = vmatpush1.xpose.msra.mxu0 0.0
    %277 = vmatprep.subr.mxu0 0.0
    %278 = vmatpush1.xpose.msra.mxu0 0.0
    %279 = vmatprep.subr.mxu0 0.0
    %280 = vmatpush1.xpose.msra.mxu0 0.0
    %281 = vmatprep.subr.mxu0 0.0
    %282 = vmatpush1.xpose.msra.mxu0 0.0
    %283 = vmatprep.subr.mxu0 0.0
    %284 = vmatpush1.xpose.msra.mxu0 0.0
    %285 = vmatprep.subr.mxu0 0.0
    %286 = vmatpush1.xpose.msra.mxu0 0.0
    %287 = vmatprep.subr.mxu0 0.0
    %288 = vmatpush1.xpose.msra.mxu0 0.0
    %289 = vmatprep.subr.mxu0 0.0
    %290 = vmatpush1.xpose.msra.mxu0 %v257
    %291 = vmatprep.subr.mxu0 0.0
    %292 = vmatpush2.xpose.msra.mxu0 0.0
    %293 = vmatprep.subr.mxu0 0.0
    %294 = vmatpush2.xpose.msra.mxu0 0.0
    %295 = vmatprep.subr.mxu0 0.0
    %296 = vmatpush2.xpose.msra.mxu0 0.0
    %297 = vmatprep.subr.mxu0 0.0
    %298 = vmatpush2.xpose.msra.mxu0 0.0
    %299 = vmatprep.subr.mxu0 0.0
    %300 = vmatpush2.xpose.msra.mxu0 0.0
    %301 = vmatprep.subr.mxu0 0.0
    %302 = vmatpush2.xpose.msra.mxu0 0.0
    %303 = vmatprep.subr.mxu0 0.0
    %304 = vmatpush2.xpose.msra.mxu0 0.0
    %305 = vmatprep.subr.mxu0 0.0
    %306 = vmatpush2.xpose.msra.mxu0 0.0
    %307 = vmatprep.subr.mxu0 0.0
    %308 = vmatpush2.xpose.msra.mxu0 0.0
    %309 = vmatprep.subr.mxu0 0.0
    %310 = vmatpush2.xpose.msra.mxu0 0.0
    %311 = vmatprep.subr.mxu0 0.0
    %312 = vmatpush2.xpose.msra.mxu0 0.0
    %313 = vmatprep.subr.mxu0 0.0
    %314 = vmatpush2.xpose.msra.mxu0 0.0
    %315 = vmatprep.subr.mxu0 0.0
    %316 = vmatpush2.xpose.msra.mxu0 0.0
    %317 = vmatprep.subr.mxu0 0.0
    %318 = vmatpush2.xpose.msra.mxu0 0.0
    %319 = vmatprep.subr.mxu0 0.0
    %320 = vmatpush2.xpose.msra.mxu0 0.0
    %321 = vmatprep.subr.mxu0 0.0
    %322 = vmatpush2.xpose.msra.mxu0 0.0
    %323 = vmatprep.mubr.f32.mxu0 0.0
    %324 = vmatmul.mubr.f32.gmra.mxu0 %v255
    %v325 = vpop.f32.mrf.mxu0
    %v326 = vadd.f32 0.0, %v325
    %v327 = vpop.f32.mrf.mxu0
    %328 = vdwg.mxu0
    %330 = vrot.lane.b32.xlu0 %v248, 96
    %v331 = vpop.permute.xlu0 %330
    %v332 = vsel %vm254, %v248, 0
    %v334 = vsel %vm254, %v331, 0
    %336 = vmatprep.subr.mxu0 0.0
    %337 = vmatpush1.xpose.msra.mxu0 0.0
    %338 = vmatprep.subr.mxu0 0.0
    %339 = vmatpush1.xpose.msra.mxu0 0.0
    %340 = vmatprep.subr.mxu0 0.0
    %341 = vmatpush1.xpose.msra.mxu0 0.0
    %342 = vmatprep.subr.mxu0 0.0
    %343 = vmatpush1.xpose.msra.mxu0 0.0
    %344 = vmatprep.subr.mxu0 0.0
    %345 = vmatpush1.xpose.msra.mxu0 0.0
    %346 = vmatprep.subr.mxu0 0.0
    %347 = vmatpush1.xpose.msra.mxu0 0.0
    %348 = vmatprep.subr.mxu0 0.0
    %349 = vmatpush1.xpose.msra.mxu0 0.0
    %350 = vmatprep.subr.mxu0 0.0
    %351 = vmatpush1.xpose.msra.mxu0 0.0
    %352 = vmatprep.subr.mxu0 0.0
    %353 = vmatpush1.xpose.msra.mxu0 0.0
    %354 = vmatprep.subr.mxu0 0.0
    %355 = vmatpush1.xpose.msra.mxu0 0.0
    %356 = vmatprep.subr.mxu0 0.0
    %357 = vmatpush1.xpose.msra.mxu0 0.0
    %358 = vmatprep.subr.mxu0 0.0
    %359 = vmatpush1.xpose.msra.mxu0 0.0
    %360 = vmatprep.subr.mxu0 0.0
    %361 = vmatpush1.xpose.msra.mxu0 0.0
    %362 = vmatprep.subr.mxu0 0.0
    %363 = vmatpush1.xpose.msra.mxu0 0.0
    %364 = vmatprep.subr.mxu0 0.0
    %365 = vmatpush1.xpose.msra.mxu0 0.0
    %366 = vmatprep.subr.mxu0 0.0
    %367 = vmatpush1.xpose.msra.mxu0 %v334
    %368 = vmatprep.subr.mxu0 0.0
    %369 = vmatpush2.xpose.msra.mxu0 0.0
    %370 = vmatprep.subr.mxu0 0.0
    %371 = vmatpush2.xpose.msra.mxu0 0.0
    %372 = vmatprep.subr.mxu0 0.0
    %373 = vmatpush2.xpose.msra.mxu0 0.0
    %374 = vmatprep.subr.mxu0 0.0
    %375 = vmatpush2.xpose.msra.mxu0 0.0
    %376 = vmatprep.subr.mxu0 0.0
    %377 = vmatpush2.xpose.msra.mxu0 0.0
    %378 = vmatprep.subr.mxu0 0.0
    %379 = vmatpush2.xpose.msra.mxu0 0.0
    %380 = vmatprep.subr.mxu0 0.0
    %381 = vmatpush2.xpose.msra.mxu0 0.0
    %382 = vmatprep.subr.mxu0 0.0
    %383 = vmatpush2.xpose.msra.mxu0 0.0
    %384 = vmatprep.subr.mxu0 0.0
    %385 = vmatpush2.xpose.msra.mxu0 0.0
    %386 = vmatprep.subr.mxu0 0.0
    %387 = vmatpush2.xpose.msra.mxu0 0.0
    %388 = vmatprep.subr.mxu0 0.0
    %389 = vmatpush2.xpose.msra.mxu0 0.0
    %390 = vmatprep.subr.mxu0 0.0
    %391 = vmatpush2.xpose.msra.mxu0 0.0
    %392 = vmatprep.subr.mxu0 0.0
    %393 = vmatpush2.xpose.msra.mxu0 0.0
    %394 = vmatprep.subr.mxu0 0.0
    %395 = vmatpush2.xpose.msra.mxu0 0.0
    %396 = vmatprep.subr.mxu0 0.0
    %397 = vmatpush2.xpose.msra.mxu0 0.0
    %398 = vmatprep.subr.mxu0 0.0
    %399 = vmatpush2.xpose.msra.mxu0 0.0
    %400 = vmatprep.mubr.f32.mxu0 0.0
    %401 = vmatmul.mubr.f32.gmra.mxu0 %v332
    %v402 = vpop.f32.mrf.mxu0
    %v403 = vadd.f32 0.0, %v402
    %v404 = vpop.f32.mrf.mxu0
    %405 = vdwg.mxu0
    %v406 = vmul.f32 %v326, 0.35355338
    %v407 = vmul.f32 %v403, 0.35355338
    %v410 = vunpack.c.l.s4 1966171168
    %v411 = vunpack.c.0.s8 %v410
    %v412 = vlaneseq
    %v413 = vshrl.u32 %v412, 7
    %v414 = vsub.s32 %v411, %v413
    %v415 = vrot.slane %v164, %v414
    %v416 = vcombine.high %v415, %v415
    %v418 = vunpack.c.l.s4 1966171168
    %v419 = vunpack.c.0.s8 %v418
    %v420 = vlaneseq
    %v421 = vshrl.u32 %v420, 7
    %v422 = vsub.s32 %v419, %v421
    %v423 = vrot.slane %v415, %v422
    %v425 = vunpack.c.l.s4 1966171168
    %v426 = vunpack.c.0.s8 %v425
    %v427 = vlaneseq
    %v428 = vshrl.u32 %v427, 7
    %v429 = vsub.s32 %v426, %v428
    %v430 = vrot.slane %v416, %v429
    %v431 = vlaneseq
    %v432 = vshrl.u32 %v431, 7
    %v433 = vsub.s32 0, %v432
    %v434 = vrot.slane %v423, %v433
    %v435 = vlaneseq
    %v436 = vshrl.u32 %v435, 7
    %v437 = vsub.s32 0, %v436
    %v438 = vrot.slane %v430, %v437
    %v441 = vadd.f32 %v406, %v434
    %v442 = vadd.f32 %v407, %v438
    %v443 = vsel %vm254, %v441, -inf
    %444 = vmax.xlane.f32.xlu0 %v443
    %v445 = vpop.xlane.xlu0 %444
    %v446 = vsel %vm254, %v442, -inf
    %447 = vmax.xlane.f32.xlu0 %v446
    %v448 = vpop.xlane.xlu0 %447
    %v449 = vsub.f32 %v441, %v445
    %v450 = vsub.f32 %v442, %v448
    %v451 = vmul.f32 %v449, 1.442695
    %v452 = vpow.pop %v451
    %v453 = vmul.f32 %v450, 1.442695
    %v454 = vpow.pop %v453
    %v455 = vsel %vm254, %v452, 0.0
    %456 = vadd.xlane.f32.xlu0 %v455
    %v457 = vpop.xlane.xlu0 %456
    %v458 = vsel %vm254, %v454, 0.0
    %459 = vadd.xlane.f32.xlu0 %v458
    %v460 = vpop.xlane.xlu0 %459
    %v461 = vrcp.pop %v457
    %v462 = vmul.f32 %v452, %v461
    %v463 = vrcp.pop %v460
    %v464 = vmul.f32 %v454, %v463
    %465 = vrot.lane.b32.xlu0 %v245, 64
    %v466 = vpop.permute.xlu0 %465
    %v469 = vsel %vm254, %v462, 0
    %471 = vmatprep.subr.mxu0 0.0
    %472 = vmatpush1.msra.mxu0 0.0
    %473 = vmatprep.subr.mxu0 0.0
    %474 = vmatpush1.msra.mxu0 0.0
    %475 = vmatprep.subr.mxu0 0.0
    %476 = vmatpush1.msra.mxu0 0.0
    %477 = vmatprep.subr.mxu0 0.0
    %478 = vmatpush1.msra.mxu0 0.0
    %479 = vmatprep.subr.mxu0 0.0
    %480 = vmatpush1.msra.mxu0 0.0
    %481 = vmatprep.subr.mxu0 0.0
    %482 = vmatpush1.msra.mxu0 0.0
    %483 = vmatprep.subr.mxu0 0.0
    %484 = vmatpush1.msra.mxu0 0.0
    %485 = vmatprep.subr.mxu0 0.0
    %486 = vmatpush1.msra.mxu0 0.0
    %487 = vmatprep.subr.mxu0 0.0
    %488 = vmatpush1.msra.mxu0 0.0
    %489 = vmatprep.subr.mxu0 0.0
    %490 = vmatpush1.msra.mxu0 0.0
    %491 = vmatprep.subr.mxu0 0.0
    %492 = vmatpush1.msra.mxu0 0.0
    %493 = vmatprep.subr.mxu0 0.0
    %494 = vmatpush1.msra.mxu0 0.0
    %495 = vmatprep.subr.mxu0 0.0
    %496 = vmatpush1.msra.mxu0 0.0
    %497 = vmatprep.subr.mxu0 0.0
    %498 = vmatpush1.msra.mxu0 0.0
    %499 = vmatprep.subr.mxu0 0.0
    %500 = vmatpush1.msra.mxu0 0.0
    %501 = vmatprep.subr.mxu0 0.0
    %502 = vmatpush1.msra.mxu0 %v466
    %503 = vmatprep.subr.mxu0 0.0
    %504 = vmatpush2.msra.mxu0 0.0
    %505 = vmatprep.subr.mxu0 0.0
    %506 = vmatpush2.msra.mxu0 0.0
    %507 = vmatprep.subr.mxu0 0.0
    %508 = vmatpush2.msra.mxu0 0.0
    %509 = vmatprep.subr.mxu0 0.0
    %510 = vmatpush2.msra.mxu0 0.0
    %511 = vmatprep.subr.mxu0 0.0
    %512 = vmatpush2.msra.mxu0 0.0
    %513 = vmatprep.subr.mxu0 0.0
    %514 = vmatpush2.msra.mxu0 0.0
    %515 = vmatprep.subr.mxu0 0.0
    %516 = vmatpush2.msra.mxu0 0.0
    %517 = vmatprep.subr.mxu0 0.0
    %518 = vmatpush2.msra.mxu0 0.0
    %519 = vmatprep.subr.mxu0 0.0
    %520 = vmatpush2.msra.mxu0 0.0
    %521 = vmatprep.subr.mxu0 0.0
    %522 = vmatpush2.msra.mxu0 0.0
    %523 = vmatprep.subr.mxu0 0.0
    %524 = vmatpush2.msra.mxu0 0.0
    %525 = vmatprep.subr.mxu0 0.0
    %526 = vmatpush2.msra.mxu0 0.0
    %527 = vmatprep.subr.mxu0 0.0
    %528 = vmatpush2.msra.mxu0 0.0
    %529 = vmatprep.subr.mxu0 0.0
    %530 = vmatpush2.msra.mxu0 0.0
    %531 = vmatprep.subr.mxu0 0.0
    %532 = vmatpush2.msra.mxu0 0.0
    %533 = vmatprep.subr.mxu0 0.0
    %534 = vmatpush2.msra.mxu0 0.0
    %535 = vmatprep.mubr.f32.mxu0 0.0
    %536 = vmatmul.mubr.f32.gmra.mxu0 %v469
    %v537 = vpop.f32.mrf.mxu0
    %v538 = vadd.f32 0.0, %v537
    %v539 = vpop.f32.mrf.mxu0
    %540 = vdwg.mxu0
    %541 = vrot.lane.b32.xlu0 %v248, 64
    %v542 = vpop.permute.xlu0 %541
    %v545 = vsel %vm254, %v464, 0
    %547 = vmatprep.subr.mxu0 0.0
    %548 = vmatpush1.msra.mxu0 0.0
    %549 = vmatprep.subr.mxu0 0.0
    %550 = vmatpush1.msra.mxu0 0.0
    %551 = vmatprep.subr.mxu0 0.0
    %552 = vmatpush1.msra.mxu0 0.0
    %553 = vmatprep.subr.mxu0 0.0
    %554 = vmatpush1.msra.mxu0 0.0
    %555 = vmatprep.subr.mxu0 0.0
    %556 = vmatpush1.msra.mxu0 0.0
    %557 = vmatprep.subr.mxu0 0.0
    %558 = vmatpush1.msra.mxu0 0.0
    %559 = vmatprep.subr.mxu0 0.0
    %560 = vmatpush1.msra.mxu0 0.0
    %561 = vmatprep.subr.mxu0 0.0
    %562 = vmatpush1.msra.mxu0 0.0
    %563 = vmatprep.subr.mxu0 0.0
    %564 = vmatpush1.msra.mxu0 0.0
    %565 = vmatprep.subr.mxu0 0.0
    %566 = vmatpush1.msra.mxu0 0.0
    %567 = vmatprep.subr.mxu0 0.0
    %568 = vmatpush1.msra.mxu0 0.0
    %569 = vmatprep.subr.mxu0 0.0
    %570 = vmatpush1.msra.mxu0 0.0
    %571 = vmatprep.subr.mxu0 0.0
    %572 = vmatpush1.msra.mxu0 0.0
    %573 = vmatprep.subr.mxu0 0.0
    %574 = vmatpush1.msra.mxu0 0.0
    %575 = vmatprep.subr.mxu0 0.0
    %576 = vmatpush1.msra.mxu0 0.0
    %577 = vmatprep.subr.mxu0 0.0
    %578 = vmatpush1.msra.mxu0 %v542
    %579 = vmatprep.subr.mxu0 0.0
    %580 = vmatpush2.msra.mxu0 0.0
    %581 = vmatprep.subr.mxu0 0.0
    %582 = vmatpush2.msra.mxu0 0.0
    %583 = vmatprep.subr.mxu0 0.0
    %584 = vmatpush2.msra.mxu0 0.0
    %585 = vmatprep.subr.mxu0 0.0
    %586 = vmatpush2.msra.mxu0 0.0
    %587 = vmatprep.subr.mxu0 0.0
    %588 = vmatpush2.msra.mxu0 0.0
    %589 = vmatprep.subr.mxu0 0.0
    %590 = vmatpush2.msra.mxu0 0.0
    %591 = vmatprep.subr.mxu0 0.0
    %592 = vmatpush2.msra.mxu0 0.0
    %593 = vmatprep.subr.mxu0 0.0
    %594 = vmatpush2.msra.mxu0 0.0
    %595 = vmatprep.subr.mxu0 0.0
    %596 = vmatpush2.msra.mxu0 0.0
    %597 = vmatprep.subr.mxu0 0.0
    %598 = vmatpush2.msra.mxu0 0.0
    %599 = vmatprep.subr.mxu0 0.0
    %600 = vmatpush2.msra.mxu0 0.0
    %601 = vmatprep.subr.mxu0 0.0
    %602 = vmatpush2.msra.mxu0 0.0
    %603 = vmatprep.subr.mxu0 0.0
    %604 = vmatpush2.msra.mxu0 0.0
    %605 = vmatprep.subr.mxu0 0.0
    %606 = vmatpush2.msra.mxu0 0.0
    %607 = vmatprep.subr.mxu0 0.0
    %608 = vmatpush2.msra.mxu0 0.0
    %609 = vmatprep.subr.mxu0 0.0
    %610 = vmatpush2.msra.mxu0 0.0
    %611 = vmatprep.mubr.f32.mxu0 0.0
    %612 = vmatmul.mubr.f32.gmra.mxu0 %v545
    %v613 = vpop.f32.mrf.mxu0
    %v614 = vadd.f32 0.0, %v613
    %v615 = vpop.f32.mrf.mxu0
    %616 = vdwg.mxu0
    %v617 = vpack.c.bf16 %v614, %v538
    %618 = vrot.lane.b32.xlu0 %v245, 120
    %v619 = vpop.permute.xlu0 %618
    %620 = vrot.lane.b32.xlu0 %v245, 88
    %v621 = vpop.permute.xlu0 %620
    %v622 = vsel %vm254, %v619, 0
    %v624 = vsel %vm254, %v621, 0
    %626 = vmatprep.subr.mxu0 0.0
    %627 = vmatpush1.xpose.msra.mxu0 0.0
    %628 = vmatprep.subr.mxu0 0.0
    %629 = vmatpush1.xpose.msra.mxu0 0.0
    %630 = vmatprep.subr.mxu0 0.0
    %631 = vmatpush1.xpose.msra.mxu0 0.0
    %632 = vmatprep.subr.mxu0 0.0
    %633 = vmatpush1.xpose.msra.mxu0 0.0
    %634 = vmatprep.subr.mxu0 0.0
    %635 = vmatpush1.xpose.msra.mxu0 0.0
    %636 = vmatprep.subr.mxu0 0.0
    %637 = vmatpush1.xpose.msra.mxu0 0.0
    %638 = vmatprep.subr.mxu0 0.0
    %639 = vmatpush1.xpose.msra.mxu0 0.0
    %640 = vmatprep.subr.mxu0 0.0
    %641 = vmatpush1.xpose.msra.mxu0 0.0
    %642 = vmatprep.subr.mxu0 0.0
    %643 = vmatpush1.xpose.msra.mxu0 0.0
    %644 = vmatprep.subr.mxu0 0.0
    %645 = vmatpush1.xpose.msra.mxu0 0.0
    %646 = vmatprep.subr.mxu0 0.0
    %647 = vmatpush1.xpose.msra.mxu0 0.0
    %648 = vmatprep.subr.mxu0 0.0
    %649 = vmatpush1.xpose.msra.mxu0 0.0
    %650 = vmatprep.subr.mxu0 0.0
    %651 = vmatpush1.xpose.msra.mxu0 0.0
    %652 = vmatprep.subr.mxu0 0.0
    %653 = vmatpush1.xpose.msra.mxu0 0.0
    %654 = vmatprep.subr.mxu0 0.0
    %655 = vmatpush1.xpose.msra.mxu0 0.0
    %656 = vmatprep.subr.mxu0 0.0
    %657 = vmatpush1.xpose.msra.mxu0 %v624
    %658 = vmatprep.subr.mxu0 0.0
    %659 = vmatpush2.xpose.msra.mxu0 0.0
    %660 = vmatprep.subr.mxu0 0.0
    %661 = vmatpush2.xpose.msra.mxu0 0.0
    %662 = vmatprep.subr.mxu0 0.0
    %663 = vmatpush2.xpose.msra.mxu0 0.0
    %664 = vmatprep.subr.mxu0 0.0
    %665 = vmatpush2.xpose.msra.mxu0 0.0
    %666 = vmatprep.subr.mxu0 0.0
    %667 = vmatpush2.xpose.msra.mxu0 0.0
    %668 = vmatprep.subr.mxu0 0.0
    %669 = vmatpush2.xpose.msra.mxu0 0.0
    %670 = vmatprep.subr.mxu0 0.0
    %671 = vmatpush2.xpose.msra.mxu0 0.0
    %672 = vmatprep.subr.mxu0 0.0
    %673 = vmatpush2.xpose.msra.mxu0 0.0
    %674 = vmatprep.subr.mxu0 0.0
    %675 = vmatpush2.xpose.msra.mxu0 0.0
    %676 = vmatprep.subr.mxu0 0.0
    %677 = vmatpush2.xpose.msra.mxu0 0.0
    %678 = vmatprep.subr.mxu0 0.0
    %679 = vmatpush2.xpose.msra.mxu0 0.0
    %680 = vmatprep.subr.mxu0 0.0
    %681 = vmatpush2.xpose.msra.mxu0 0.0
    %682 = vmatprep.subr.mxu0 0.0
    %683 = vmatpush2.xpose.msra.mxu0 0.0
    %684 = vmatprep.subr.mxu0 0.0
    %685 = vmatpush2.xpose.msra.mxu0 0.0
    %686 = vmatprep.subr.mxu0 0.0
    %687 = vmatpush2.xpose.msra.mxu0 0.0
    %688 = vmatprep.subr.mxu0 0.0
    %689 = vmatpush2.xpose.msra.mxu0 0.0
    %690 = vmatprep.mubr.f32.mxu0 0.0
    %691 = vmatmul.mubr.f32.gmra.mxu0 %v622
    %v692 = vpop.f32.mrf.mxu0
    %v693 = vadd.f32 0.0, %v692
    %v694 = vpop.f32.mrf.mxu0
    %695 = vdwg.mxu0
    %696 = vrot.lane.b32.xlu0 %v248, 120
    %v697 = vpop.permute.xlu0 %696
    %698 = vrot.lane.b32.xlu0 %v248, 88
    %v699 = vpop.permute.xlu0 %698
    %v700 = vsel %vm254, %v697, 0
    %v702 = vsel %vm254, %v699, 0
    %704 = vmatprep.subr.mxu0 0.0
    %705 = vmatpush1.xpose.msra.mxu0 0.0
    %706 = vmatprep.subr.mxu0 0.0
    %707 = vmatpush1.xpose.msra.mxu0 0.0
    %708 = vmatprep.subr.mxu0 0.0
    %709 = vmatpush1.xpose.msra.mxu0 0.0
    %710 = vmatprep.subr.mxu0 0.0
    %711 = vmatpush1.xpose.msra.mxu0 0.0
    %712 = vmatprep.subr.mxu0 0.0
    %713 = vmatpush1.xpose.msra.mxu0 0.0
    %714 = vmatprep.subr.mxu0 0.0
    %715 = vmatpush1.xpose.msra.mxu0 0.0
    %716 = vmatprep.subr.mxu0 0.0
    %717 = vmatpush1.xpose.msra.mxu0 0.0
    %718 = vmatprep.subr.mxu0 0.0
    %719 = vmatpush1.xpose.msra.mxu0 0.0
    %720 = vmatprep.subr.mxu0 0.0
    %721 = vmatpush1.xpose.msra.mxu0 0.0
    %722 = vmatprep.subr.mxu0 0.0
    %723 = vmatpush1.xpose.msra.mxu0 0.0
    %724 = vmatprep.subr.mxu0 0.0
    %725 = vmatpush1.xpose.msra.mxu0 0.0
    %726 = vmatprep.subr.mxu0 0.0
    %727 = vmatpush1.xpose.msra.mxu0 0.0
    %728 = vmatprep.subr.mxu0 0.0
    %729 = vmatpush1.xpose.msra.mxu0 0.0
    %730 = vmatprep.subr.mxu0 0.0
    %731 = vmatpush1.xpose.msra.mxu0 0.0
    %732 = vmatprep.subr.mxu0 0.0
    %733 = vmatpush1.xpose.msra.mxu0 0.0
    %734 = vmatprep.subr.mxu0 0.0
    %735 = vmatpush1.xpose.msra.mxu0 %v702
    %736 = vmatprep.subr.mxu0 0.0
    %737 = vmatpush2.xpose.msra.mxu0 0.0
    %738 = vmatprep.subr.mxu0 0.0
    %739 = vmatpush2.xpose.msra.mxu0 0.0
    %740 = vmatprep.subr.mxu0 0.0
    %741 = vmatpush2.xpose.msra.mxu0 0.0
    %742 = vmatprep.subr.mxu0 0.0
    %743 = vmatpush2.xpose.msra.mxu0 0.0
    %744 = vmatprep.subr.mxu0 0.0
    %745 = vmatpush2.xpose.msra.mxu0 0.0
    %746 = vmatprep.subr.mxu0 0.0
    %747 = vmatpush2.xpose.msra.mxu0 0.0
    %748 = vmatprep.subr.mxu0 0.0
    %749 = vmatpush2.xpose.msra.mxu0 0.0
    %750 = vmatprep.subr.mxu0 0.0
    %751 = vmatpush2.xpose.msra.mxu0 0.0
    %752 = vmatprep.subr.mxu0 0.0
    %753 = vmatpush2.xpose.msra.mxu0 0.0
    %754 = vmatprep.subr.mxu0 0.0
    %755 = vmatpush2.xpose.msra.mxu0 0.0
    %756 = vmatprep.subr.mxu0 0.0
    %757 = vmatpush2.xpose.msra.mxu0 0.0
    %758 = vmatprep.subr.mxu0 0.0
    %759 = vmatpush2.xpose.msra.mxu0 0.0
    %760 = vmatprep.subr.mxu0 0.0
    %761 = vmatpush2.xpose.msra.mxu0 0.0
    %762 = vmatprep.subr.mxu0 0.0
    %763 = vmatpush2.xpose.msra.mxu0 0.0
    %764 = vmatprep.subr.mxu0 0.0
    %765 = vmatpush2.xpose.msra.mxu0 0.0
    %766 = vmatprep.subr.mxu0 0.0
    %767 = vmatpush2.xpose.msra.mxu0 0.0
    %768 = vmatprep.mubr.f32.mxu0 0.0
    %769 = vmatmul.mubr.f32.gmra.mxu0 %v700
    %v770 = vpop.f32.mrf.mxu0
    %v771 = vadd.f32 0.0, %v770
    %v772 = vpop.f32.mrf.mxu0
    %773 = vdwg.mxu0
    %v774 = vmul.f32 %v693, 0.35355338
    %v775 = vmul.f32 %v771, 0.35355338
    %v776 = vadd.f32 %v774, %v434
    %v777 = vadd.f32 %v775, %v438
    %v778 = vsel %vm254, %v776, -inf
    %779 = vmax.xlane.f32.xlu0 %v778
    %v780 = vpop.xlane.xlu0 %779
    %v781 = vsel %vm254, %v777, -inf
    %782 = vmax.xlane.f32.xlu0 %v781
    %v783 = vpop.xlane.xlu0 %782
    %v784 = vsub.f32 %v776, %v780
    %v785 = vsub.f32 %v777, %v783
    %v786 = vmul.f32 %v784, 1.442695
    %v787 = vpow.pop %v786
    %v788 = vmul.f32 %v785, 1.442695
    %v789 = vpow.pop %v788
    %v790 = vsel %vm254, %v787, 0.0
    %791 = vadd.xlane.f32.xlu0 %v790
    %v792 = vpop.xlane.xlu0 %791
    %v793 = vsel %vm254, %v789, 0.0
    %794 = vadd.xlane.f32.xlu0 %v793
    %v795 = vpop.xlane.xlu0 %794
    %v796 = vrcp.pop %v792
    %v797 = vmul.f32 %v787, %v796
    %v798 = vrcp.pop %v795
    %v799 = vmul.f32 %v789, %v798
    %800 = vrot.lane.b32.xlu0 %v245, 56
    %v801 = vpop.permute.xlu0 %800
    %v804 = vsel %vm254, %v797, 0
    %806 = vmatprep.subr.mxu0 0.0
    %807 = vmatpush1.msra.mxu0 0.0
    %808 = vmatprep.subr.mxu0 0.0
    %809 = vmatpush1.msra.mxu0 0.0
    %810 = vmatprep.subr.mxu0 0.0
    %811 = vmatpush1.msra.mxu0 0.0
    %812 = vmatprep.subr.mxu0 0.0
    %813 = vmatpush1.msra.mxu0 0.0
    %814 = vmatprep.subr.mxu0 0.0
    %815 = vmatpush1.msra.mxu0 0.0
    %816 = vmatprep.subr.mxu0 0.0
    %817 = vmatpush1.msra.mxu0 0.0
    %818 = vmatprep.subr.mxu0 0.0
    %819 = vmatpush1.msra.mxu0 0.0
    %820 = vmatprep.subr.mxu0 0.0
    %821 = vmatpush1.msra.mxu0 0.0
    %822 = vmatprep.subr.mxu0 0.0
    %823 = vmatpush1.msra.mxu0 0.0
    %824 = vmatprep.subr.mxu0 0.0
    %825 = vmatpush1.msra.mxu0 0.0
    %826 = vmatprep.subr.mxu0 0.0
    %827 = vmatpush1.msra.mxu0 0.0
    %828 = vmatprep.subr.mxu0 0.0
    %829 = vmatpush1.msra.mxu0 0.0
    %830 = vmatprep.subr.mxu0 0.0
    %831 = vmatpush1.msra.mxu0 0.0
    %832 = vmatprep.subr.mxu0 0.0
    %833 = vmatpush1.msra.mxu0 0.0
    %834 = vmatprep.subr.mxu0 0.0
    %835 = vmatpush1.msra.mxu0 0.0
    %836 = vmatprep.subr.mxu0 0.0
    %837 = vmatpush1.msra.mxu0 %v801
    %838 = vmatprep.subr.mxu0 0.0
    %839 = vmatpush2.msra.mxu0 0.0
    %840 = vmatprep.subr.mxu0 0.0
    %841 = vmatpush2.msra.mxu0 0.0
    %842 = vmatprep.subr.mxu0 0.0
    %843 = vmatpush2.msra.mxu0 0.0
    %844 = vmatprep.subr.mxu0 0.0
    %845 = vmatpush2.msra.mxu0 0.0
    %846 = vmatprep.subr.mxu0 0.0
    %847 = vmatpush2.msra.mxu0 0.0
    %848 = vmatprep.subr.mxu0 0.0
    %849 = vmatpush2.msra.mxu0 0.0
    %850 = vmatprep.subr.mxu0 0.0
    %851 = vmatpush2.msra.mxu0 0.0
    %852 = vmatprep.subr.mxu0 0.0
    %853 = vmatpush2.msra.mxu0 0.0
    %854 = vmatprep.subr.mxu0 0.0
    %855 = vmatpush2.msra.mxu0 0.0
    %856 = vmatprep.subr.mxu0 0.0
    %857 = vmatpush2.msra.mxu0 0.0
    %858 = vmatprep.subr.mxu0 0.0
    %859 = vmatpush2.msra.mxu0 0.0
    %860 = vmatprep.subr.mxu0 0.0
    %861 = vmatpush2.msra.mxu0 0.0
    %862 = vmatprep.subr.mxu0 0.0
    %863 = vmatpush2.msra.mxu0 0.0
    %864 = vmatprep.subr.mxu0 0.0
    %865 = vmatpush2.msra.mxu0 0.0
    %866 = vmatprep.subr.mxu0 0.0
    %867 = vmatpush2.msra.mxu0 0.0
    %868 = vmatprep.subr.mxu0 0.0
    %869 = vmatpush2.msra.mxu0 0.0
    %870 = vmatprep.mubr.f32.mxu0 0.0
    %871 = vmatmul.mubr.f32.gmra.mxu0 %v804
    %v872 = vpop.f32.mrf.mxu0
    %v873 = vadd.f32 0.0, %v872
    %v874 = vpop.f32.mrf.mxu0
    %875 = vdwg.mxu0
    %876 = vrot.lane.b32.xlu0 %v248, 56
    %v877 = vpop.permute.xlu0 %876
    %v880 = vsel %vm254, %v799, 0
    %882 = vmatprep.subr.mxu0 0.0
    %883 = vmatpush1.msra.mxu0 0.0
    %884 = vmatprep.subr.mxu0 0.0
    %885 = vmatpush1.msra.mxu0 0.0
    %886 = vmatprep.subr.mxu0 0.0
    %887 = vmatpush1.msra.mxu0 0.0
    %888 = vmatprep.subr.mxu0 0.0
    %889 = vmatpush1.msra.mxu0 0.0
    %890 = vmatprep.subr.mxu0 0.0
    %891 = vmatpush1.msra.mxu0 0.0
    %892 = vmatprep.subr.mxu0 0.0
    %893 = vmatpush1.msra.mxu0 0.0
    %894 = vmatprep.subr.mxu0 0.0
    %895 = vmatpush1.msra.mxu0 0.0
    %896 = vmatprep.subr.mxu0 0.0
    %897 = vmatpush1.msra.mxu0 0.0
    %898 = vmatprep.subr.mxu0 0.0
    %899 = vmatpush1.msra.mxu0 0.0
    %900 = vmatprep.subr.mxu0 0.0
    %901 = vmatpush1.msra.mxu0 0.0
    %902 = vmatprep.subr.mxu0 0.0
    %903 = vmatpush1.msra.mxu0 0.0
    %904 = vmatprep.subr.mxu0 0.0
    %905 = vmatpush1.msra.mxu0 0.0
    %906 = vmatprep.subr.mxu0 0.0
    %907 = vmatpush1.msra.mxu0 0.0
    %908 = vmatprep.subr.mxu0 0.0
    %909 = vmatpush1.msra.mxu0 0.0
    %910 = vmatprep.subr.mxu0 0.0
    %911 = vmatpush1.msra.mxu0 0.0
    %912 = vmatprep.subr.mxu0 0.0
    %913 = vmatpush1.msra.mxu0 %v877
    %914 = vmatprep.subr.mxu0 0.0
    %915 = vmatpush2.msra.mxu0 0.0
    %916 = vmatprep.subr.mxu0 0.0
    %917 = vmatpush2.msra.mxu0 0.0
    %918 = vmatprep.subr.mxu0 0.0
    %919 = vmatpush2.msra.mxu0 0.0
    %920 = vmatprep.subr.mxu0 0.0
    %921 = vmatpush2.msra.mxu0 0.0
    %922 = vmatprep.subr.mxu0 0.0
    %923 = vmatpush2.msra.mxu0 0.0
    %924 = vmatprep.subr.mxu0 0.0
    %925 = vmatpush2.msra.mxu0 0.0
    %926 = vmatprep.subr.mxu0 0.0
    %927 = vmatpush2.msra.mxu0 0.0
    %928 = vmatprep.subr.mxu0 0.0
    %929 = vmatpush2.msra.mxu0 0.0
    %930 = vmatprep.subr.mxu0 0.0
    %931 = vmatpush2.msra.mxu0 0.0
    %932 = vmatprep.subr.mxu0 0.0
    %933 = vmatpush2.msra.mxu0 0.0
    %934 = vmatprep.subr.mxu0 0.0
    %935 = vmatpush2.msra.mxu0 0.0
    %936 = vmatprep.subr.mxu0 0.0
    %937 = vmatpush2.msra.mxu0 0.0
    %938 = vmatprep.subr.mxu0 0.0
    %939 = vmatpush2.msra.mxu0 0.0
    %940 = vmatprep.subr.mxu0 0.0
    %941 = vmatpush2.msra.mxu0 0.0
    %942 = vmatprep.subr.mxu0 0.0
    %943 = vmatpush2.msra.mxu0 0.0
    %944 = vmatprep.subr.mxu0 0.0
    %945 = vmatpush2.msra.mxu0 0.0
    %946 = vmatprep.mubr.f32.mxu0 0.0
    %947 = vmatmul.mubr.f32.gmra.mxu0 %v880
    %v948 = vpop.f32.mrf.mxu0
    %v949 = vadd.f32 0.0, %v948
    %v950 = vpop.f32.mrf.mxu0
    %951 = vdwg.mxu0
    %v952 = vpack.c.bf16 %v949, %v873
    %v954 = vsel %vm254, %v952, 0
    %vm956 = vcmask 1043456
    %v958 = vsel %vm956, %v171, 0
    %960 = vmatprep.subr.bf16.mxu0 0
    %961 = vmatpush1.bf16.msra.mxu0 0
    %962 = vmatprep.subr.bf16.mxu0 0
    %963 = vmatpush1.bf16.msra.mxu0 0
    %964 = vmatprep.subr.bf16.mxu0 0
    %965 = vmatpush1.bf16.msra.mxu0 0
    %966 = vmatprep.subr.bf16.mxu0 0
    %967 = vmatpush1.bf16.msra.mxu0 0
    %968 = vmatprep.subr.bf16.mxu0 0
    %969 = vmatpush1.bf16.msra.mxu0 0
    %970 = vmatprep.subr.bf16.mxu0 0
    %971 = vmatpush1.bf16.msra.mxu0 0
    %972 = vmatprep.subr.bf16.mxu0 0
    %973 = vmatpush1.bf16.msra.mxu0 0
    %974 = vmatprep.subr.bf16.mxu0 0
    %975 = vmatpush1.bf16.msra.mxu0 %v958
    %976 = vmatprep.subr.bf16.mxu0 0
    %977 = vmatpush2.bf16.msra.mxu0 0
    %978 = vmatprep.subr.bf16.mxu0 0
    %979 = vmatpush2.bf16.msra.mxu0 0
    %980 = vmatprep.subr.bf16.mxu0 0
    %981 = vmatpush2.bf16.msra.mxu0 0
    %982 = vmatprep.subr.bf16.mxu0 0
    %983 = vmatpush2.bf16.msra.mxu0 0
    %984 = vmatprep.subr.bf16.mxu0 0
    %985 = vmatpush2.bf16.msra.mxu0 0
    %986 = vmatprep.subr.bf16.mxu0 0
    %987 = vmatpush2.bf16.msra.mxu0 0
    %988 = vmatprep.subr.bf16.mxu0 0
    %989 = vmatpush2.bf16.msra.mxu0 0
    %990 = vmatprep.subr.bf16.mxu0 0
    %991 = vmatpush2.bf16.msra.mxu0 0
    %992 = vmatprep.mubr.bf16.mxu0 0
    %993 = vmatmul.mubr.bf16.gmra.mxu0 %v954
    %v994 = vpop.f32.mrf.mxu0
    %v995 = vadd.f32 0.0, %v994
    %v996 = vpop.f32.mrf.mxu0
    %v997 = vpop.f32.mrf.mxu0
    %v998 = vadd.f32 0.0, %v997
    %v999 = vpop.f32.mrf.mxu0
    %1000 = vdwg.mxu0
    %v1002 = vsel %vm254, %v617, 0
    %v1005 = vsel %vm956, %v170, 0
    %1007 = vmatprep.subr.bf16.mxu0 0
    %1008 = vmatpush1.bf16.msra.mxu0 0
    %1009 = vmatprep.subr.bf16.mxu0 0
    %1010 = vmatpush1.bf16.msra.mxu0 0
    %1011 = vmatprep.subr.bf16.mxu0 0
    %1012 = vmatpush1.bf16.msra.mxu0 0
    %1013 = vmatprep.subr.bf16.mxu0 0
    %1014 = vmatpush1.bf16.msra.mxu0 0
    %1015 = vmatprep.subr.bf16.mxu0 0
    %1016 = vmatpush1.bf16.msra.mxu0 0
    %1017 = vmatprep.subr.bf16.mxu0 0
    %1018 = vmatpush1.bf16.msra.mxu0 0
    %1019 = vmatprep.subr.bf16.mxu0 0
    %1020 = vmatpush1.bf16.msra.mxu0 0
    %1021 = vmatprep.subr.bf16.mxu0 0
    %1022 = vmatpush1.bf16.msra.mxu0 %v1005
    %1023 = vmatprep.subr.bf16.mxu0 0
    %1024 = vmatpush2.bf16.msra.mxu0 0
    %1025 = vmatprep.subr.bf16.mxu0 0
    %1026 = vmatpush2.bf16.msra.mxu0 0
    %1027 = vmatprep.subr.bf16.mxu0 0
    %1028 = vmatpush2.bf16.msra.mxu0 0
    %1029 = vmatprep.subr.bf16.mxu0 0
    %1030 = vmatpush2.bf16.msra.mxu0 0
    %1031 = vmatprep.subr.bf16.mxu0 0
    %1032 = vmatpush2.bf16.msra.mxu0 0
    %1033 = vmatprep.subr.bf16.mxu0 0
    %1034 = vmatpush2.bf16.msra.mxu0 0
    %1035 = vmatprep.subr.bf16.mxu0 0
    %1036 = vmatpush2.bf16.msra.mxu0 0
    %1037 = vmatprep.subr.bf16.mxu0 0
    %1038 = vmatpush2.bf16.msra.mxu0 0
    %1039 = vmatprep.mubr.bf16.mxu0 0
    %1040 = vmatmul.mubr.bf16.gmra.mxu0 %v1002
    %v1041 = vpop.f32.mrf.mxu0
    %v1042 = vadd.f32 %v995, %v1041
    %v1043 = vpop.f32.mrf.mxu0
    %v1044 = vpop.f32.mrf.mxu0
    %v1045 = vadd.f32 %v998, %v1044
    %v1046 = vpop.f32.mrf.mxu0
    %1047 = vdwg.mxu0
    %1048 = vrot.lane.b32.xlu0 %v245, 112
    %v1049 = vpop.permute.xlu0 %1048
    %1050 = vrot.lane.b32.xlu0 %v245, 80
    %v1051 = vpop.permute.xlu0 %1050
    %v1052 = vsel %vm254, %v1049, 0
    %v1054 = vsel %vm254, %v1051, 0
    %1056 = vmatprep.subr.mxu0 0.0
    %1057 = vmatpush1.xpose.msra.mxu0 0.0
    %1058 = vmatprep.subr.mxu0 0.0
    %1059 = vmatpush1.xpose.msra.mxu0 0.0
    %1060 = vmatprep.subr.mxu0 0.0
    %1061 = vmatpush1.xpose.msra.mxu0 0.0
    %1062 = vmatprep.subr.mxu0 0.0
    %1063 = vmatpush1.xpose.msra.mxu0 0.0
    %1064 = vmatprep.subr.mxu0 0.0
    %1065 = vmatpush1.xpose.msra.mxu0 0.0
    %1066 = vmatprep.subr.mxu0 0.0
    %1067 = vmatpush1.xpose.msra.mxu0 0.0
    %1068 = vmatprep.subr.mxu0 0.0
    %1069 = vmatpush1.xpose.msra.mxu0 0.0
    %1070 = vmatprep.subr.mxu0 0.0
    %1071 = vmatpush1.xpose.msra.mxu0 0.0
    %1072 = vmatprep.subr.mxu0 0.0
    %1073 = vmatpush1.xpose.msra.mxu0 0.0
    %1074 = vmatprep.subr.mxu0 0.0
    %1075 = vmatpush1.xpose.msra.mxu0 0.0
    %1076 = vmatprep.subr.mxu0 0.0
    %1077 = vmatpush1.xpose.msra.mxu0 0.0
    %1078 = vmatprep.subr.mxu0 0.0
    %1079 = vmatpush1.xpose.msra.mxu0 0.0
    %1080 = vmatprep.subr.mxu0 0.0
    %1081 = vmatpush1.xpose.msra.mxu0 0.0
    %1082 = vmatprep.subr.mxu0 0.0
    %1083 = vmatpush1.xpose.msra.mxu0 0.0
    %1084 = vmatprep.subr.mxu0 0.0
    %1085 = vmatpush1.xpose.msra.mxu0 0.0
    %1086 = vmatprep.subr.mxu0 0.0
    %1087 = vmatpush1.xpose.msra.mxu0 %v1054
    %1088 = vmatprep.subr.mxu0 0.0
    %1089 = vmatpush2.xpose.msra.mxu0 0.0
    %1090 = vmatprep.subr.mxu0 0.0
    %1091 = vmatpush2.xpose.msra.mxu0 0.0
    %1092 = vmatprep.subr.mxu0 0.0
    %1093 = vmatpush2.xpose.msra.mxu0 0.0
    %1094 = vmatprep.subr.mxu0 0.0
    %1095 = vmatpush2.xpose.msra.mxu0 0.0
    %1096 = vmatprep.subr.mxu0 0.0
    %1097 = vmatpush2.xpose.msra.mxu0 0.0
    %1098 = vmatprep.subr.mxu0 0.0
    %1099 = vmatpush2.xpose.msra.mxu0 0.0
    %1100 = vmatprep.subr.mxu0 0.0
    %1101 = vmatpush2.xpose.msra.mxu0 0.0
    %1102 = vmatprep.subr.mxu0 0.0
    %1103 = vmatpush2.xpose.msra.mxu0 0.0
    %1104 = vmatprep.subr.mxu0 0.0
    %1105 = vmatpush2.xpose.msra.mxu0 0.0
    %1106 = vmatprep.subr.mxu0 0.0
    %1107 = vmatpush2.xpose.msra.mxu0 0.0
    %1108 = vmatprep.subr.mxu0 0.0
    %1109 = vmatpush2.xpose.msra.mxu0 0.0
    %1110 = vmatprep.subr.mxu0 0.0
    %1111 = vmatpush2.xpose.msra.mxu0 0.0
    %1112 = vmatprep.subr.mxu0 0.0
    %1113 = vmatpush2.xpose.msra.mxu0 0.0
    %1114 = vmatprep.subr.mxu0 0.0
    %1115 = vmatpush2.xpose.msra.mxu0 0.0
    %1116 = vmatprep.subr.mxu0 0.0
    %1117 = vmatpush2.xpose.msra.mxu0 0.0
    %1118 = vmatprep.subr.mxu0 0.0
    %1119 = vmatpush2.xpose.msra.mxu0 0.0
    %1120 = vmatprep.mubr.f32.mxu0 0.0
    %1121 = vmatmul.mubr.f32.gmra.mxu0 %v1052
    %v1122 = vpop.f32.mrf.mxu0
    %v1123 = vadd.f32 0.0, %v1122
    %v1124 = vpop.f32.mrf.mxu0
    %1125 = vdwg.mxu0
    %1126 = vrot.lane.b32.xlu0 %v248, 112
    %v1127 = vpop.permute.xlu0 %1126
    %1128 = vrot.lane.b32.xlu0 %v248, 80
    %v1129 = vpop.permute.xlu0 %1128
    %v1130 = vsel %vm254, %v1127, 0
    %v1132 = vsel %vm254, %v1129, 0
    %1134 = vmatprep.subr.mxu0 0.0
    %1135 = vmatpush1.xpose.msra.mxu0 0.0
    %1136 = vmatprep.subr.mxu0 0.0
    %1137 = vmatpush1.xpose.msra.mxu0 0.0
    %1138 = vmatprep.subr.mxu0 0.0
    %1139 = vmatpush1.xpose.msra.mxu0 0.0
    %1140 = vmatprep.subr.mxu0 0.0
    %1141 = vmatpush1.xpose.msra.mxu0 0.0
    %1142 = vmatprep.subr.mxu0 0.0
    %1143 = vmatpush1.xpose.msra.mxu0 0.0
    %1144 = vmatprep.subr.mxu0 0.0
    %1145 = vmatpush1.xpose.msra.mxu0 0.0
    %1146 = vmatprep.subr.mxu0 0.0
    %1147 = vmatpush1.xpose.msra.mxu0 0.0
    %1148 = vmatprep.subr.mxu0 0.0
    %1149 = vmatpush1.xpose.msra.mxu0 0.0
    %1150 = vmatprep.subr.mxu0 0.0
    %1151 = vmatpush1.xpose.msra.mxu0 0.0
    %1152 = vmatprep.subr.mxu0 0.0
    %1153 = vmatpush1.xpose.msra.mxu0 0.0
    %1154 = vmatprep.subr.mxu0 0.0
    %1155 = vmatpush1.xpose.msra.mxu0 0.0
    %1156 = vmatprep.subr.mxu0 0.0
    %1157 = vmatpush1.xpose.msra.mxu0 0.0
    %1158 = vmatprep.subr.mxu0 0.0
    %1159 = vmatpush1.xpose.msra.mxu0 0.0
    %1160 = vmatprep.subr.mxu0 0.0
    %1161 = vmatpush1.xpose.msra.mxu0 0.0
    %1162 = vmatprep.subr.mxu0 0.0
    %1163 = vmatpush1.xpose.msra.mxu0 0.0
    %1164 = vmatprep.subr.mxu0 0.0
    %1165 = vmatpush1.xpose.msra.mxu0 %v1132
    %1166 = vmatprep.subr.mxu0 0.0
    %1167 = vmatpush2.xpose.msra.mxu0 0.0
    %1168 = vmatprep.subr.mxu0 0.0
    %1169 = vmatpush2.xpose.msra.mxu0 0.0
    %1170 = vmatprep.subr.mxu0 0.0
    %1171 = vmatpush2.xpose.msra.mxu0 0.0
    %1172 = vmatprep.subr.mxu0 0.0
    %1173 = vmatpush2.xpose.msra.mxu0 0.0
    %1174 = vmatprep.subr.mxu0 0.0
    %1175 = vmatpush2.xpose.msra.mxu0 0.0
    %1176 = vmatprep.subr.mxu0 0.0
    %1177 = vmatpush2.xpose.msra.mxu0 0.0
    %1178 = vmatprep.subr.mxu0 0.0
    %1179 = vmatpush2.xpose.msra.mxu0 0.0
    %1180 = vmatprep.subr.mxu0 0.0
    %1181 = vmatpush2.xpose.msra.mxu0 0.0
    %1182 = vmatprep.subr.mxu0 0.0
    %1183 = vmatpush2.xpose.msra.mxu0 0.0
    %1184 = vmatprep.subr.mxu0 0.0
    %1185 = vmatpush2.xpose.msra.mxu0 0.0
    %1186 = vmatprep.subr.mxu0 0.0
    %1187 = vmatpush2.xpose.msra.mxu0 0.0
    %1188 = vmatprep.subr.mxu0 0.0
    %1189 = vmatpush2.xpose.msra.mxu0 0.0
    %1190 = vmatprep.subr.mxu0 0.0
    %1191 = vmatpush2.xpose.msra.mxu0 0.0
    %1192 = vmatprep.subr.mxu0 0.0
    %1193 = vmatpush2.xpose.msra.mxu0 0.0
    %1194 = vmatprep.subr.mxu0 0.0
    %1195 = vmatpush2.xpose.msra.mxu0 0.0
    %1196 = vmatprep.subr.mxu0 0.0
    %1197 = vmatpush2.xpose.msra.mxu0 0.0
    %1198 = vmatprep.mubr.f32.mxu0 0.0
    %1199 = vmatmul.mubr.f32.gmra.mxu0 %v1130
    %v1200 = vpop.f32.mrf.mxu0
    %v1201 = vadd.f32 0.0, %v1200
    %v1202 = vpop.f32.mrf.mxu0
    %1203 = vdwg.mxu0
    %v1204 = vmul.f32 %v1123, 0.35355338
    %v1205 = vmul.f32 %v1201, 0.35355338
    %v1206 = vadd.f32 %v1204, %v434
    %v1207 = vadd.f32 %v1205, %v438
    %v1208 = vsel %vm254, %v1206, -inf
    %1209 = vmax.xlane.f32.xlu0 %v1208
    %v1210 = vpop.xlane.xlu0 %1209
    %v1211 = vsel %vm254, %v1207, -inf
    %1212 = vmax.xlane.f32.xlu0 %v1211
    %v1213 = vpop.xlane.xlu0 %1212
    %v1214 = vsub.f32 %v1206, %v1210
    %v1215 = vsub.f32 %v1207, %v1213
    %v1216 = vmul.f32 %v1214, 1.442695
    %v1217 = vpow.pop %v1216
    %v1218 = vmul.f32 %v1215, 1.442695
    %v1219 = vpow.pop %v1218
    %v1220 = vsel %vm254, %v1217, 0.0
    %1221 = vadd.xlane.f32.xlu0 %v1220
    %v1222 = vpop.xlane.xlu0 %1221
    %v1223 = vsel %vm254, %v1219, 0.0
    %1224 = vadd.xlane.f32.xlu0 %v1223
    %v1225 = vpop.xlane.xlu0 %1224
    %v1226 = vrcp.pop %v1222
    %v1227 = vmul.f32 %v1217, %v1226
    %v1228 = vrcp.pop %v1225
    %v1229 = vmul.f32 %v1219, %v1228
    %1230 = vrot.lane.b32.xlu0 %v245, 48
    %v1231 = vpop.permute.xlu0 %1230
    %v1234 = vsel %vm254, %v1227, 0
    %1236 = vmatprep.subr.mxu0 0.0
    %1237 = vmatpush1.msra.mxu0 0.0
    %1238 = vmatprep.subr.mxu0 0.0
    %1239 = vmatpush1.msra.mxu0 0.0
    %1240 = vmatprep.subr.mxu0 0.0
    %1241 = vmatpush1.msra.mxu0 0.0
    %1242 = vmatprep.subr.mxu0 0.0
    %1243 = vmatpush1.msra.mxu0 0.0
    %1244 = vmatprep.subr.mxu0 0.0
    %1245 = vmatpush1.msra.mxu0 0.0
    %1246 = vmatprep.subr.mxu0 0.0
    %1247 = vmatpush1.msra.mxu0 0.0
    %1248 = vmatprep.subr.mxu0 0.0
    %1249 = vmatpush1.msra.mxu0 0.0
    %1250 = vmatprep.subr.mxu0 0.0
    %1251 = vmatpush1.msra.mxu0 0.0
    %1252 = vmatprep.subr.mxu0 0.0
    %1253 = vmatpush1.msra.mxu0 0.0
    %1254 = vmatprep.subr.mxu0 0.0
    %1255 = vmatpush1.msra.mxu0 0.0
    %1256 = vmatprep.subr.mxu0 0.0
    %1257 = vmatpush1.msra.mxu0 0.0
    %1258 = vmatprep.subr.mxu0 0.0
    %1259 = vmatpush1.msra.mxu0 0.0
    %1260 = vmatprep.subr.mxu0 0.0
    %1261 = vmatpush1.msra.mxu0 0.0
    %1262 = vmatprep.subr.mxu0 0.0
    %1263 = vmatpush1.msra.mxu0 0.0
    %1264 = vmatprep.subr.mxu0 0.0
    %1265 = vmatpush1.msra.mxu0 0.0
    %1266 = vmatprep.subr.mxu0 0.0
    %1267 = vmatpush1.msra.mxu0 %v1231
    %1268 = vmatprep.subr.mxu0 0.0
    %1269 = vmatpush2.msra.mxu0 0.0
    %1270 = vmatprep.subr.mxu0 0.0
    %1271 = vmatpush2.msra.mxu0 0.0
    %1272 = vmatprep.subr.mxu0 0.0
    %1273 = vmatpush2.msra.mxu0 0.0
    %1274 = vmatprep.subr.mxu0 0.0
    %1275 = vmatpush2.msra.mxu0 0.0
    %1276 = vmatprep.subr.mxu0 0.0
    %1277 = vmatpush2.msra.mxu0 0.0
    %1278 = vmatprep.subr.mxu0 0.0
    %1279 = vmatpush2.msra.mxu0 0.0
    %1280 = vmatprep.subr.mxu0 0.0
    %1281 = vmatpush2.msra.mxu0 0.0
    %1282 = vmatprep.subr.mxu0 0.0
    %1283 = vmatpush2.msra.mxu0 0.0
    %1284 = vmatprep.subr.mxu0 0.0
    %1285 = vmatpush2.msra.mxu0 0.0
    %1286 = vmatprep.subr.mxu0 0.0
    %1287 = vmatpush2.msra.mxu0 0.0
    %1288 = vmatprep.subr.mxu0 0.0
    %1289 = vmatpush2.msra.mxu0 0.0
    %1290 = vmatprep.subr.mxu0 0.0
    %1291 = vmatpush2.msra.mxu0 0.0
    %1292 = vmatprep.subr.mxu0 0.0
    %1293 = vmatpush2.msra.mxu0 0.0
    %1294 = vmatprep.subr.mxu0 0.0
    %1295 = vmatpush2.msra.mxu0 0.0
    %1296 = vmatprep.subr.mxu0 0.0
    %1297 = vmatpush2.msra.mxu0 0.0
    %1298 = vmatprep.subr.mxu0 0.0
    %1299 = vmatpush2.msra.mxu0 0.0
    %1300 = vmatprep.mubr.f32.mxu0 0.0
    %1301 = vmatmul.mubr.f32.gmra.mxu0 %v1234
    %v1302 = vpop.f32.mrf.mxu0
    %v1303 = vadd.f32 0.0, %v1302
    %v1304 = vpop.f32.mrf.mxu0
    %1305 = vdwg.mxu0
    %1306 = vrot.lane.b32.xlu0 %v248, 48
    %v1307 = vpop.permute.xlu0 %1306
    %v1310 = vsel %vm254, %v1229, 0
    %1312 = vmatprep.subr.mxu0 0.0
    %1313 = vmatpush1.msra.mxu0 0.0
    %1314 = vmatprep.subr.mxu0 0.0
    %1315 = vmatpush1.msra.mxu0 0.0
    %1316 = vmatprep.subr.mxu0 0.0
    %1317 = vmatpush1.msra.mxu0 0.0
    %1318 = vmatprep.subr.mxu0 0.0
    %1319 = vmatpush1.msra.mxu0 0.0
    %1320 = vmatprep.subr.mxu0 0.0
    %1321 = vmatpush1.msra.mxu0 0.0
    %1322 = vmatprep.subr.mxu0 0.0
    %1323 = vmatpush1.msra.mxu0 0.0
    %1324 = vmatprep.subr.mxu0 0.0
    %1325 = vmatpush1.msra.mxu0 0.0
    %1326 = vmatprep.subr.mxu0 0.0
    %1327 = vmatpush1.msra.mxu0 0.0
    %1328 = vmatprep.subr.mxu0 0.0
    %1329 = vmatpush1.msra.mxu0 0.0
    %1330 = vmatprep.subr.mxu0 0.0
    %1331 = vmatpush1.msra.mxu0 0.0
    %1332 = vmatprep.subr.mxu0 0.0
    %1333 = vmatpush1.msra.mxu0 0.0
    %1334 = vmatprep.subr.mxu0 0.0
    %1335 = vmatpush1.msra.mxu0 0.0
    %1336 = vmatprep.subr.mxu0 0.0
    %1337 = vmatpush1.msra.mxu0 0.0
    %1338 = vmatprep.subr.mxu0 0.0
    %1339 = vmatpush1.msra.mxu0 0.0
    %1340 = vmatprep.subr.mxu0 0.0
    %1341 = vmatpush1.msra.mxu0 0.0
    %1342 = vmatprep.subr.mxu0 0.0
    %1343 = vmatpush1.msra.mxu0 %v1307
    %1344 = vmatprep.subr.mxu0 0.0
    %1345 = vmatpush2.msra.mxu0 0.0
    %1346 = vmatprep.subr.mxu0 0.0
    %1347 = vmatpush2.msra.mxu0 0.0
    %1348 = vmatprep.subr.mxu0 0.0
    %1349 = vmatpush2.msra.mxu0 0.0
    %1350 = vmatprep.subr.mxu0 0.0
    %1351 = vmatpush2.msra.mxu0 0.0
    %1352 = vmatprep.subr.mxu0 0.0
    %1353 = vmatpush2.msra.mxu0 0.0
    %1354 = vmatprep.subr.mxu0 0.0
    %1355 = vmatpush2.msra.mxu0 0.0
    %1356 = vmatprep.subr.mxu0 0.0
    %1357 = vmatpush2.msra.mxu0 0.0
    %1358 = vmatprep.subr.mxu0 0.0
    %1359 = vmatpush2.msra.mxu0 0.0
    %1360 = vmatprep.subr.mxu0 0.0
    %1361 = vmatpush2.msra.mxu0 0.0
    %1362 = vmatprep.subr.mxu0 0.0
    %1363 = vmatpush2.msra.mxu0 0.0
    %1364 = vmatprep.subr.mxu0 0.0
    %1365 = vmatpush2.msra.mxu0 0.0
    %1366 = vmatprep.subr.mxu0 0.0
    %1367 = vmatpush2.msra.mxu0 0.0
    %1368 = vmatprep.subr.mxu0 0.0
    %1369 = vmatpush2.msra.mxu0 0.0
    %1370 = vmatprep.subr.mxu0 0.0
    %1371 = vmatpush2.msra.mxu0 0.0
    %1372 = vmatprep.subr.mxu0 0.0
    %1373 = vmatpush2.msra.mxu0 0.0
    %1374 = vmatprep.subr.mxu0 0.0
    %1375 = vmatpush2.msra.mxu0 0.0
    %1376 = vmatprep.mubr.f32.mxu0 0.0
    %1377 = vmatmul.mubr.f32.gmra.mxu0 %v1310
    %v1378 = vpop.f32.mrf.mxu0
    %v1379 = vadd.f32 0.0, %v1378
    %v1380 = vpop.f32.mrf.mxu0
    %1381 = vdwg.mxu0
    %v1382 = vpack.c.bf16 %v1379, %v1303
    %v1384 = vsel %vm254, %v1382, 0
    %v1387 = vsel %vm956, %v172, 0
    %1389 = vmatprep.subr.bf16.mxu0 0
    %1390 = vmatpush1.bf16.msra.mxu0 0
    %1391 = vmatprep.subr.bf16.mxu0 0
    %1392 = vmatpush1.bf16.msra.mxu0 0
    %1393 = vmatprep.subr.bf16.mxu0 0
    %1394 = vmatpush1.bf16.msra.mxu0 0
    %1395 = vmatprep.subr.bf16.mxu0 0
    %1396 = vmatpush1.bf16.msra.mxu0 0
    %1397 = vmatprep.subr.bf16.mxu0 0
    %1398 = vmatpush1.bf16.msra.mxu0 0
    %1399 = vmatprep.subr.bf16.mxu0 0
    %1400 = vmatpush1.bf16.msra.mxu0 0
    %1401 = vmatprep.subr.bf16.mxu0 0
    %1402 = vmatpush1.bf16.msra.mxu0 0
    %1403 = vmatprep.subr.bf16.mxu0 0
    %1404 = vmatpush1.bf16.msra.mxu0 %v1387
    %1405 = vmatprep.subr.bf16.mxu0 0
    %1406 = vmatpush2.bf16.msra.mxu0 0
    %1407 = vmatprep.subr.bf16.mxu0 0
    %1408 = vmatpush2.bf16.msra.mxu0 0
    %1409 = vmatprep.subr.bf16.mxu0 0
    %1410 = vmatpush2.bf16.msra.mxu0 0
    %1411 = vmatprep.subr.bf16.mxu0 0
    %1412 = vmatpush2.bf16.msra.mxu0 0
    %1413 = vmatprep.subr.bf16.mxu0 0
    %1414 = vmatpush2.bf16.msra.mxu0 0
    %1415 = vmatprep.subr.bf16.mxu0 0
    %1416 = vmatpush2.bf16.msra.mxu0 0
    %1417 = vmatprep.subr.bf16.mxu0 0
    %1418 = vmatpush2.bf16.msra.mxu0 0
    %1419 = vmatprep.subr.bf16.mxu0 0
    %1420 = vmatpush2.bf16.msra.mxu0 0
    %1421 = vmatprep.mubr.bf16.mxu0 0
    %1422 = vmatmul.mubr.bf16.gmra.mxu0 %v1384
    %v1423 = vpop.f32.mrf.mxu0
    %v1424 = vadd.f32 0.0, %v1423
    %v1425 = vpop.f32.mrf.mxu0
    %v1426 = vpop.f32.mrf.mxu0
    %v1427 = vadd.f32 0.0, %v1426
    %v1428 = vpop.f32.mrf.mxu0
    %1429 = vdwg.mxu0
    %v1430 = vadd.f32 %v1042, %v1424
    %v1431 = vadd.f32 %v1045, %v1427
    %1432 = vrot.lane.b32.xlu0 %v245, 104
    %v1433 = vpop.permute.xlu0 %1432
    %1434 = vrot.lane.b32.xlu0 %v245, 72
    %v1435 = vpop.permute.xlu0 %1434
    %v1436 = vsel %vm254, %v1433, 0
    %v1438 = vsel %vm254, %v1435, 0
    %1440 = vmatprep.subr.mxu0 0.0
    %1441 = vmatpush1.xpose.msra.mxu0 0.0
    %1442 = vmatprep.subr.mxu0 0.0
    %1443 = vmatpush1.xpose.msra.mxu0 0.0
    %1444 = vmatprep.subr.mxu0 0.0
    %1445 = vmatpush1.xpose.msra.mxu0 0.0
    %1446 = vmatprep.subr.mxu0 0.0
    %1447 = vmatpush1.xpose.msra.mxu0 0.0
    %1448 = vmatprep.subr.mxu0 0.0
    %1449 = vmatpush1.xpose.msra.mxu0 0.0
    %1450 = vmatprep.subr.mxu0 0.0
    %1451 = vmatpush1.xpose.msra.mxu0 0.0
    %1452 = vmatprep.subr.mxu0 0.0
    %1453 = vmatpush1.xpose.msra.mxu0 0.0
    %1454 = vmatprep.subr.mxu0 0.0
    %1455 = vmatpush1.xpose.msra.mxu0 0.0
    %1456 = vmatprep.subr.mxu0 0.0
    %1457 = vmatpush1.xpose.msra.mxu0 0.0
    %1458 = vmatprep.subr.mxu0 0.0
    %1459 = vmatpush1.xpose.msra.mxu0 0.0
    %1460 = vmatprep.subr.mxu0 0.0
    %1461 = vmatpush1.xpose.msra.mxu0 0.0
    %1462 = vmatprep.subr.mxu0 0.0
    %1463 = vmatpush1.xpose.msra.mxu0 0.0
    %1464 = vmatprep.subr.mxu0 0.0
    %1465 = vmatpush1.xpose.msra.mxu0 0.0
    %1466 = vmatprep.subr.mxu0 0.0
    %1467 = vmatpush1.xpose.msra.mxu0 0.0
    %1468 = vmatprep.subr.mxu0 0.0
    %1469 = vmatpush1.xpose.msra.mxu0 0.0
    %1470 = vmatprep.subr.mxu0 0.0
    %1471 = vmatpush1.xpose.msra.mxu0 %v1438
    %1472 = vmatprep.subr.mxu0 0.0
    %1473 = vmatpush2.xpose.msra.mxu0 0.0
    %1474 = vmatprep.subr.mxu0 0.0
    %1475 = vmatpush2.xpose.msra.mxu0 0.0
    %1476 = vmatprep.subr.mxu0 0.0
    %1477 = vmatpush2.xpose.msra.mxu0 0.0
    %1478 = vmatprep.subr.mxu0 0.0
    %1479 = vmatpush2.xpose.msra.mxu0 0.0
    %1480 = vmatprep.subr.mxu0 0.0
    %1481 = vmatpush2.xpose.msra.mxu0 0.0
    %1482 = vmatprep.subr.mxu0 0.0
    %1483 = vmatpush2.xpose.msra.mxu0 0.0
    %1484 = vmatprep.subr.mxu0 0.0
    %1485 = vmatpush2.xpose.msra.mxu0 0.0
    %1486 = vmatprep.subr.mxu0 0.0
    %1487 = vmatpush2.xpose.msra.mxu0 0.0
    %1488 = vmatprep.subr.mxu0 0.0
    %1489 = vmatpush2.xpose.msra.mxu0 0.0
    %1490 = vmatprep.subr.mxu0 0.0
    %1491 = vmatpush2.xpose.msra.mxu0 0.0
    %1492 = vmatprep.subr.mxu0 0.0
    %1493 = vmatpush2.xpose.msra.mxu0 0.0
    %1494 = vmatprep.subr.mxu0 0.0
    %1495 = vmatpush2.xpose.msra.mxu0 0.0
    %1496 = vmatprep.subr.mxu0 0.0
    %1497 = vmatpush2.xpose.msra.mxu0 0.0
    %1498 = vmatprep.subr.mxu0 0.0
    %1499 = vmatpush2.xpose.msra.mxu0 0.0
    %1500 = vmatprep.subr.mxu0 0.0
    %1501 = vmatpush2.xpose.msra.mxu0 0.0
    %1502 = vmatprep.subr.mxu0 0.0
    %1503 = vmatpush2.xpose.msra.mxu0 0.0
    %1504 = vmatprep.mubr.f32.mxu0 0.0
    %1505 = vmatmul.mubr.f32.gmra.mxu0 %v1436
    %v1506 = vpop.f32.mrf.mxu0
    %v1507 = vadd.f32 0.0, %v1506
    %v1508 = vpop.f32.mrf.mxu0
    %1509 = vdwg.mxu0
    %1510 = vrot.lane.b32.xlu0 %v248, 104
    %v1511 = vpop.permute.xlu0 %1510
    %1512 = vrot.lane.b32.xlu0 %v248, 72
    %v1513 = vpop.permute.xlu0 %1512
    %v1514 = vsel %vm254, %v1511, 0
    %v1516 = vsel %vm254, %v1513, 0
    %1518 = vmatprep.subr.mxu0 0.0
    %1519 = vmatpush1.xpose.msra.mxu0 0.0
    %1520 = vmatprep.subr.mxu0 0.0
    %1521 = vmatpush1.xpose.msra.mxu0 0.0
    %1522 = vmatprep.subr.mxu0 0.0
    %1523 = vmatpush1.xpose.msra.mxu0 0.0
    %1524 = vmatprep.subr.mxu0 0.0
    %1525 = vmatpush1.xpose.msra.mxu0 0.0
    %1526 = vmatprep.subr.mxu0 0.0
    %1527 = vmatpush1.xpose.msra.mxu0 0.0
    %1528 = vmatprep.subr.mxu0 0.0
    %1529 = vmatpush1.xpose.msra.mxu0 0.0
    %1530 = vmatprep.subr.mxu0 0.0
    %1531 = vmatpush1.xpose.msra.mxu0 0.0
    %1532 = vmatprep.subr.mxu0 0.0
    %1533 = vmatpush1.xpose.msra.mxu0 0.0
    %1534 = vmatprep.subr.mxu0 0.0
    %1535 = vmatpush1.xpose.msra.mxu0 0.0
    %1536 = vmatprep.subr.mxu0 0.0
    %1537 = vmatpush1.xpose.msra.mxu0 0.0
    %1538 = vmatprep.subr.mxu0 0.0
    %1539 = vmatpush1.xpose.msra.mxu0 0.0
    %1540 = vmatprep.subr.mxu0 0.0
    %1541 = vmatpush1.xpose.msra.mxu0 0.0
    %1542 = vmatprep.subr.mxu0 0.0
    %1543 = vmatpush1.xpose.msra.mxu0 0.0
    %1544 = vmatprep.subr.mxu0 0.0
    %1545 = vmatpush1.xpose.msra.mxu0 0.0
    %1546 = vmatprep.subr.mxu0 0.0
    %1547 = vmatpush1.xpose.msra.mxu0 0.0
    %1548 = vmatprep.subr.mxu0 0.0
    %1549 = vmatpush1.xpose.msra.mxu0 %v1516
    %1550 = vmatprep.subr.mxu0 0.0
    %1551 = vmatpush2.xpose.msra.mxu0 0.0
    %1552 = vmatprep.subr.mxu0 0.0
    %1553 = vmatpush2.xpose.msra.mxu0 0.0
    %1554 = vmatprep.subr.mxu0 0.0
    %1555 = vmatpush2.xpose.msra.mxu0 0.0
    %1556 = vmatprep.subr.mxu0 0.0
    %1557 = vmatpush2.xpose.msra.mxu0 0.0
    %1558 = vmatprep.subr.mxu0 0.0
    %1559 = vmatpush2.xpose.msra.mxu0 0.0
    %1560 = vmatprep.subr.mxu0 0.0
    %1561 = vmatpush2.xpose.msra.mxu0 0.0
    %1562 = vmatprep.subr.mxu0 0.0
    %1563 = vmatpush2.xpose.msra.mxu0 0.0
    %1564 = vmatprep.subr.mxu0 0.0
    %1565 = vmatpush2.xpose.msra.mxu0 0.0
    %1566 = vmatprep.subr.mxu0 0.0
    %1567 = vmatpush2.xpose.msra.mxu0 0.0
    %1568 = vmatprep.subr.mxu0 0.0
    %1569 = vmatpush2.xpose.msra.mxu0 0.0
    %1570 = vmatprep.subr.mxu0 0.0
    %1571 = vmatpush2.xpose.msra.mxu0 0.0
    %1572 = vmatprep.subr.mxu0 0.0
    %1573 = vmatpush2.xpose.msra.mxu0 0.0
    %1574 = vmatprep.subr.mxu0 0.0
    %1575 = vmatpush2.xpose.msra.mxu0 0.0
    %1576 = vmatprep.subr.mxu0 0.0
    %1577 = vmatpush2.xpose.msra.mxu0 0.0
    %1578 = vmatprep.subr.mxu0 0.0
    %1579 = vmatpush2.xpose.msra.mxu0 0.0
    %1580 = vmatprep.subr.mxu0 0.0
    %1581 = vmatpush2.xpose.msra.mxu0 0.0
    %1582 = vmatprep.mubr.f32.mxu0 0.0
    %1583 = vmatmul.mubr.f32.gmra.mxu0 %v1514
    %v1584 = vpop.f32.mrf.mxu0
    %v1585 = vadd.f32 0.0, %v1584
    %v1586 = vpop.f32.mrf.mxu0
    %1587 = vdwg.mxu0
    %v1588 = vmul.f32 %v1507, 0.35355338
    %v1589 = vmul.f32 %v1585, 0.35355338
    %v1590 = vadd.f32 %v1588, %v434
    %v1591 = vadd.f32 %v1589, %v438
    %v1592 = vsel %vm254, %v1590, -inf
    %1593 = vmax.xlane.f32.xlu0 %v1592
    %v1594 = vpop.xlane.xlu0 %1593
    %v1595 = vsel %vm254, %v1591, -inf
    %1596 = vmax.xlane.f32.xlu0 %v1595
    %v1597 = vpop.xlane.xlu0 %1596
    %v1598 = vsub.f32 %v1590, %v1594
    %v1599 = vsub.f32 %v1591, %v1597
    %v1600 = vmul.f32 %v1598, 1.442695
    %v1601 = vpow.pop %v1600
    %v1602 = vmul.f32 %v1599, 1.442695
    %v1603 = vpow.pop %v1602
    %v1604 = vsel %vm254, %v1601, 0.0
    %1605 = vadd.xlane.f32.xlu0 %v1604
    %v1606 = vpop.xlane.xlu0 %1605
    %v1607 = vsel %vm254, %v1603, 0.0
    %1608 = vadd.xlane.f32.xlu0 %v1607
    %v1609 = vpop.xlane.xlu0 %1608
    %v1610 = vrcp.pop %v1606
    %v1611 = vmul.f32 %v1601, %v1610
    %v1612 = vrcp.pop %v1609
    %v1613 = vmul.f32 %v1603, %v1612
    %1614 = vrot.lane.b32.xlu0 %v245, 40
    %v1615 = vpop.permute.xlu0 %1614
    %v1618 = vsel %vm254, %v1611, 0
    %1620 = vmatprep.subr.mxu0 0.0
    %1621 = vmatpush1.msra.mxu0 0.0
    %1622 = vmatprep.subr.mxu0 0.0
    %1623 = vmatpush1.msra.mxu0 0.0
    %1624 = vmatprep.subr.mxu0 0.0
    %1625 = vmatpush1.msra.mxu0 0.0
    %1626 = vmatprep.subr.mxu0 0.0
    %1627 = vmatpush1.msra.mxu0 0.0
    %1628 = vmatprep.subr.mxu0 0.0
    %1629 = vmatpush1.msra.mxu0 0.0
    %1630 = vmatprep.subr.mxu0 0.0
    %1631 = vmatpush1.msra.mxu0 0.0
    %1632 = vmatprep.subr.mxu0 0.0
    %1633 = vmatpush1.msra.mxu0 0.0
    %1634 = vmatprep.subr.mxu0 0.0
    %1635 = vmatpush1.msra.mxu0 0.0
    %1636 = vmatprep.subr.mxu0 0.0
    %1637 = vmatpush1.msra.mxu0 0.0
    %1638 = vmatprep.subr.mxu0 0.0
    %1639 = vmatpush1.msra.mxu0 0.0
    %1640 = vmatprep.subr.mxu0 0.0
    %1641 = vmatpush1.msra.mxu0 0.0
    %1642 = vmatprep.subr.mxu0 0.0
    %1643 = vmatpush1.msra.mxu0 0.0
    %1644 = vmatprep.subr.mxu0 0.0
    %1645 = vmatpush1.msra.mxu0 0.0
    %1646 = vmatprep.subr.mxu0 0.0
    %1647 = vmatpush1.msra.mxu0 0.0
    %1648 = vmatprep.subr.mxu0 0.0
    %1649 = vmatpush1.msra.mxu0 0.0
    %1650 = vmatprep.subr.mxu0 0.0
    %1651 = vmatpush1.msra.mxu0 %v1615
    %1652 = vmatprep.subr.mxu0 0.0
    %1653 = vmatpush2.msra.mxu0 0.0
    %1654 = vmatprep.subr.mxu0 0.0
    %1655 = vmatpush2.msra.mxu0 0.0
    %1656 = vmatprep.subr.mxu0 0.0
    %1657 = vmatpush2.msra.mxu0 0.0
    %1658 = vmatprep.subr.mxu0 0.0
    %1659 = vmatpush2.msra.mxu0 0.0
    %1660 = vmatprep.subr.mxu0 0.0
    %1661 = vmatpush2.msra.mxu0 0.0
    %1662 = vmatprep.subr.mxu0 0.0
    %1663 = vmatpush2.msra.mxu0 0.0
    %1664 = vmatprep.subr.mxu0 0.0
    %1665 = vmatpush2.msra.mxu0 0.0
    %1666 = vmatprep.subr.mxu0 0.0
    %1667 = vmatpush2.msra.mxu0 0.0
    %1668 = vmatprep.subr.mxu0 0.0
    %1669 = vmatpush2.msra.mxu0 0.0
    %1670 = vmatprep.subr.mxu0 0.0
    %1671 = vmatpush2.msra.mxu0 0.0
    %1672 = vmatprep.subr.mxu0 0.0
    %1673 = vmatpush2.msra.mxu0 0.0
    %1674 = vmatprep.subr.mxu0 0.0
    %1675 = vmatpush2.msra.mxu0 0.0
    %1676 = vmatprep.subr.mxu0 0.0
    %1677 = vmatpush2.msra.mxu0 0.0
    %1678 = vmatprep.subr.mxu0 0.0
    %1679 = vmatpush2.msra.mxu0 0.0
    %1680 = vmatprep.subr.mxu0 0.0
    %1681 = vmatpush2.msra.mxu0 0.0
    %1682 = vmatprep.subr.mxu0 0.0
    %1683 = vmatpush2.msra.mxu0 0.0
    %1684 = vmatprep.mubr.f32.mxu0 0.0
    %1685 = vmatmul.mubr.f32.gmra.mxu0 %v1618
    %v1686 = vpop.f32.mrf.mxu0
    %v1687 = vadd.f32 0.0, %v1686
    %v1688 = vpop.f32.mrf.mxu0
    %1689 = vdwg.mxu0
    %1690 = vrot.lane.b32.xlu0 %v248, 40
    %v1691 = vpop.permute.xlu0 %1690
    %v1694 = vsel %vm254, %v1613, 0
    %1696 = vmatprep.subr.mxu0 0.0
    %1697 = vmatpush1.msra.mxu0 0.0
    %1698 = vmatprep.subr.mxu0 0.0
    %1699 = vmatpush1.msra.mxu0 0.0
    %1700 = vmatprep.subr.mxu0 0.0
    %1701 = vmatpush1.msra.mxu0 0.0
    %1702 = vmatprep.subr.mxu0 0.0
    %1703 = vmatpush1.msra.mxu0 0.0
    %1704 = vmatprep.subr.mxu0 0.0
    %1705 = vmatpush1.msra.mxu0 0.0
    %1706 = vmatprep.subr.mxu0 0.0
    %1707 = vmatpush1.msra.mxu0 0.0
    %1708 = vmatprep.subr.mxu0 0.0
    %1709 = vmatpush1.msra.mxu0 0.0
    %1710 = vmatprep.subr.mxu0 0.0
    %1711 = vmatpush1.msra.mxu0 0.0
    %1712 = vmatprep.subr.mxu0 0.0
    %1713 = vmatpush1.msra.mxu0 0.0
    %1714 = vmatprep.subr.mxu0 0.0
    %1715 = vmatpush1.msra.mxu0 0.0
    %1716 = vmatprep.subr.mxu0 0.0
    %1717 = vmatpush1.msra.mxu0 0.0
    %1718 = vmatprep.subr.mxu0 0.0
    %1719 = vmatpush1.msra.mxu0 0.0
    %1720 = vmatprep.subr.mxu0 0.0
    %1721 = vmatpush1.msra.mxu0 0.0
    %1722 = vmatprep.subr.mxu0 0.0
    %1723 = vmatpush1.msra.mxu0 0.0
    %1724 = vmatprep.subr.mxu0 0.0
    %1725 = vmatpush1.msra.mxu0 0.0
    %1726 = vmatprep.subr.mxu0 0.0
    %1727 = vmatpush1.msra.mxu0 %v1691
    %1728 = vmatprep.subr.mxu0 0.0
    %1729 = vmatpush2.msra.mxu0 0.0
    %1730 = vmatprep.subr.mxu0 0.0
    %1731 = vmatpush2.msra.mxu0 0.0
    %1732 = vmatprep.subr.mxu0 0.0
    %1733 = vmatpush2.msra.mxu0 0.0
    %1734 = vmatprep.subr.mxu0 0.0
    %1735 = vmatpush2.msra.mxu0 0.0
    %1736 = vmatprep.subr.mxu0 0.0
    %1737 = vmatpush2.msra.mxu0 0.0
    %1738 = vmatprep.subr.mxu0 0.0
    %1739 = vmatpush2.msra.mxu0 0.0
    %1740 = vmatprep.subr.mxu0 0.0
    %1741 = vmatpush2.msra.mxu0 0.0
    %1742 = vmatprep.subr.mxu0 0.0
    %1743 = vmatpush2.msra.mxu0 0.0
    %1744 = vmatprep.subr.mxu0 0.0
    %1745 = vmatpush2.msra.mxu0 0.0
    %1746 = vmatprep.subr.mxu0 0.0
    %1747 = vmatpush2.msra.mxu0 0.0
    %1748 = vmatprep.subr.mxu0 0.0
    %1749 = vmatpush2.msra.mxu0 0.0
    %1750 = vmatprep.subr.mxu0 0.0
    %1751 = vmatpush2.msra.mxu0 0.0
    %1752 = vmatprep.subr.mxu0 0.0
    %1753 = vmatpush2.msra.mxu0 0.0
    %1754 = vmatprep.subr.mxu0 0.0
    %1755 = vmatpush2.msra.mxu0 0.0
    %1756 = vmatprep.subr.mxu0 0.0
    %1757 = vmatpush2.msra.mxu0 0.0
    %1758 = vmatprep.subr.mxu0 0.0
    %1759 = vmatpush2.msra.mxu0 0.0
    %1760 = vmatprep.mubr.f32.mxu0 0.0
    %1761 = vmatmul.mubr.f32.gmra.mxu0 %v1694
    %v1762 = vpop.f32.mrf.mxu0
    %v1763 = vadd.f32 0.0, %v1762
    %v1764 = vpop.f32.mrf.mxu0
    %1765 = vdwg.mxu0
    %v1766 = vpack.c.bf16 %v1763, %v1687
    %v1768 = vsel %vm254, %v1766, 0
    %v1771 = vsel %vm956, %v173, 0
    %1773 = vmatprep.subr.bf16.mxu0 0
    %1774 = vmatpush1.bf16.msra.mxu0 0
    %1775 = vmatprep.subr.bf16.mxu0 0
    %1776 = vmatpush1.bf16.msra.mxu0 0
    %1777 = vmatprep.subr.bf16.mxu0 0
    %1778 = vmatpush1.bf16.msra.mxu0 0
    %1779 = vmatprep.subr.bf16.mxu0 0
    %1780 = vmatpush1.bf16.msra.mxu0 0
    %1781 = vmatprep.subr.bf16.mxu0 0
    %1782 = vmatpush1.bf16.msra.mxu0 0
    %1783 = vmatprep.subr.bf16.mxu0 0
    %1784 = vmatpush1.bf16.msra.mxu0 0
    %1785 = vmatprep.subr.bf16.mxu0 0
    %1786 = vmatpush1.bf16.msra.mxu0 0
    %1787 = vmatprep.subr.bf16.mxu0 0
    %1788 = vmatpush1.bf16.msra.mxu0 %v1771
    %1789 = vmatprep.subr.bf16.mxu0 0
    %1790 = vmatpush2.bf16.msra.mxu0 0
    %1791 = vmatprep.subr.bf16.mxu0 0
    %1792 = vmatpush2.bf16.msra.mxu0 0
    %1793 = vmatprep.subr.bf16.mxu0 0
    %1794 = vmatpush2.bf16.msra.mxu0 0
    %1795 = vmatprep.subr.bf16.mxu0 0
    %1796 = vmatpush2.bf16.msra.mxu0 0
    %1797 = vmatprep.subr.bf16.mxu0 0
    %1798 = vmatpush2.bf16.msra.mxu0 0
    %1799 = vmatprep.subr.bf16.mxu0 0
    %1800 = vmatpush2.bf16.msra.mxu0 0
    %1801 = vmatprep.subr.bf16.mxu0 0
    %1802 = vmatpush2.bf16.msra.mxu0 0
    %1803 = vmatprep.subr.bf16.mxu0 0
    %1804 = vmatpush2.bf16.msra.mxu0 0
    %1805 = vmatprep.mubr.bf16.mxu0 0
    %1806 = vmatmul.mubr.bf16.gmra.mxu0 %v1768
    %v1807 = vpop.f32.mrf.mxu0
    %v1808 = vadd.f32 0.0, %v1807
    %v1809 = vpop.f32.mrf.mxu0
    %v1810 = vpop.f32.mrf.mxu0
    %v1811 = vadd.f32 0.0, %v1810
    %v1812 = vpop.f32.mrf.mxu0
    %1813 = vdwg.mxu0
    %v1814 = vadd.f32 %v1430, %v1808
    %v1815 = vadd.f32 %v1431, %v1811
    %v1816 = vlaneseq
    %v1817 = vshrl.u32 %v1816, 7
    %v1818 = vsub.s32 0, %v1817
    %v1819 = vrot.slane %v187, %v1818
    %v1820 = vadd.f32 %v1814, %v1819
    %v1821 = vadd.f32 %v1815, %v1819
    %v1822 = vadd.f32 %v1820, %v162
    %v1823 = vadd.f32 %v1821, %v163
    %v1824 = vsel %vm124, %v1822, 0.0
    %1825 = vadd.xlane.f32.xlu0 %v1824
    %v1826 = vpop.xlane.xlu0 %1825
    %v1827 = vsel %vm124, %v1823, 0.0
    %1828 = vadd.xlane.f32.xlu0 %v1827
    %v1829 = vpop.xlane.xlu0 %1828
    %v1830 = vmul.f32 %v1826, %v131
    %v1831 = vmul.f32 %v1829, %v131
    %v1832 = vsub.f32 %v1822, %v1830
    %v1833 = vsub.f32 %v1823, %v1831
    %v1834 = vmul.f32 %v1832, %v1832
    %v1835 = vmul.f32 %v1833, %v1833
    %v1836 = vsel %vm124, %v1834, 0.0
    %1837 = vadd.xlane.f32.xlu0 %v1836
    %v1838 = vpop.xlane.xlu0 %1837
    %v1839 = vsel %vm124, %v1835, 0.0
    %1840 = vadd.xlane.f32.xlu0 %v1839
    %v1841 = vpop.xlane.xlu0 %1840
    %v1842 = vmul.f32 %v1838, %v131
    %v1843 = vmul.f32 %v1841, %v131
    %v1844 = vadd.f32 %v1842, 1e-12
    %v1845 = vadd.f32 %v1843, 1e-12
    %v1846 = vrsqrt.pop %v1844
    %v1847 = vrsqrt.pop %v1845
    %v1848 = vmul.f32 %v1832, %v1846
    %v1849 = vmul.f32 %v1833, %v1847
    %v1850 = vlaneseq
    %v1851 = vshrl.u32 %v1850, 7
    %v1852 = vsub.s32 1, %v1851
    %v1853 = vrot.slane %v187, %v1852
    %v1854 = vmul.f32 %v1848, %v1853
    %v1855 = vmul.f32 %v1849, %v1853
    %v1856 = vlaneseq
    %v1857 = vshrl.u32 %v1856, 7
    %v1858 = vsub.s32 2, %v1857
    %v1859 = vrot.slane %v187, %v1858
    %v1860 = vadd.f32 %v1854, %v1859
    %v1861 = vadd.f32 %v1855, %v1859
    %v1862 = vpack.c.bf16 %v1861, %v1860
    %v1864 = vlaneseq
    %v1865 = vshrl.u32 %v1864, 7
    %v1866 = vsub.s32 0, %v1865
    %v1867 = vrot.slane %v178, %v1866
    %v1873 = vunpack.c.l.b16 %v174
    %v1874 = vunpack.c.l.b16 %v175
    %v1875 = vunpack.c.l.b16 %v176
    %v1876 = vunpack.c.l.b16 %v177
    %v1877 = vpack.c.b16 %v1874, %v1873
    %v1878 = vpack.c.b16 %v1876, %v1875
    %v1882 = vsel %vm124, %v1862, 0
    %1884 = vmatprep.subr.bf16.mxu0 0
    %1885 = vmatpush1.bf16.msra.mxu0 0
    %1886 = vmatprep.subr.bf16.mxu0 0
    %1887 = vmatpush1.bf16.msra.mxu0 0
    %1888 = vmatprep.subr.bf16.mxu0 0
    %1889 = vmatpush1.bf16.msra.mxu0 0
    %1890 = vmatprep.subr.bf16.mxu0 0
    %1891 = vmatpush1.bf16.msra.mxu0 0
    %1892 = vmatprep.subr.bf16.mxu0 0
    %1893 = vmatpush1.bf16.msra.mxu0 0
    %1894 = vmatprep.subr.bf16.mxu0 0
    %1895 = vmatpush1.bf16.msra.mxu0 0
    %1896 = vmatprep.subr.bf16.mxu0 0
    %1897 = vmatpush1.bf16.msra.mxu0 %v1878
    %1898 = vmatprep.subr.bf16.mxu0 0
    %1899 = vmatpush1.bf16.msra.mxu0 %v1877
    %1900 = vmatprep.subr.bf16.mxu0 0
    %1901 = vmatpush2.bf16.msra.mxu0 0
    %1902 = vmatprep.subr.bf16.mxu0 0
    %1903 = vmatpush2.bf16.msra.mxu0 0
    %1904 = vmatprep.subr.bf16.mxu0 0
    %1905 = vmatpush2.bf16.msra.mxu0 0
    %1906 = vmatprep.subr.bf16.mxu0 0
    %1907 = vmatpush2.bf16.msra.mxu0 0
    %1908 = vmatprep.subr.bf16.mxu0 0
    %1909 = vmatpush2.bf16.msra.mxu0 0
    %1910 = vmatprep.subr.bf16.mxu0 0
    %1911 = vmatpush2.bf16.msra.mxu0 0
    %1912 = vmatprep.subr.bf16.mxu0 0
    %1913 = vmatpush2.bf16.msra.mxu0 0
    %1914 = vmatprep.subr.bf16.mxu0 0
    %1915 = vmatpush2.bf16.msra.mxu0 0
    %1916 = vmatprep.mubr.bf16.mxu0 0
    %1917 = vmatmul.mubr.bf16.gmra.mxu0 %v1882
    %v1918 = vpop.f32.mrf.mxu0
    %v1919 = vadd.f32 %v1867, %v1918
    %v1920 = vpop.f32.mrf.mxu0
    %v1921 = vpop.f32.mrf.mxu0
    %v1922 = vadd.f32 %v1867, %v1921
    %v1923 = vpop.f32.mrf.mxu0
    %1924 = vdwg.mxu0
    %v1925 = vmul.f32 %v1919, %v1919
    %v1926 = vmul.f32 %v1922, %v1922
    %v1927 = vmul.f32 %v1919, %v1925
    %v1928 = vmul.f32 %v1922, %v1926
    %v1929 = vmul.f32 %v1927, 0.044715
    %v1930 = vmul.f32 %v1928, 0.044715
    %v1931 = vadd.f32 %v1919, %v1929
    %v1932 = vadd.f32 %v1922, %v1930
    %v1933 = vmul.f32 %v1931, 0.7978846
    %v1934 = vmul.f32 %v1932, 0.7978846
    %v1935 = vtanh.pop %v1933
    %v1936 = vtanh.pop %v1934
    %v1937 = vadd.f32 %v1935, 1.0
    %v1938 = vadd.f32 %v1936, 1.0
    %v1939 = vmul.f32 %v1937, 0.5
    %v1940 = vmul.f32 %v1938, 0.5
    %v1941 = vmul.f32 %v1919, %v1939
    %v1942 = vmul.f32 %v1922, %v1940
    %v1943 = vpack.c.bf16 %v1942, %v1941
    %v1944 = vlaneseq
    %v1945 = vshrl.u32 %v1944, 7
    %v1946 = vsub.s32 3, %v1945
    %v1947 = vrot.slane %v187, %v1946
    %v1956 = vunpack.c.l.b16 %v179
    %v1957 = vunpack.c.l.b16 %v180
    %v1958 = vunpack.c.l.b16 %v181
    %v1959 = vunpack.c.l.b16 %v182
    %v1960 = vunpack.c.l.b16 %v183
    %v1961 = vunpack.c.l.b16 %v184
    %v1962 = vunpack.c.l.b16 %v185
    %v1963 = vunpack.c.l.b16 %v186
    %v1964 = vpack.c.b16 %v1957, %v1956
    %v1965 = vpack.c.b16 %v1959, %v1958
    %v1966 = vpack.c.b16 %v1961, %v1960
    %v1967 = vpack.c.b16 %v1963, %v1962
    %vm1972 = vcmask 523264
    %v1974 = vsel %vm1972, %v1943, 0
    %1976 = vmatprep.subr.bf16.mxu0 0
    %1977 = vmatpush1.bf16.msra.mxu0 0
    %1978 = vmatprep.subr.bf16.mxu0 0
    %1979 = vmatpush1.bf16.msra.mxu0 0
    %1980 = vmatprep.subr.bf16.mxu0 0
    %1981 = vmatpush1.bf16.msra.mxu0 0
    %1982 = vmatprep.subr.bf16.mxu0 0
    %1983 = vmatpush1.bf16.msra.mxu0 0
    %1984 = vmatprep.subr.bf16.mxu0 0
    %1985 = vmatpush1.bf16.msra.mxu0 %v1967
    %1986 = vmatprep.subr.bf16.mxu0 0
    %1987 = vmatpush1.bf16.msra.mxu0 %v1966
    %1988 = vmatprep.subr.bf16.mxu0 0
    %1989 = vmatpush1.bf16.msra.mxu0 %v1965
    %1990 = vmatprep.subr.bf16.mxu0 0
    %1991 = vmatpush1.bf16.msra.mxu0 %v1964
    %1992 = vmatprep.subr.bf16.mxu0 0
    %1993 = vmatpush2.bf16.msra.mxu0 0
    %1994 = vmatprep.subr.bf16.mxu0 0
    %1995 = vmatpush2.bf16.msra.mxu0 0
    %1996 = vmatprep.subr.bf16.mxu0 0
    %1997 = vmatpush2.bf16.msra.mxu0 0
    %1998 = vmatprep.subr.bf16.mxu0 0
    %1999 = vmatpush2.bf16.msra.mxu0 0
    %2000 = vmatprep.subr.bf16.mxu0 0
    %2001 = vmatpush2.bf16.msra.mxu0 0
    %2002 = vmatprep.subr.bf16.mxu0 0
    %2003 = vmatpush2.bf16.msra.mxu0 0
    %2004 = vmatprep.subr.bf16.mxu0 0
    %2005 = vmatpush2.bf16.msra.mxu0 0
    %2006 = vmatprep.subr.bf16.mxu0 0
    %2007 = vmatpush2.bf16.msra.mxu0 0
    %2008 = vmatprep.mubr.bf16.mxu0 0
    %2009 = vmatmul.mubr.bf16.gmra.mxu0 %v1974
    %v2010 = vpop.f32.mrf.mxu0
    %v2011 = vadd.f32 %v1947, %v2010
    %v2012 = vpop.f32.mrf.mxu0
    %v2013 = vpop.f32.mrf.mxu0
    %v2014 = vadd.f32 %v1947, %v2013
    %v2015 = vpop.f32.mrf.mxu0
    %2016 = vdwg.mxu0
    %v2017 = vadd.f32 %v2011, %v1860
    %v2018 = vadd.f32 %v2014, %v1861
    %v2019 = vsel %vm124, %v2017, 0.0
    %2020 = vadd.xlane.f32.xlu0 %v2019
    %v2021 = vpop.xlane.xlu0 %2020
    %v2022 = vsel %vm124, %v2018, 0.0
    %2023 = vadd.xlane.f32.xlu0 %v2022
    %v2024 = vpop.xlane.xlu0 %2023
    %v2025 = vmul.f32 %v2021, %v131
    %v2026 = vmul.f32 %v2024, %v131
    %v2027 = vsub.f32 %v2017, %v2025
    %v2028 = vsub.f32 %v2018, %v2026
    %v2029 = vmul.f32 %v2027, %v2027
    %v2030 = vmul.f32 %v2028, %v2028
    %v2031 = vsel %vm124, %v2029, 0.0
    %2032 = vadd.xlane.f32.xlu0 %v2031
    %v2033 = vpop.xlane.xlu0 %2032
    %v2034 = vsel %vm124, %v2030, 0.0
    %2035 = vadd.xlane.f32.xlu0 %v2034
    %v2036 = vpop.xlane.xlu0 %2035
    %v2037 = vmul.f32 %v2033, %v131
    %v2038 = vmul.f32 %v2036, %v131
    %v2039 = vadd.f32 %v2037, 1e-12
    %v2040 = vadd.f32 %v2038, 1e-12
    %v2041 = vrsqrt.pop %v2039
    %v2042 = vrsqrt.pop %v2040
    %v2043 = vmul.f32 %v2027, %v2041
    %v2044 = vmul.f32 %v2028, %v2042
    %v2045 = vlaneseq
    %v2046 = vshrl.u32 %v2045, 7
    %v2047 = vsub.s32 4, %v2046
    %v2048 = vrot.slane %v187, %v2047
    %v2049 = vmul.f32 %v2043, %v2048
    %v2050 = vmul.f32 %v2044, %v2048
    %v2051 = vlaneseq
    %v2052 = vshrl.u32 %v2051, 7
    %v2053 = vsub.s32 5, %v2052
    %v2054 = vrot.slane %v187, %v2053
    %v2055 = vadd.f32 %v2049, %v2054
    %v2056 = vadd.f32 %v2050, %v2054
    %s2057 = scalar_lea.vmem %s3, 16
    %v2058 = vld [vmem:[%s2057] sm:$0xf]
    %v2059 = vld [vmem:[%s2057 + $0x4] sm:$0xf]
    %v2060 = vld [vmem:[%s2057 + $0x8] sm:$0xf]
    %v2061 = vld [vmem:[%s2057 + $0xc] sm:$0xf]
    %s2062 = scalar_lea.vmem [#allocation8], 1
    %v2063 = vld [vmem:[%s2062] sm:$0x1]
    %s2064 = scalar_lea.vmem %s5, 16
    %v2065 = vld [vmem:[%s2064] sm:$0xf]
    %v2066 = vld [vmem:[%s2064 + $0x4] sm:$0xf]
    %v2067 = vld [vmem:[%s2064 + $0x8] sm:$0xf]
    %v2068 = vld [vmem:[%s2064 + $0xc] sm:$0xf]
    %s2069 = scalar_lea.vmem %s6, 16
    %v2070 = vld [vmem:[%s2069] sm:$0xf]
    %v2071 = vld [vmem:[%s2069 + $0x4] sm:$0xf]
    %v2072 = vld [vmem:[%s2069 + $0x8] sm:$0xf]
    %v2073 = vld [vmem:[%s2069 + $0xc] sm:$0xf]
    %s2074 = scalar_lea.vmem [#allocation10], 1
    %v2075 = vld [vmem:[%s2074] sm:$0x1]
    %s2076 = scalar_lea.vmem %s8, 32
    %v2077 = vld [vmem:[%s2076] sm:$0xf]
    %v2078 = vld [vmem:[%s2076 + $0x4] sm:$0xf]
    %v2079 = vld [vmem:[%s2076 + $0x8] sm:$0xf]
    %v2080 = vld [vmem:[%s2076 + $0xc] sm:$0xf]
    %v2081 = vld [vmem:[%s2076 + $0x10] sm:$0xf]
    %v2082 = vld [vmem:[%s2076 + $0x14] sm:$0xf]
    %v2083 = vld [vmem:[%s2076 + $0x18] sm:$0xf]
    %v2084 = vld [vmem:[%s2076 + $0x1c] sm:$0xf]
    %s2085 = scalar_lea.vmem %s9, 8
    %v2086 = vld [vmem:[%s2085] sm:$0x3f]
    %v2087 = vpack.c.bf16 %v2056, %v2055
    %v2089 = vlaneseq
    %v2090 = vshrl.u32 %v2089, 7
    %v2091 = vsub.s32 0, %v2090
    %v2092 = vrot.slane %v2063, %v2091
    %v2098 = vunpack.c.l.b16 %v2058
    %v2099 = vunpack.c.l.b16 %v2059
    %v2100 = vunpack.c.l.b16 %v2060
    %v2101 = vunpack.c.l.b16 %v2061
    %v2102 = vpack.c.b16 %v2099, %v2098
    %v2103 = vpack.c.b16 %v2101, %v2100
    %v2107 = vsel %vm124, %v2087, 0
    %2109 = vmatprep.subr.bf16.mxu0 0
    %2110 = vmatpush1.bf16.msra.mxu0 0
    %2111 = vmatprep.subr.bf16.mxu0 0
    %2112 = vmatpush1.bf16.msra.mxu0 0
    %2113 = vmatprep.subr.bf16.mxu0 0
    %2114 = vmatpush1.bf16.msra.mxu0 0
    %2115 = vmatprep.subr.bf16.mxu0 0
    %2116 = vmatpush1.bf16.msra.mxu0 0
    %2117 = vmatprep.subr.bf16.mxu0 0
    %2118 = vmatpush1.bf16.msra.mxu0 0
    %2119 = vmatprep.subr.bf16.mxu0 0
    %2120 = vmatpush1.bf16.msra.mxu0 0
    %2121 = vmatprep.subr.bf16.mxu0 0
    %2122 = vmatpush1.bf16.msra.mxu0 %v2103
    %2123 = vmatprep.subr.bf16.mxu0 0
    %2124 = vmatpush1.bf16.msra.mxu0 %v2102
    %2125 = vmatprep.subr.bf16.mxu0 0
    %2126 = vmatpush2.bf16.msra.mxu0 0
    %2127 = vmatprep.subr.bf16.mxu0 0
    %2128 = vmatpush2.bf16.msra.mxu0 0
    %2129 = vmatprep.subr.bf16.mxu0 0
    %2130 = vmatpush2.bf16.msra.mxu0 0
    %2131 = vmatprep.subr.bf16.mxu0 0
    %2132 = vmatpush2.bf16.msra.mxu0 0
    %2133 = vmatprep.subr.bf16.mxu0 0
    %2134 = vmatpush2.bf16.msra.mxu0 0
    %2135 = vmatprep.subr.bf16.mxu0 0
    %2136 = vmatpush2.bf16.msra.mxu0 0
    %2137 = vmatprep.subr.bf16.mxu0 0
    %2138 = vmatpush2.bf16.msra.mxu0 0
    %2139 = vmatprep.subr.bf16.mxu0 0
    %2140 = vmatpush2.bf16.msra.mxu0 0
    %2141 = vmatprep.mubr.bf16.mxu0 0
    %2142 = vmatmul.mubr.bf16.gmra.mxu0 %v2107
    %v2143 = vpop.f32.mrf.mxu0
    %v2144 = vadd.f32 %v2092, %v2143
    %v2145 = vpop.f32.mrf.mxu0
    %v2146 = vpop.f32.mrf.mxu0
    %v2147 = vadd.f32 %v2092, %v2146
    %v2148 = vpop.f32.mrf.mxu0
    %2149 = vdwg.mxu0
    %2151 = vrot.lane.b32.xlu0 %v2144, 96
    %v2152 = vpop.permute.xlu0 %2151
    %v2153 = vsel %vm254, %v2144, 0
    %v2155 = vsel %vm254, %v2152, 0
    %2157 = vmatprep.subr.mxu0 0.0
    %2158 = vmatpush1.xpose.msra.mxu0 0.0
    %2159 = vmatprep.subr.mxu0 0.0
    %2160 = vmatpush1.xpose.msra.mxu0 0.0
    %2161 = vmatprep.subr.mxu0 0.0
    %2162 = vmatpush1.xpose.msra.mxu0 0.0
    %2163 = vmatprep.subr.mxu0 0.0
    %2164 = vmatpush1.xpose.msra.mxu0 0.0
    %2165 = vmatprep.subr.mxu0 0.0
    %2166 = vmatpush1.xpose.msra.mxu0 0.0
    %2167 = vmatprep.subr.mxu0 0.0
    %2168 = vmatpush1.xpose.msra.mxu0 0.0
    %2169 = vmatprep.subr.mxu0 0.0
    %2170 = vmatpush1.xpose.msra.mxu0 0.0
    %2171 = vmatprep.subr.mxu0 0.0
    %2172 = vmatpush1.xpose.msra.mxu0 0.0
    %2173 = vmatprep.subr.mxu0 0.0
    %2174 = vmatpush1.xpose.msra.mxu0 0.0
    %2175 = vmatprep.subr.mxu0 0.0
    %2176 = vmatpush1.xpose.msra.mxu0 0.0
    %2177 = vmatprep.subr.mxu0 0.0
    %2178 = vmatpush1.xpose.msra.mxu0 0.0
    %2179 = vmatprep.subr.mxu0 0.0
    %2180 = vmatpush1.xpose.msra.mxu0 0.0
    %2181 = vmatprep.subr.mxu0 0.0
    %2182 = vmatpush1.xpose.msra.mxu0 0.0
    %2183 = vmatprep.subr.mxu0 0.0
    %2184 = vmatpush1.xpose.msra.mxu0 0.0
    %2185 = vmatprep.subr.mxu0 0.0
    %2186 = vmatpush1.xpose.msra.mxu0 0.0
    %2187 = vmatprep.subr.mxu0 0.0
    %2188 = vmatpush1.xpose.msra.mxu0 %v2155
    %2189 = vmatprep.subr.mxu0 0.0
    %2190 = vmatpush2.xpose.msra.mxu0 0.0
    %2191 = vmatprep.subr.mxu0 0.0
    %2192 = vmatpush2.xpose.msra.mxu0 0.0
    %2193 = vmatprep.subr.mxu0 0.0
    %2194 = vmatpush2.xpose.msra.mxu0 0.0
    %2195 = vmatprep.subr.mxu0 0.0
    %2196 = vmatpush2.xpose.msra.mxu0 0.0
    %2197 = vmatprep.subr.mxu0 0.0
    %2198 = vmatpush2.xpose.msra.mxu0 0.0
    %2199 = vmatprep.subr.mxu0 0.0
    %2200 = vmatpush2.xpose.msra.mxu0 0.0
    %2201 = vmatprep.subr.mxu0 0.0
    %2202 = vmatpush2.xpose.msra.mxu0 0.0
    %2203 = vmatprep.subr.mxu0 0.0
    %2204 = vmatpush2.xpose.msra.mxu0 0.0
    %2205 = vmatprep.subr.mxu0 0.0
    %2206 = vmatpush2.xpose.msra.mxu0 0.0
    %2207 = vmatprep.subr.mxu0 0.0
    %2208 = vmatpush2.xpose.msra.mxu0 0.0
    %2209 = vmatprep.subr.mxu0 0.0
    %2210 = vmatpush2.xpose.msra.mxu0 0.0
    %2211 = vmatprep.subr.mxu0 0.0
    %2212 = vmatpush2.xpose.msra.mxu0 0.0
    %2213 = vmatprep.subr.mxu0 0.0
    %2214 = vmatpush2.xpose.msra.mxu0 0.0
    %2215 = vmatprep.subr.mxu0 0.0
    %2216 = vmatpush2.xpose.msra.mxu0 0.0
    %2217 = vmatprep.subr.mxu0 0.0
    %2218 = vmatpush2.xpose.msra.mxu0 0.0
    %2219 = vmatprep.subr.mxu0 0.0
    %2220 = vmatpush2.xpose.msra.mxu0 0.0
    %2221 = vmatprep.mubr.f32.mxu0 0.0
    %2222 = vmatmul.mubr.f32.gmra.mxu0 %v2153
    %v2223 = vpop.f32.mrf.mxu0
    %v2224 = vadd.f32 0.0, %v2223
    %v2225 = vpop.f32.mrf.mxu0
    %2226 = vdwg.mxu0
    %2228 = vrot.lane.b32.xlu0 %v2147, 96
    %v2229 = vpop.permute.xlu0 %2228
    %v2230 = vsel %vm254, %v2147, 0
    %v2232 = vsel %vm254, %v2229, 0
    %2234 = vmatprep.subr.mxu0 0.0
    %2235 = vmatpush1.xpose.msra.mxu0 0.0
    %2236 = vmatprep.subr.mxu0 0.0
    %2237 = vmatpush1.xpose.msra.mxu0 0.0
    %2238 = vmatprep.subr.mxu0 0.0
    %2239 = vmatpush1.xpose.msra.mxu0 0.0
    %2240 = vmatprep.subr.mxu0 0.0
    %2241 = vmatpush1.xpose.msra.mxu0 0.0
    %2242 = vmatprep.subr.mxu0 0.0
    %2243 = vmatpush1.xpose.msra.mxu0 0.0
    %2244 = vmatprep.subr.mxu0 0.0
    %2245 = vmatpush1.xpose.msra.mxu0 0.0
    %2246 = vmatprep.subr.mxu0 0.0
    %2247 = vmatpush1.xpose.msra.mxu0 0.0
    %2248 = vmatprep.subr.mxu0 0.0
    %2249 = vmatpush1.xpose.msra.mxu0 0.0
    %2250 = vmatprep.subr.mxu0 0.0
    %2251 = vmatpush1.xpose.msra.mxu0 0.0
    %2252 = vmatprep.subr.mxu0 0.0
    %2253 = vmatpush1.xpose.msra.mxu0 0.0
    %2254 = vmatprep.subr.mxu0 0.0
    %2255 = vmatpush1.xpose.msra.mxu0 0.0
    %2256 = vmatprep.subr.mxu0 0.0
    %2257 = vmatpush1.xpose.msra.mxu0 0.0
    %2258 = vmatprep.subr.mxu0 0.0
    %2259 = vmatpush1.xpose.msra.mxu0 0.0
    %2260 = vmatprep.subr.mxu0 0.0
    %2261 = vmatpush1.xpose.msra.mxu0 0.0
    %2262 = vmatprep.subr.mxu0 0.0
    %2263 = vmatpush1.xpose.msra.mxu0 0.0
    %2264 = vmatprep.subr.mxu0 0.0
    %2265 = vmatpush1.xpose.msra.mxu0 %v2232
    %2266 = vmatprep.subr.mxu0 0.0
    %2267 = vmatpush2.xpose.msra.mxu0 0.0
    %2268 = vmatprep.subr.mxu0 0.0
    %2269 = vmatpush2.xpose.msra.mxu0 0.0
    %2270 = vmatprep.subr.mxu0 0.0
    %2271 = vmatpush2.xpose.msra.mxu0 0.0
    %2272 = vmatprep.subr.mxu0 0.0
    %2273 = vmatpush2.xpose.msra.mxu0 0.0
    %2274 = vmatprep.subr.mxu0 0.0
    %2275 = vmatpush2.xpose.msra.mxu0 0.0
    %2276 = vmatprep.subr.mxu0 0.0
    %2277 = vmatpush2.xpose.msra.mxu0 0.0
    %2278 = vmatprep.subr.mxu0 0.0
    %2279 = vmatpush2.xpose.msra.mxu0 0.0
    %2280 = vmatprep.subr.mxu0 0.0
    %2281 = vmatpush2.xpose.msra.mxu0 0.0
    %2282 = vmatprep.subr.mxu0 0.0
    %2283 = vmatpush2.xpose.msra.mxu0 0.0
    %2284 = vmatprep.subr.mxu0 0.0
    %2285 = vmatpush2.xpose.msra.mxu0 0.0
    %2286 = vmatprep.subr.mxu0 0.0
    %2287 = vmatpush2.xpose.msra.mxu0 0.0
    %2288 = vmatprep.subr.mxu0 0.0
    %2289 = vmatpush2.xpose.msra.mxu0 0.0
    %2290 = vmatprep.subr.mxu0 0.0
    %2291 = vmatpush2.xpose.msra.mxu0 0.0
    %2292 = vmatprep.subr.mxu0 0.0
    %2293 = vmatpush2.xpose.msra.mxu0 0.0
    %2294 = vmatprep.subr.mxu0 0.0
    %2295 = vmatpush2.xpose.msra.mxu0 0.0
    %2296 = vmatprep.subr.mxu0 0.0
    %2297 = vmatpush2.xpose.msra.mxu0 0.0
    %2298 = vmatprep.mubr.f32.mxu0 0.0
    %2299 = vmatmul.mubr.f32.gmra.mxu0 %v2230
    %v2300 = vpop.f32.mrf.mxu0
    %v2301 = vadd.f32 0.0, %v2300
    %v2302 = vpop.f32.mrf.mxu0
    %2303 = vdwg.mxu0
    %v2304 = vmul.f32 %v2224, 0.35355338
    %v2305 = vmul.f32 %v2301, 0.35355338
    %v2306 = vadd.f32 %v2304, %v434
    %v2307 = vadd.f32 %v2305, %v438
    %v2308 = vsel %vm254, %v2306, -inf
    %2309 = vmax.xlane.f32.xlu0 %v2308
    %v2310 = vpop.xlane.xlu0 %2309
    %v2311 = vsel %vm254, %v2307, -inf
    %2312 = vmax.xlane.f32.xlu0 %v2311
    %v2313 = vpop.xlane.xlu0 %2312
    %v2314 = vsub.f32 %v2306, %v2310
    %v2315 = vsub.f32 %v2307, %v2313
    %v2316 = vmul.f32 %v2314, 1.442695
    %v2317 = vpow.pop %v2316
    %v2318 = vmul.f32 %v2315, 1.442695
    %v2319 = vpow.pop %v2318
    %v2320 = vsel %vm254, %v2317, 0.0
    %2321 = vadd.xlane.f32.xlu0 %v2320
    %v2322 = vpop.xlane.xlu0 %2321
    %v2323 = vsel %vm254, %v2319, 0.0
    %2324 = vadd.xlane.f32.xlu0 %v2323
    %v2325 = vpop.xlane.xlu0 %2324
    %v2326 = vrcp.pop %v2322
    %v2327 = vmul.f32 %v2317, %v2326
    %v2328 = vrcp.pop %v2325
    %v2329 = vmul.f32 %v2319, %v2328
    %2330 = vrot.lane.b32.xlu0 %v2144, 64
    %v2331 = vpop.permute.xlu0 %2330
    %v2334 = vsel %vm254, %v2327, 0
    %2336 = vmatprep.subr.mxu0 0.0
    %2337 = vmatpush1.msra.mxu0 0.0
    %2338 = vmatprep.subr.mxu0 0.0
    %2339 = vmatpush1.msra.mxu0 0.0
    %2340 = vmatprep.subr.mxu0 0.0
    %2341 = vmatpush1.msra.mxu0 0.0
    %2342 = vmatprep.subr.mxu0 0.0
    %2343 = vmatpush1.msra.mxu0 0.0
    %2344 = vmatprep.subr.mxu0 0.0
    %2345 = vmatpush1.msra.mxu0 0.0
    %2346 = vmatprep.subr.mxu0 0.0
    %2347 = vmatpush1.msra.mxu0 0.0
    %2348 = vmatprep.subr.mxu0 0.0
    %2349 = vmatpush1.msra.mxu0 0.0
    %2350 = vmatprep.subr.mxu0 0.0
    %2351 = vmatpush1.msra.mxu0 0.0
    %2352 = vmatprep.subr.mxu0 0.0
    %2353 = vmatpush1.msra.mxu0 0.0
    %2354 = vmatprep.subr.mxu0 0.0
    %2355 = vmatpush1.msra.mxu0 0.0
    %2356 = vmatprep.subr.mxu0 0.0
    %2357 = vmatpush1.msra.mxu0 0.0
    %2358 = vmatprep.subr.mxu0 0.0
    %2359 = vmatpush1.msra.mxu0 0.0
    %2360 = vmatprep.subr.mxu0 0.0
    %2361 = vmatpush1.msra.mxu0 0.0
    %2362 = vmatprep.subr.mxu0 0.0
    %2363 = vmatpush1.msra.mxu0 0.0
    %2364 = vmatprep.subr.mxu0 0.0
    %2365 = vmatpush1.msra.mxu0 0.0
    %2366 = vmatprep.subr.mxu0 0.0
    %2367 = vmatpush1.msra.mxu0 %v2331
    %2368 = vmatprep.subr.mxu0 0.0
    %2369 = vmatpush2.msra.mxu0 0.0
    %2370 = vmatprep.subr.mxu0 0.0
    %2371 = vmatpush2.msra.mxu0 0.0
    %2372 = vmatprep.subr.mxu0 0.0
    %2373 = vmatpush2.msra.mxu0 0.0
    %2374 = vmatprep.subr.mxu0 0.0
    %2375 = vmatpush2.msra.mxu0 0.0
    %2376 = vmatprep.subr.mxu0 0.0
    %2377 = vmatpush2.msra.mxu0 0.0
    %2378 = vmatprep.subr.mxu0 0.0
    %2379 = vmatpush2.msra.mxu0 0.0
    %2380 = vmatprep.subr.mxu0 0.0
    %2381 = vmatpush2.msra.mxu0 0.0
    %2382 = vmatprep.subr.mxu0 0.0
    %2383 = vmatpush2.msra.mxu0 0.0
    %2384 = vmatprep.subr.mxu0 0.0
    %2385 = vmatpush2.msra.mxu0 0.0
    %2386 = vmatprep.subr.mxu0 0.0
    %2387 = vmatpush2.msra.mxu0 0.0
    %2388 = vmatprep.subr.mxu0 0.0
    %2389 = vmatpush2.msra.mxu0 0.0
    %2390 = vmatprep.subr.mxu0 0.0
    %2391 = vmatpush2.msra.mxu0 0.0
    %2392 = vmatprep.subr.mxu0 0.0
    %2393 = vmatpush2.msra.mxu0 0.0
    %2394 = vmatprep.subr.mxu0 0.0
    %2395 = vmatpush2.msra.mxu0 0.0
    %2396 = vmatprep.subr.mxu0 0.0
    %2397 = vmatpush2.msra.mxu0 0.0
    %2398 = vmatprep.subr.mxu0 0.0
    %2399 = vmatpush2.msra.mxu0 0.0
    %2400 = vmatprep.mubr.f32.mxu0 0.0
    %2401 = vmatmul.mubr.f32.gmra.mxu0 %v2334
    %v2402 = vpop.f32.mrf.mxu0
    %v2403 = vadd.f32 0.0, %v2402
    %v2404 = vpop.f32.mrf.mxu0
    %2405 = vdwg.mxu0
    %2406 = vrot.lane.b32.xlu0 %v2147, 64
    %v2407 = vpop.permute.xlu0 %2406
    %v2410 = vsel %vm254, %v2329, 0
    %2412 = vmatprep.subr.mxu0 0.0
    %2413 = vmatpush1.msra.mxu0 0.0
    %2414 = vmatprep.subr.mxu0 0.0
    %2415 = vmatpush1.msra.mxu0 0.0
    %2416 = vmatprep.subr.mxu0 0.0
    %2417 = vmatpush1.msra.mxu0 0.0
    %2418 = vmatprep.subr.mxu0 0.0
    %2419 = vmatpush1.msra.mxu0 0.0
    %2420 = vmatprep.subr.mxu0 0.0
    %2421 = vmatpush1.msra.mxu0 0.0
    %2422 = vmatprep.subr.mxu0 0.0
    %2423 = vmatpush1.msra.mxu0 0.0
    %2424 = vmatprep.subr.mxu0 0.0
    %2425 = vmatpush1.msra.mxu0 0.0
    %2426 = vmatprep.subr.mxu0 0.0
    %2427 = vmatpush1.msra.mxu0 0.0
    %2428 = vmatprep.subr.mxu0 0.0
    %2429 = vmatpush1.msra.mxu0 0.0
    %2430 = vmatprep.subr.mxu0 0.0
    %2431 = vmatpush1.msra.mxu0 0.0
    %2432 = vmatprep.subr.mxu0 0.0
    %2433 = vmatpush1.msra.mxu0 0.0
    %2434 = vmatprep.subr.mxu0 0.0
    %2435 = vmatpush1.msra.mxu0 0.0
    %2436 = vmatprep.subr.mxu0 0.0
    %2437 = vmatpush1.msra.mxu0 0.0
    %2438 = vmatprep.subr.mxu0 0.0
    %2439 = vmatpush1.msra.mxu0 0.0
    %2440 = vmatprep.subr.mxu0 0.0
    %2441 = vmatpush1.msra.mxu0 0.0
    %2442 = vmatprep.subr.mxu0 0.0
    %2443 = vmatpush1.msra.mxu0 %v2407
    %2444 = vmatprep.subr.mxu0 0.0
    %2445 = vmatpush2.msra.mxu0 0.0
    %2446 = vmatprep.subr.mxu0 0.0
    %2447 = vmatpush2.msra.mxu0 0.0
    %2448 = vmatprep.subr.mxu0 0.0
    %2449 = vmatpush2.msra.mxu0 0.0
    %2450 = vmatprep.subr.mxu0 0.0
    %2451 = vmatpush2.msra.mxu0 0.0
    %2452 = vmatprep.subr.mxu0 0.0
    %2453 = vmatpush2.msra.mxu0 0.0
    %2454 = vmatprep.subr.mxu0 0.0
    %2455 = vmatpush2.msra.mxu0 0.0
    %2456 = vmatprep.subr.mxu0 0.0
    %2457 = vmatpush2.msra.mxu0 0.0
    %2458 = vmatprep.subr.mxu0 0.0
    %2459 = vmatpush2.msra.mxu0 0.0
    %2460 = vmatprep.subr.mxu0 0.0
    %2461 = vmatpush2.msra.mxu0 0.0
    %2462 = vmatprep.subr.mxu0 0.0
    %2463 = vmatpush2.msra.mxu0 0.0
    %2464 = vmatprep.subr.mxu0 0.0
    %2465 = vmatpush2.msra.mxu0 0.0
    %2466 = vmatprep.subr.mxu0 0.0
    %2467 = vmatpush2.msra.mxu0 0.0
    %2468 = vmatprep.subr.mxu0 0.0
    %2469 = vmatpush2.msra.mxu0 0.0
    %2470 = vmatprep.subr.mxu0 0.0
    %2471 = vmatpush2.msra.mxu0 0.0
    %2472 = vmatprep.subr.mxu0 0.0
    %2473 = vmatpush2.msra.mxu0 0.0
    %2474 = vmatprep.subr.mxu0 0.0
    %2475 = vmatpush2.msra.mxu0 0.0
    %2476 = vmatprep.mubr.f32.mxu0 0.0
    %2477 = vmatmul.mubr.f32.gmra.mxu0 %v2410
    %v2478 = vpop.f32.mrf.mxu0
    %v2479 = vadd.f32 0.0, %v2478
    %v2480 = vpop.f32.mrf.mxu0
    %2481 = vdwg.mxu0
    %v2482 = vpack.c.bf16 %v2479, %v2403
    %2483 = vrot.lane.b32.xlu0 %v2144, 120
    %v2484 = vpop.permute.xlu0 %2483
    %2485 = vrot.lane.b32.xlu0 %v2144, 88
    %v2486 = vpop.permute.xlu0 %2485
    %v2487 = vsel %vm254, %v2484, 0
    %v2489 = vsel %vm254, %v2486, 0
    %2491 = vmatprep.subr.mxu0 0.0
    %2492 = vmatpush1.xpose.msra.mxu0 0.0
    %2493 = vmatprep.subr.mxu0 0.0
    %2494 = vmatpush1.xpose.msra.mxu0 0.0
    %2495 = vmatprep.subr.mxu0 0.0
    %2496 = vmatpush1.xpose.msra.mxu0 0.0
    %2497 = vmatprep.subr.mxu0 0.0
    %2498 = vmatpush1.xpose.msra.mxu0 0.0
    %2499 = vmatprep.subr.mxu0 0.0
    %2500 = vmatpush1.xpose.msra.mxu0 0.0
    %2501 = vmatprep.subr.mxu0 0.0
    %2502 = vmatpush1.xpose.msra.mxu0 0.0
    %2503 = vmatprep.subr.mxu0 0.0
    %2504 = vmatpush1.xpose.msra.mxu0 0.0
    %2505 = vmatprep.subr.mxu0 0.0
    %2506 = vmatpush1.xpose.msra.mxu0 0.0
    %2507 = vmatprep.subr.mxu0 0.0
    %2508 = vmatpush1.xpose.msra.mxu0 0.0
    %2509 = vmatprep.subr.mxu0 0.0
    %2510 = vmatpush1.xpose.msra.mxu0 0.0
    %2511 = vmatprep.subr.mxu0 0.0
    %2512 = vmatpush1.xpose.msra.mxu0 0.0
    %2513 = vmatprep.subr.mxu0 0.0
    %2514 = vmatpush1.xpose.msra.mxu0 0.0
    %2515 = vmatprep.subr.mxu0 0.0
    %2516 = vmatpush1.xpose.msra.mxu0 0.0
    %2517 = vmatprep.subr.mxu0 0.0
    %2518 = vmatpush1.xpose.msra.mxu0 0.0
    %2519 = vmatprep.subr.mxu0 0.0
    %2520 = vmatpush1.xpose.msra.mxu0 0.0
    %2521 = vmatprep.subr.mxu0 0.0
    %2522 = vmatpush1.xpose.msra.mxu0 %v2489
    %2523 = vmatprep.subr.mxu0 0.0
    %2524 = vmatpush2.xpose.msra.mxu0 0.0
    %2525 = vmatprep.subr.mxu0 0.0
    %2526 = vmatpush2.xpose.msra.mxu0 0.0
    %2527 = vmatprep.subr.mxu0 0.0
    %2528 = vmatpush2.xpose.msra.mxu0 0.0
    %2529 = vmatprep.subr.mxu0 0.0
    %2530 = vmatpush2.xpose.msra.mxu0 0.0
    %2531 = vmatprep.subr.mxu0 0.0
    %2532 = vmatpush2.xpose.msra.mxu0 0.0
    %2533 = vmatprep.subr.mxu0 0.0
    %2534 = vmatpush2.xpose.msra.mxu0 0.0
    %2535 = vmatprep.subr.mxu0 0.0
    %2536 = vmatpush2.xpose.msra.mxu0 0.0
    %2537 = vmatprep.subr.mxu0 0.0
    %2538 = vmatpush2.xpose.msra.mxu0 0.0
    %2539 = vmatprep.subr.mxu0 0.0
    %2540 = vmatpush2.xpose.msra.mxu0 0.0
    %2541 = vmatprep.subr.mxu0 0.0
    %2542 = vmatpush2.xpose.msra.mxu0 0.0
    %2543 = vmatprep.subr.mxu0 0.0
    %2544 = vmatpush2.xpose.msra.mxu0 0.0
    %2545 = vmatprep.subr.mxu0 0.0
    %2546 = vmatpush2.xpose.msra.mxu0 0.0
    %2547 = vmatprep.subr.mxu0 0.0
    %2548 = vmatpush2.xpose.msra.mxu0 0.0
    %2549 = vmatprep.subr.mxu0 0.0
    %2550 = vmatpush2.xpose.msra.mxu0 0.0
    %2551 = vmatprep.subr.mxu0 0.0
    %2552 = vmatpush2.xpose.msra.mxu0 0.0
    %2553 = vmatprep.subr.mxu0 0.0
    %2554 = vmatpush2.xpose.msra.mxu0 0.0
    %2555 = vmatprep.mubr.f32.mxu0 0.0
    %2556 = vmatmul.mubr.f32.gmra.mxu0 %v2487
    %v2557 = vpop.f32.mrf.mxu0
    %v2558 = vadd.f32 0.0, %v2557
    %v2559 = vpop.f32.mrf.mxu0
    %2560 = vdwg.mxu0
    %2561 = vrot.lane.b32.xlu0 %v2147, 120
    %v2562 = vpop.permute.xlu0 %2561
    %2563 = vrot.lane.b32.xlu0 %v2147, 88
    %v2564 = vpop.permute.xlu0 %2563
    %v2565 = vsel %vm254, %v2562, 0
    %v2567 = vsel %vm254, %v2564, 0
    %2569 = vmatprep.subr.mxu0 0.0
    %2570 = vmatpush1.xpose.msra.mxu0 0.0
    %2571 = vmatprep.subr.mxu0 0.0
    %2572 = vmatpush1.xpose.msra.mxu0 0.0
    %2573 = vmatprep.subr.mxu0 0.0
    %2574 = vmatpush1.xpose.msra.mxu0 0.0
    %2575 = vmatprep.subr.mxu0 0.0
    %2576 = vmatpush1.xpose.msra.mxu0 0.0
    %2577 = vmatprep.subr.mxu0 0.0
    %2578 = vmatpush1.xpose.msra.mxu0 0.0
    %2579 = vmatprep.subr.mxu0 0.0
    %2580 = vmatpush1.xpose.msra.mxu0 0.0
    %2581 = vmatprep.subr.mxu0 0.0
    %2582 = vmatpush1.xpose.msra.mxu0 0.0
    %2583 = vmatprep.subr.mxu0 0.0
    %2584 = vmatpush1.xpose.msra.mxu0 0.0
    %2585 = vmatprep.subr.mxu0 0.0
    %2586 = vmatpush1.xpose.msra.mxu0 0.0
    %2587 = vmatprep.subr.mxu0 0.0
    %2588 = vmatpush1.xpose.msra.mxu0 0.0
    %2589 = vmatprep.subr.mxu0 0.0
    %2590 = vmatpush1.xpose.msra.mxu0 0.0
    %2591 = vmatprep.subr.mxu0 0.0
    %2592 = vmatpush1.xpose.msra.mxu0 0.0
    %2593 = vmatprep.subr.mxu0 0.0
    %2594 = vmatpush1.xpose.msra.mxu0 0.0
    %2595 = vmatprep.subr.mxu0 0.0
    %2596 = vmatpush1.xpose.msra.mxu0 0.0
    %2597 = vmatprep.subr.mxu0 0.0
    %2598 = vmatpush1.xpose.msra.mxu0 0.0
    %2599 = vmatprep.subr.mxu0 0.0
    %2600 = vmatpush1.xpose.msra.mxu0 %v2567
    %2601 = vmatprep.subr.mxu0 0.0
    %2602 = vmatpush2.xpose.msra.mxu0 0.0
    %2603 = vmatprep.subr.mxu0 0.0
    %2604 = vmatpush2.xpose.msra.mxu0 0.0
    %2605 = vmatprep.subr.mxu0 0.0
    %2606 = vmatpush2.xpose.msra.mxu0 0.0
    %2607 = vmatprep.subr.mxu0 0.0
    %2608 = vmatpush2.xpose.msra.mxu0 0.0
    %2609 = vmatprep.subr.mxu0 0.0
    %2610 = vmatpush2.xpose.msra.mxu0 0.0
    %2611 = vmatprep.subr.mxu0 0.0
    %2612 = vmatpush2.xpose.msra.mxu0 0.0
    %2613 = vmatprep.subr.mxu0 0.0
    %2614 = vmatpush2.xpose.msra.mxu0 0.0
    %2615 = vmatprep.subr.mxu0 0.0
    %2616 = vmatpush2.xpose.msra.mxu0 0.0
    %2617 = vmatprep.subr.mxu0 0.0
    %2618 = vmatpush2.xpose.msra.mxu0 0.0
    %2619 = vmatprep.subr.mxu0 0.0
    %2620 = vmatpush2.xpose.msra.mxu0 0.0
    %2621 = vmatprep.subr.mxu0 0.0
    %2622 = vmatpush2.xpose.msra.mxu0 0.0
    %2623 = vmatprep.subr.mxu0 0.0
    %2624 = vmatpush2.xpose.msra.mxu0 0.0
    %2625 = vmatprep.subr.mxu0 0.0
    %2626 = vmatpush2.xpose.msra.mxu0 0.0
    %2627 = vmatprep.subr.mxu0 0.0
    %2628 = vmatpush2.xpose.msra.mxu0 0.0
    %2629 = vmatprep.subr.mxu0 0.0
    %2630 = vmatpush2.xpose.msra.mxu0 0.0
    %2631 = vmatprep.subr.mxu0 0.0
    %2632 = vmatpush2.xpose.msra.mxu0 0.0
    %2633 = vmatprep.mubr.f32.mxu0 0.0
    %2634 = vmatmul.mubr.f32.gmra.mxu0 %v2565
    %v2635 = vpop.f32.mrf.mxu0
    %v2636 = vadd.f32 0.0, %v2635
    %v2637 = vpop.f32.mrf.mxu0
    %2638 = vdwg.mxu0
    %v2639 = vmul.f32 %v2558, 0.35355338
    %v2640 = vmul.f32 %v2636, 0.35355338
    %v2641 = vadd.f32 %v2639, %v434
    %v2642 = vadd.f32 %v2640, %v438
    %v2643 = vsel %vm254, %v2641, -inf
    %2644 = vmax.xlane.f32.xlu0 %v2643
    %v2645 = vpop.xlane.xlu0 %2644
    %v2646 = vsel %vm254, %v2642, -inf
    %2647 = vmax.xlane.f32.xlu0 %v2646
    %v2648 = vpop.xlane.xlu0 %2647
    %v2649 = vsub.f32 %v2641, %v2645
    %v2650 = vsub.f32 %v2642, %v2648
    %v2651 = vmul.f32 %v2649, 1.442695
    %v2652 = vpow.pop %v2651
    %v2653 = vmul.f32 %v2650, 1.442695
    %v2654 = vpow.pop %v2653
    %v2655 = vsel %vm254, %v2652, 0.0
    %2656 = vadd.xlane.f32.xlu0 %v2655
    %v2657 = vpop.xlane.xlu0 %2656
    %v2658 = vsel %vm254, %v2654, 0.0
    %2659 = vadd.xlane.f32.xlu0 %v2658
    %v2660 = vpop.xlane.xlu0 %2659
    %v2661 = vrcp.pop %v2657
    %v2662 = vmul.f32 %v2652, %v2661
    %v2663 = vrcp.pop %v2660
    %v2664 = vmul.f32 %v2654, %v2663
    %2665 = vrot.lane.b32.xlu0 %v2144, 56
    %v2666 = vpop.permute.xlu0 %2665
    %v2669 = vsel %vm254, %v2662, 0
    %2671 = vmatprep.subr.mxu0 0.0
    %2672 = vmatpush1.msra.mxu0 0.0
    %2673 = vmatprep.subr.mxu0 0.0
    %2674 = vmatpush1.msra.mxu0 0.0
    %2675 = vmatprep.subr.mxu0 0.0
    %2676 = vmatpush1.msra.mxu0 0.0
    %2677 = vmatprep.subr.mxu0 0.0
    %2678 = vmatpush1.msra.mxu0 0.0
    %2679 = vmatprep.subr.mxu0 0.0
    %2680 = vmatpush1.msra.mxu0 0.0
    %2681 = vmatprep.subr.mxu0 0.0
    %2682 = vmatpush1.msra.mxu0 0.0
    %2683 = vmatprep.subr.mxu0 0.0
    %2684 = vmatpush1.msra.mxu0 0.0
    %2685 = vmatprep.subr.mxu0 0.0
    %2686 = vmatpush1.msra.mxu0 0.0
    %2687 = vmatprep.subr.mxu0 0.0
    %2688 = vmatpush1.msra.mxu0 0.0
    %2689 = vmatprep.subr.mxu0 0.0
    %2690 = vmatpush1.msra.mxu0 0.0
    %2691 = vmatprep.subr.mxu0 0.0
    %2692 = vmatpush1.msra.mxu0 0.0
    %2693 = vmatprep.subr.mxu0 0.0
    %2694 = vmatpush1.msra.mxu0 0.0
    %2695 = vmatprep.subr.mxu0 0.0
    %2696 = vmatpush1.msra.mxu0 0.0
    %2697 = vmatprep.subr.mxu0 0.0
    %2698 = vmatpush1.msra.mxu0 0.0
    %2699 = vmatprep.subr.mxu0 0.0
    %2700 = vmatpush1.msra.mxu0 0.0
    %2701 = vmatprep.subr.mxu0 0.0
    %2702 = vmatpush1.msra.mxu0 %v2666
    %2703 = vmatprep.subr.mxu0 0.0
    %2704 = vmatpush2.msra.mxu0 0.0
    %2705 = vmatprep.subr.mxu0 0.0
    %2706 = vmatpush2.msra.mxu0 0.0
    %2707 = vmatprep.subr.mxu0 0.0
    %2708 = vmatpush2.msra.mxu0 0.0
    %2709 = vmatprep.subr.mxu0 0.0
    %2710 = vmatpush2.msra.mxu0 0.0
    %2711 = vmatprep.subr.mxu0 0.0
    %2712 = vmatpush2.msra.mxu0 0.0
    %2713 = vmatprep.subr.mxu0 0.0
    %2714 = vmatpush2.msra.mxu0 0.0
    %2715 = vmatprep.subr.mxu0 0.0
    %2716 = vmatpush2.msra.mxu0 0.0
    %2717 = vmatprep.subr.mxu0 0.0
    %2718 = vmatpush2.msra.mxu0 0.0
    %2719 = vmatprep.subr.mxu0 0.0
    %2720 = vmatpush2.msra.mxu0 0.0
    %2721 = vmatprep.subr.mxu0 0.0
    %2722 = vmatpush2.msra.mxu0 0.0
    %2723 = vmatprep.subr.mxu0 0.0
    %2724 = vmatpush2.msra.mxu0 0.0
    %2725 = vmatprep.subr.mxu0 0.0
    %2726 = vmatpush2.msra.mxu0 0.0
    %2727 = vmatprep.subr.mxu0 0.0
    %2728 = vmatpush2.msra.mxu0 0.0
    %2729 = vmatprep.subr.mxu0 0.0
    %2730 = vmatpush2.msra.mxu0 0.0
    %2731 = vmatprep.subr.mxu0 0.0
    %2732 = vmatpush2.msra.mxu0 0.0
    %2733 = vmatprep.subr.mxu0 0.0
    %2734 = vmatpush2.msra.mxu0 0.0
    %2735 = vmatprep.mubr.f32.mxu0 0.0
    %2736 = vmatmul.mubr.f32.gmra.mxu0 %v2669
    %v2737 = vpop.f32.mrf.mxu0
    %v2738 = vadd.f32 0.0, %v2737
    %v2739 = vpop.f32.mrf.mxu0
    %2740 = vdwg.mxu0
    %2741 = vrot.lane.b32.xlu0 %v2147, 56
    %v2742 = vpop.permute.xlu0 %2741
    %v2745 = vsel %vm254, %v2664, 0
    %2747 = vmatprep.subr.mxu0 0.0
    %2748 = vmatpush1.msra.mxu0 0.0
    %2749 = vmatprep.subr.mxu0 0.0
    %2750 = vmatpush1.msra.mxu0 0.0
    %2751 = vmatprep.subr.mxu0 0.0
    %2752 = vmatpush1.msra.mxu0 0.0
    %2753 = vmatprep.subr.mxu0 0.0
    %2754 = vmatpush1.msra.mxu0 0.0
    %2755 = vmatprep.subr.mxu0 0.0
    %2756 = vmatpush1.msra.mxu0 0.0
    %2757 = vmatprep.subr.mxu0 0.0
    %2758 = vmatpush1.msra.mxu0 0.0
    %2759 = vmatprep.subr.mxu0 0.0
    %2760 = vmatpush1.msra.mxu0 0.0
    %2761 = vmatprep.subr.mxu0 0.0
    %2762 = vmatpush1.msra.mxu0 0.0
    %2763 = vmatprep.subr.mxu0 0.0
    %2764 = vmatpush1.msra.mxu0 0.0
    %2765 = vmatprep.subr.mxu0 0.0
    %2766 = vmatpush1.msra.mxu0 0.0
    %2767 = vmatprep.subr.mxu0 0.0
    %2768 = vmatpush1.msra.mxu0 0.0
    %2769 = vmatprep.subr.mxu0 0.0
    %2770 = vmatpush1.msra.mxu0 0.0
    %2771 = vmatprep.subr.mxu0 0.0
    %2772 = vmatpush1.msra.mxu0 0.0
    %2773 = vmatprep.subr.mxu0 0.0
    %2774 = vmatpush1.msra.mxu0 0.0
    %2775 = vmatprep.subr.mxu0 0.0
    %2776 = vmatpush1.msra.mxu0 0.0
    %2777 = vmatprep.subr.mxu0 0.0
    %2778 = vmatpush1.msra.mxu0 %v2742
    %2779 = vmatprep.subr.mxu0 0.0
    %2780 = vmatpush2.msra.mxu0 0.0
    %2781 = vmatprep.subr.mxu0 0.0
    %2782 = vmatpush2.msra.mxu0 0.0
    %2783 = vmatprep.subr.mxu0 0.0
    %2784 = vmatpush2.msra.mxu0 0.0
    %2785 = vmatprep.subr.mxu0 0.0
    %2786 = vmatpush2.msra.mxu0 0.0
    %2787 = vmatprep.subr.mxu0 0.0
    %2788 = vmatpush2.msra.mxu0 0.0
    %2789 = vmatprep.subr.mxu0 0.0
    %2790 = vmatpush2.msra.mxu0 0.0
    %2791 = vmatprep.subr.mxu0 0.0
    %2792 = vmatpush2.msra.mxu0 0.0
    %2793 = vmatprep.subr.mxu0 0.0
    %2794 = vmatpush2.msra.mxu0 0.0
    %2795 = vmatprep.subr.mxu0 0.0
    %2796 = vmatpush2.msra.mxu0 0.0
    %2797 = vmatprep.subr.mxu0 0.0
    %2798 = vmatpush2.msra.mxu0 0.0
    %2799 = vmatprep.subr.mxu0 0.0
    %2800 = vmatpush2.msra.mxu0 0.0
    %2801 = vmatprep.subr.mxu0 0.0
    %2802 = vmatpush2.msra.mxu0 0.0
    %2803 = vmatprep.subr.mxu0 0.0
    %2804 = vmatpush2.msra.mxu0 0.0
    %2805 = vmatprep.subr.mxu0 0.0
    %2806 = vmatpush2.msra.mxu0 0.0
    %2807 = vmatprep.subr.mxu0 0.0
    %2808 = vmatpush2.msra.mxu0 0.0
    %2809 = vmatprep.subr.mxu0 0.0
    %2810 = vmatpush2.msra.mxu0 0.0
    %2811 = vmatprep.mubr.f32.mxu0 0.0
    %2812 = vmatmul.mubr.f32.gmra.mxu0 %v2745
    %v2813 = vpop.f32.mrf.mxu0
    %v2814 = vadd.f32 0.0, %v2813
    %v2815 = vpop.f32.mrf.mxu0
    %2816 = vdwg.mxu0
    %v2817 = vpack.c.bf16 %v2814, %v2738
    %v2819 = vsel %vm254, %v2817, 0
    %v2822 = vsel %vm956, %v2066, 0
    %2824 = vmatprep.subr.bf16.mxu0 0
    %2825 = vmatpush1.bf16.msra.mxu0 0
    %2826 = vmatprep.subr.bf16.mxu0 0
    %2827 = vmatpush1.bf16.msra.mxu0 0
    %2828 = vmatprep.subr.bf16.mxu0 0
    %2829 = vmatpush1.bf16.msra.mxu0 0
    %2830 = vmatprep.subr.bf16.mxu0 0
    %2831 = vmatpush1.bf16.msra.mxu0 0
    %2832 = vmatprep.subr.bf16.mxu0 0
    %2833 = vmatpush1.bf16.msra.mxu0 0
    %2834 = vmatprep.subr.bf16.mxu0 0
    %2835 = vmatpush1.bf16.msra.mxu0 0
    %2836 = vmatprep.subr.bf16.mxu0 0
    %2837 = vmatpush1.bf16.msra.mxu0 0
    %2838 = vmatprep.subr.bf16.mxu0 0
    %2839 = vmatpush1.bf16.msra.mxu0 %v2822
    %2840 = vmatprep.subr.bf16.mxu0 0
    %2841 = vmatpush2.bf16.msra.mxu0 0
    %2842 = vmatprep.subr.bf16.mxu0 0
    %2843 = vmatpush2.bf16.msra.mxu0 0
    %2844 = vmatprep.subr.bf16.mxu0 0
    %2845 = vmatpush2.bf16.msra.mxu0 0
    %2846 = vmatprep.subr.bf16.mxu0 0
    %2847 = vmatpush2.bf16.msra.mxu0 0
    %2848 = vmatprep.subr.bf16.mxu0 0
    %2849 = vmatpush2.bf16.msra.mxu0 0
    %2850 = vmatprep.subr.bf16.mxu0 0
    %2851 = vmatpush2.bf16.msra.mxu0 0
    %2852 = vmatprep.subr.bf16.mxu0 0
    %2853 = vmatpush2.bf16.msra.mxu0 0
    %2854 = vmatprep.subr.bf16.mxu0 0
    %2855 = vmatpush2.bf16.msra.mxu0 0
    %2856 = vmatprep.mubr.bf16.mxu0 0
    %2857 = vmatmul.mubr.bf16.gmra.mxu0 %v2819
    %v2858 = vpop.f32.mrf.mxu0
    %v2859 = vadd.f32 0.0, %v2858
    %v2860 = vpop.f32.mrf.mxu0
    %v2861 = vpop.f32.mrf.mxu0
    %v2862 = vadd.f32 0.0, %v2861
    %v2863 = vpop.f32.mrf.mxu0
    %2864 = vdwg.mxu0
    %v2866 = vsel %vm254, %v2482, 0
    %v2869 = vsel %vm956, %v2065, 0
    %2871 = vmatprep.subr.bf16.mxu0 0
    %2872 = vmatpush1.bf16.msra.mxu0 0
    %2873 = vmatprep.subr.bf16.mxu0 0
    %2874 = vmatpush1.bf16.msra.mxu0 0
    %2875 = vmatprep.subr.bf16.mxu0 0
    %2876 = vmatpush1.bf16.msra.mxu0 0
    %2877 = vmatprep.subr.bf16.mxu0 0
    %2878 = vmatpush1.bf16.msra.mxu0 0
    %2879 = vmatprep.subr.bf16.mxu0 0
    %2880 = vmatpush1.bf16.msra.mxu0 0
    %2881 = vmatprep.subr.bf16.mxu0 0
    %2882 = vmatpush1.bf16.msra.mxu0 0
    %2883 = vmatprep.subr.bf16.mxu0 0
    %2884 = vmatpush1.bf16.msra.mxu0 0
    %2885 = vmatprep.subr.bf16.mxu0 0
    %2886 = vmatpush1.bf16.msra.mxu0 %v2869
    %2887 = vmatprep.subr.bf16.mxu0 0
    %2888 = vmatpush2.bf16.msra.mxu0 0
    %2889 = vmatprep.subr.bf16.mxu0 0
    %2890 = vmatpush2.bf16.msra.mxu0 0
    %2891 = vmatprep.subr.bf16.mxu0 0
    %2892 = vmatpush2.bf16.msra.mxu0 0
    %2893 = vmatprep.subr.bf16.mxu0 0
    %2894 = vmatpush2.bf16.msra.mxu0 0
    %2895 = vmatprep.subr.bf16.mxu0 0
    %2896 = vmatpush2.bf16.msra.mxu0 0
    %2897 = vmatprep.subr.bf16.mxu0 0
    %2898 = vmatpush2.bf16.msra.mxu0 0
    %2899 = vmatprep.subr.bf16.mxu0 0
    %2900 = vmatpush2.bf16.msra.mxu0 0
    %2901 = vmatprep.subr.bf16.mxu0 0
    %2902 = vmatpush2.bf16.msra.mxu0 0
    %2903 = vmatprep.mubr.bf16.mxu0 0
    %2904 = vmatmul.mubr.bf16.gmra.mxu0 %v2866
    %v2905 = vpop.f32.mrf.mxu0
    %v2906 = vadd.f32 %v2859, %v2905
    %v2907 = vpop.f32.mrf.mxu0
    %v2908 = vpop.f32.mrf.mxu0
    %v2909 = vadd.f32 %v2862, %v2908
    %v2910 = vpop.f32.mrf.mxu0
    %2911 = vdwg.mxu0
    %2912 = vrot.lane.b32.xlu0 %v2144, 112
    %v2913 = vpop.permute.xlu0 %2912
    %2914 = vrot.lane.b32.xlu0 %v2144, 80
    %v2915 = vpop.permute.xlu0 %2914
    %v2916 = vsel %vm254, %v2913, 0
    %v2918 = vsel %vm254, %v2915, 0
    %2920 = vmatprep.subr.mxu0 0.0
    %2921 = vmatpush1.xpose.msra.mxu0 0.0
    %2922 = vmatprep.subr.mxu0 0.0
    %2923 = vmatpush1.xpose.msra.mxu0 0.0
    %2924 = vmatprep.subr.mxu0 0.0
    %2925 = vmatpush1.xpose.msra.mxu0 0.0
    %2926 = vmatprep.subr.mxu0 0.0
    %2927 = vmatpush1.xpose.msra.mxu0 0.0
    %2928 = vmatprep.subr.mxu0 0.0
    %2929 = vmatpush1.xpose.msra.mxu0 0.0
    %2930 = vmatprep.subr.mxu0 0.0
    %2931 = vmatpush1.xpose.msra.mxu0 0.0
    %2932 = vmatprep.subr.mxu0 0.0
    %2933 = vmatpush1.xpose.msra.mxu0 0.0
    %2934 = vmatprep.subr.mxu0 0.0
    %2935 = vmatpush1.xpose.msra.mxu0 0.0
    %2936 = vmatprep.subr.mxu0 0.0
    %2937 = vmatpush1.xpose.msra.mxu0 0.0
    %2938 = vmatprep.subr.mxu0 0.0
    %2939 = vmatpush1.xpose.msra.mxu0 0.0
    %2940 = vmatprep.subr.mxu0 0.0
    %2941 = vmatpush1.xpose.msra.mxu0 0.0
    %2942 = vmatprep.subr.mxu0 0.0
    %2943 = vmatpush1.xpose.msra.mxu0 0.0
    %2944 = vmatprep.subr.mxu0 0.0
    %2945 = vmatpush1.xpose.msra.mxu0 0.0
    %2946 = vmatprep.subr.mxu0 0.0
    %2947 = vmatpush1.xpose.msra.mxu0 0.0
    %2948 = vmatprep.subr.mxu0 0.0
    %2949 = vmatpush1.xpose.msra.mxu0 0.0
    %2950 = vmatprep.subr.mxu0 0.0
    %2951 = vmatpush1.xpose.msra.mxu0 %v2918
    %2952 = vmatprep.subr.mxu0 0.0
    %2953 = vmatpush2.xpose.msra.mxu0 0.0
    %2954 = vmatprep.subr.mxu0 0.0
    %2955 = vmatpush2.xpose.msra.mxu0 0.0
    %2956 = vmatprep.subr.mxu0 0.0
    %2957 = vmatpush2.xpose.msra.mxu0 0.0
    %2958 = vmatprep.subr.mxu0 0.0
    %2959 = vmatpush2.xpose.msra.mxu0 0.0
    %2960 = vmatprep.subr.mxu0 0.0
    %2961 = vmatpush2.xpose.msra.mxu0 0.0
    %2962 = vmatprep.subr.mxu0 0.0
    %2963 = vmatpush2.xpose.msra.mxu0 0.0
    %2964 = vmatprep.subr.mxu0 0.0
    %2965 = vmatpush2.xpose.msra.mxu0 0.0
    %2966 = vmatprep.subr.mxu0 0.0
    %2967 = vmatpush2.xpose.msra.mxu0 0.0
    %2968 = vmatprep.subr.mxu0 0.0
    %2969 = vmatpush2.xpose.msra.mxu0 0.0
    %2970 = vmatprep.subr.mxu0 0.0
    %2971 = vmatpush2.xpose.msra.mxu0 0.0
    %2972 = vmatprep.subr.mxu0 0.0
    %2973 = vmatpush2.xpose.msra.mxu0 0.0
    %2974 = vmatprep.subr.mxu0 0.0
    %2975 = vmatpush2.xpose.msra.mxu0 0.0
    %2976 = vmatprep.subr.mxu0 0.0
    %2977 = vmatpush2.xpose.msra.mxu0 0.0
    %2978 = vmatprep.subr.mxu0 0.0
    %2979 = vmatpush2.xpose.msra.mxu0 0.0
    %2980 = vmatprep.subr.mxu0 0.0
    %2981 = vmatpush2.xpose.msra.mxu0 0.0
    %2982 = vmatprep.subr.mxu0 0.0
    %2983 = vmatpush2.xpose.msra.mxu0 0.0
    %2984 = vmatprep.mubr.f32.mxu0 0.0
    %2985 = vmatmul.mubr.f32.gmra.mxu0 %v2916
    %v2986 = vpop.f32.mrf.mxu0
    %v2987 = vadd.f32 0.0, %v2986
    %v2988 = vpop.f32.mrf.mxu0
    %2989 = vdwg.mxu0
    %2990 = vrot.lane.b32.xlu0 %v2147, 112
    %v2991 = vpop.permute.xlu0 %2990
    %2992 = vrot.lane.b32.xlu0 %v2147, 80
    %v2993 = vpop.permute.xlu0 %2992
    %v2994 = vsel %vm254, %v2991, 0
    %v2996 = vsel %vm254, %v2993, 0
    %2998 = vmatprep.subr.mxu0 0.0
    %2999 = vmatpush1.xpose.msra.mxu0 0.0
    %3000 = vmatprep.subr.mxu0 0.0
    %3001 = vmatpush1.xpose.msra.mxu0 0.0
    %3002 = vmatprep.subr.mxu0 0.0
    %3003 = vmatpush1.xpose.msra.mxu0 0.0
    %3004 = vmatprep.subr.mxu0 0.0
    %3005 = vmatpush1.xpose.msra.mxu0 0.0
    %3006 = vmatprep.subr.mxu0 0.0
    %3007 = vmatpush1.xpose.msra.mxu0 0.0
    %3008 = vmatprep.subr.mxu0 0.0
    %3009 = vmatpush1.xpose.msra.mxu0 0.0
    %3010 = vmatprep.subr.mxu0 0.0
    %3011 = vmatpush1.xpose.msra.mxu0 0.0
    %3012 = vmatprep.subr.mxu0 0.0
    %3013 = vmatpush1.xpose.msra.mxu0 0.0
    %3014 = vmatprep.subr.mxu0 0.0
    %3015 = vmatpush1.xpose.msra.mxu0 0.0
    %3016 = vmatprep.subr.mxu0 0.0
    %3017 = vmatpush1.xpose.msra.mxu0 0.0
    %3018 = vmatprep.subr.mxu0 0.0
    %3019 = vmatpush1.xpose.msra.mxu0 0.0
    %3020 = vmatprep.subr.mxu0 0.0
    %3021 = vmatpush1.xpose.msra.mxu0 0.0
    %3022 = vmatprep.subr.mxu0 0.0
    %3023 = vmatpush1.xpose.msra.mxu0 0.0
    %3024 = vmatprep.subr.mxu0 0.0
    %3025 = vmatpush1.xpose.msra.mxu0 0.0
    %3026 = vmatprep.subr.mxu0 0.0
    %3027 = vmatpush1.xpose.msra.mxu0 0.0
    %3028 = vmatprep.subr.mxu0 0.0
    %3029 = vmatpush1.xpose.msra.mxu0 %v2996
    %3030 = vmatprep.subr.mxu0 0.0
    %3031 = vmatpush2.xpose.msra.mxu0 0.0
    %3032 = vmatprep.subr.mxu0 0.0
    %3033 = vmatpush2.xpose.msra.mxu0 0.0
    %3034 = vmatprep.subr.mxu0 0.0
    %3035 = vmatpush2.xpose.msra.mxu0 0.0
    %3036 = vmatprep.subr.mxu0 0.0
    %3037 = vmatpush2.xpose.msra.mxu0 0.0
    %3038 = vmatprep.subr.mxu0 0.0
    %3039 = vmatpush2.xpose.msra.mxu0 0.0
    %3040 = vmatprep.subr.mxu0 0.0
    %3041 = vmatpush2.xpose.msra.mxu0 0.0
    %3042 = vmatprep.subr.mxu0 0.0
    %3043 = vmatpush2.xpose.msra.mxu0 0.0
    %3044 = vmatprep.subr.mxu0 0.0
    %3045 = vmatpush2.xpose.msra.mxu0 0.0
    %3046 = vmatprep.subr.mxu0 0.0
    %3047 = vmatpush2.xpose.msra.mxu0 0.0
    %3048 = vmatprep.subr.mxu0 0.0
    %3049 = vmatpush2.xpose.msra.mxu0 0.0
    %3050 = vmatprep.subr.mxu0 0.0
    %3051 = vmatpush2.xpose.msra.mxu0 0.0
    %3052 = vmatprep.subr.mxu0 0.0
    %3053 = vmatpush2.xpose.msra.mxu0 0.0
    %3054 = vmatprep.subr.mxu0 0.0
    %3055 = vmatpush2.xpose.msra.mxu0 0.0
    %3056 = vmatprep.subr.mxu0 0.0
    %3057 = vmatpush2.xpose.msra.mxu0 0.0
    %3058 = vmatprep.subr.mxu0 0.0
    %3059 = vmatpush2.xpose.msra.mxu0 0.0
    %3060 = vmatprep.subr.mxu0 0.0
    %3061 = vmatpush2.xpose.msra.mxu0 0.0
    %3062 = vmatprep.mubr.f32.mxu0 0.0
    %3063 = vmatmul.mubr.f32.gmra.mxu0 %v2994
    %v3064 = vpop.f32.mrf.mxu0
    %v3065 = vadd.f32 0.0, %v3064
    %v3066 = vpop.f32.mrf.mxu0
    %3067 = vdwg.mxu0
    %v3068 = vmul.f32 %v2987, 0.35355338
    %v3069 = vmul.f32 %v3065, 0.35355338
    %v3070 = vadd.f32 %v3068, %v434
    %v3071 = vadd.f32 %v3069, %v438
    %v3072 = vsel %vm254, %v3070, -inf
    %3073 = vmax.xlane.f32.xlu0 %v3072
    %v3074 = vpop.xlane.xlu0 %3073
    %v3075 = vsel %vm254, %v3071, -inf
    %3076 = vmax.xlane.f32.xlu0 %v3075
    %v3077 = vpop.xlane.xlu0 %3076
    %v3078 = vsub.f32 %v3070, %v3074
    %v3079 = vsub.f32 %v3071, %v3077
    %v3080 = vmul.f32 %v3078, 1.442695
    %v3081 = vpow.pop %v3080
    %v3082 = vmul.f32 %v3079, 1.442695
    %v3083 = vpow.pop %v3082
    %v3084 = vsel %vm254, %v3081, 0.0
    %3085 = vadd.xlane.f32.xlu0 %v3084
    %v3086 = vpop.xlane.xlu0 %3085
    %v3087 = vsel %vm254, %v3083, 0.0
    %3088 = vadd.xlane.f32.xlu0 %v3087
    %v3089 = vpop.xlane.xlu0 %3088
    %v3090 = vrcp.pop %v3086
    %v3091 = vmul.f32 %v3081, %v3090
    %v3092 = vrcp.pop %v3089
    %v3093 = vmul.f32 %v3083, %v3092
    %3094 = vrot.lane.b32.xlu0 %v2144, 48
    %v3095 = vpop.permute.xlu0 %3094
    %v3098 = vsel %vm254, %v3091, 0
    %3100 = vmatprep.subr.mxu0 0.0
    %3101 = vmatpush1.msra.mxu0 0.0
    %3102 = vmatprep.subr.mxu0 0.0
    %3103 = vmatpush1.msra.mxu0 0.0
    %3104 = vmatprep.subr.mxu0 0.0
    %3105 = vmatpush1.msra.mxu0 0.0
    %3106 = vmatprep.subr.mxu0 0.0
    %3107 = vmatpush1.msra.mxu0 0.0
    %3108 = vmatprep.subr.mxu0 0.0
    %3109 = vmatpush1.msra.mxu0 0.0
    %3110 = vmatprep.subr.mxu0 0.0
    %3111 = vmatpush1.msra.mxu0 0.0
    %3112 = vmatprep.subr.mxu0 0.0
    %3113 = vmatpush1.msra.mxu0 0.0
    %3114 = vmatprep.subr.mxu0 0.0
    %3115 = vmatpush1.msra.mxu0 0.0
    %3116 = vmatprep.subr.mxu0 0.0
    %3117 = vmatpush1.msra.mxu0 0.0
    %3118 = vmatprep.subr.mxu0 0.0
    %3119 = vmatpush1.msra.mxu0 0.0
    %3120 = vmatprep.subr.mxu0 0.0
    %3121 = vmatpush1.msra.mxu0 0.0
    %3122 = vmatprep.subr.mxu0 0.0
    %3123 = vmatpush1.msra.mxu0 0.0
    %3124 = vmatprep.subr.mxu0 0.0
    %3125 = vmatpush1.msra.mxu0 0.0
    %3126 = vmatprep.subr.mxu0 0.0
    %3127 = vmatpush1.msra.mxu0 0.0
    %3128 = vmatprep.subr.mxu0 0.0
    %3129 = vmatpush1.msra.mxu0 0.0
    %3130 = vmatprep.subr.mxu0 0.0
    %3131 = vmatpush1.msra.mxu0 %v3095
    %3132 = vmatprep.subr.mxu0 0.0
    %3133 = vmatpush2.msra.mxu0 0.0
    %3134 = vmatprep.subr.mxu0 0.0
    %3135 = vmatpush2.msra.mxu0 0.0
    %3136 = vmatprep.subr.mxu0 0.0
    %3137 = vmatpush2.msra.mxu0 0.0
    %3138 = vmatprep.subr.mxu0 0.0
    %3139 = vmatpush2.msra.mxu0 0.0
    %3140 = vmatprep.subr.mxu0 0.0
    %3141 = vmatpush2.msra.mxu0 0.0
    %3142 = vmatprep.subr.mxu0 0.0
    %3143 = vmatpush2.msra.mxu0 0.0
    %3144 = vmatprep.subr.mxu0 0.0
    %3145 = vmatpush2.msra.mxu0 0.0
    %3146 = vmatprep.subr.mxu0 0.0
    %3147 = vmatpush2.msra.mxu0 0.0
    %3148 = vmatprep.subr.mxu0 0.0
    %3149 = vmatpush2.msra.mxu0 0.0
    %3150 = vmatprep.subr.mxu0 0.0
    %3151 = vmatpush2.msra.mxu0 0.0
    %3152 = vmatprep.subr.mxu0 0.0
    %3153 = vmatpush2.msra.mxu0 0.0
    %3154 = vmatprep.subr.mxu0 0.0
    %3155 = vmatpush2.msra.mxu0 0.0
    %3156 = vmatprep.subr.mxu0 0.0
    %3157 = vmatpush2.msra.mxu0 0.0
    %3158 = vmatprep.subr.mxu0 0.0
    %3159 = vmatpush2.msra.mxu0 0.0
    %3160 = vmatprep.subr.mxu0 0.0
    %3161 = vmatpush2.msra.mxu0 0.0
    %3162 = vmatprep.subr.mxu0 0.0
    %3163 = vmatpush2.msra.mxu0 0.0
    %3164 = vmatprep.mubr.f32.mxu0 0.0
    %3165 = vmatmul.mubr.f32.gmra.mxu0 %v3098
    %v3166 = vpop.f32.mrf.mxu0
    %v3167 = vadd.f32 0.0, %v3166
    %v3168 = vpop.f32.mrf.mxu0
    %3169 = vdwg.mxu0
    %3170 = vrot.lane.b32.xlu0 %v2147, 48
    %v3171 = vpop.permute.xlu0 %3170
    %v3174 = vsel %vm254, %v3093, 0
    %3176 = vmatprep.subr.mxu0 0.0
    %3177 = vmatpush1.msra.mxu0 0.0
    %3178 = vmatprep.subr.mxu0 0.0
    %3179 = vmatpush1.msra.mxu0 0.0
    %3180 = vmatprep.subr.mxu0 0.0
    %3181 = vmatpush1.msra.mxu0 0.0
    %3182 = vmatprep.subr.mxu0 0.0
    %3183 = vmatpush1.msra.mxu0 0.0
    %3184 = vmatprep.subr.mxu0 0.0
    %3185 = vmatpush1.msra.mxu0 0.0
    %3186 = vmatprep.subr.mxu0 0.0
    %3187 = vmatpush1.msra.mxu0 0.0
    %3188 = vmatprep.subr.mxu0 0.0
    %3189 = vmatpush1.msra.mxu0 0.0
    %3190 = vmatprep.subr.mxu0 0.0
    %3191 = vmatpush1.msra.mxu0 0.0
    %3192 = vmatprep.subr.mxu0 0.0
    %3193 = vmatpush1.msra.mxu0 0.0
    %3194 = vmatprep.subr.mxu0 0.0
    %3195 = vmatpush1.msra.mxu0 0.0
    %3196 = vmatprep.subr.mxu0 0.0
    %3197 = vmatpush1.msra.mxu0 0.0
    %3198 = vmatprep.subr.mxu0 0.0
    %3199 = vmatpush1.msra.mxu0 0.0
    %3200 = vmatprep.subr.mxu0 0.0
    %3201 = vmatpush1.msra.mxu0 0.0
    %3202 = vmatprep.subr.mxu0 0.0
    %3203 = vmatpush1.msra.mxu0 0.0
    %3204 = vmatprep.subr.mxu0 0.0
    %3205 = vmatpush1.msra.mxu0 0.0
    %3206 = vmatprep.subr.mxu0 0.0
    %3207 = vmatpush1.msra.mxu0 %v3171
    %3208 = vmatprep.subr.mxu0 0.0
    %3209 = vmatpush2.msra.mxu0 0.0
    %3210 = vmatprep.subr.mxu0 0.0
    %3211 = vmatpush2.msra.mxu0 0.0
    %3212 = vmatprep.subr.mxu0 0.0
    %3213 = vmatpush2.msra.mxu0 0.0
    %3214 = vmatprep.subr.mxu0 0.0
    %3215 = vmatpush2.msra.mxu0 0.0
    %3216 = vmatprep.subr.mxu0 0.0
    %3217 = vmatpush2.msra.mxu0 0.0
    %3218 = vmatprep.subr.mxu0 0.0
    %3219 = vmatpush2.msra.mxu0 0.0
    %3220 = vmatprep.subr.mxu0 0.0
    %3221 = vmatpush2.msra.mxu0 0.0
    %3222 = vmatprep.subr.mxu0 0.0
    %3223 = vmatpush2.msra.mxu0 0.0
    %3224 = vmatprep.subr.mxu0 0.0
    %3225 = vmatpush2.msra.mxu0 0.0
    %3226 = vmatprep.subr.mxu0 0.0
    %3227 = vmatpush2.msra.mxu0 0.0
    %3228 = vmatprep.subr.mxu0 0.0
    %3229 = vmatpush2.msra.mxu0 0.0
    %3230 = vmatprep.subr.mxu0 0.0
    %3231 = vmatpush2.msra.mxu0 0.0
    %3232 = vmatprep.subr.mxu0 0.0
    %3233 = vmatpush2.msra.mxu0 0.0
    %3234 = vmatprep.subr.mxu0 0.0
    %3235 = vmatpush2.msra.mxu0 0.0
    %3236 = vmatprep.subr.mxu0 0.0
    %3237 = vmatpush2.msra.mxu0 0.0
    %3238 = vmatprep.subr.mxu0 0.0
    %3239 = vmatpush2.msra.mxu0 0.0
    %3240 = vmatprep.mubr.f32.mxu0 0.0
    %3241 = vmatmul.mubr.f32.gmra.mxu0 %v3174
    %v3242 = vpop.f32.mrf.mxu0
    %v3243 = vadd.f32 0.0, %v3242
    %v3244 = vpop.f32.mrf.mxu0
    %3245 = vdwg.mxu0
    %v3246 = vpack.c.bf16 %v3243, %v3167
    %v3248 = vsel %vm254, %v3246, 0
    %v3251 = vsel %vm956, %v2067, 0
    %3253 = vmatprep.subr.bf16.mxu0 0
    %3254 = vmatpush1.bf16.msra.mxu0 0
    %3255 = vmatprep.subr.bf16.mxu0 0
    %3256 = vmatpush1.bf16.msra.mxu0 0
    %3257 = vmatprep.subr.bf16.mxu0 0
    %3258 = vmatpush1.bf16.msra.mxu0 0
    %3259 = vmatprep.subr.bf16.mxu0 0
    %3260 = vmatpush1.bf16.msra.mxu0 0
    %3261 = vmatprep.subr.bf16.mxu0 0
    %3262 = vmatpush1.bf16.msra.mxu0 0
    %3263 = vmatprep.subr.bf16.mxu0 0
    %3264 = vmatpush1.bf16.msra.mxu0 0
    %3265 = vmatprep.subr.bf16.mxu0 0
    %3266 = vmatpush1.bf16.msra.mxu0 0
    %3267 = vmatprep.subr.bf16.mxu0 0
    %3268 = vmatpush1.bf16.msra.mxu0 %v3251
    %3269 = vmatprep.subr.bf16.mxu0 0
    %3270 = vmatpush2.bf16.msra.mxu0 0
    %3271 = vmatprep.subr.bf16.mxu0 0
    %3272 = vmatpush2.bf16.msra.mxu0 0
    %3273 = vmatprep.subr.bf16.mxu0 0
    %3274 = vmatpush2.bf16.msra.mxu0 0
    %3275 = vmatprep.subr.bf16.mxu0 0
    %3276 = vmatpush2.bf16.msra.mxu0 0
    %3277 = vmatprep.subr.bf16.mxu0 0
    %3278 = vmatpush2.bf16.msra.mxu0 0
    %3279 = vmatprep.subr.bf16.mxu0 0
    %3280 = vmatpush2.bf16.msra.mxu0 0
    %3281 = vmatprep.subr.bf16.mxu0 0
    %3282 = vmatpush2.bf16.msra.mxu0 0
    %3283 = vmatprep.subr.bf16.mxu0 0
    %3284 = vmatpush2.bf16.msra.mxu0 0
    %3285 = vmatprep.mubr.bf16.mxu0 0
    %3286 = vmatmul.mubr.bf16.gmra.mxu0 %v3248
    %v3287 = vpop.f32.mrf.mxu0
    %v3288 = vadd.f32 0.0, %v3287
    %v3289 = vpop.f32.mrf.mxu0
    %v3290 = vpop.f32.mrf.mxu0
    %v3291 = vadd.f32 0.0, %v3290
    %v3292 = vpop.f32.mrf.mxu0
    %3293 = vdwg.mxu0
    %v3294 = vadd.f32 %v2906, %v3288
    %v3295 = vadd.f32 %v2909, %v3291
    %3296 = vrot.lane.b32.xlu0 %v2144, 104
    %v3297 = vpop.permute.xlu0 %3296
    %3298 = vrot.lane.b32.xlu0 %v2144, 72
    %v3299 = vpop.permute.xlu0 %3298
    %v3300 = vsel %vm254, %v3297, 0
    %v3302 = vsel %vm254, %v3299, 0
    %3304 = vmatprep.subr.mxu0 0.0
    %3305 = vmatpush1.xpose.msra.mxu0 0.0
    %3306 = vmatprep.subr.mxu0 0.0
    %3307 = vmatpush1.xpose.msra.mxu0 0.0
    %3308 = vmatprep.subr.mxu0 0.0
    %3309 = vmatpush1.xpose.msra.mxu0 0.0
    %3310 = vmatprep.subr.mxu0 0.0
    %3311 = vmatpush1.xpose.msra.mxu0 0.0
    %3312 = vmatprep.subr.mxu0 0.0
    %3313 = vmatpush1.xpose.msra.mxu0 0.0
    %3314 = vmatprep.subr.mxu0 0.0
    %3315 = vmatpush1.xpose.msra.mxu0 0.0
    %3316 = vmatprep.subr.mxu0 0.0
    %3317 = vmatpush1.xpose.msra.mxu0 0.0
    %3318 = vmatprep.subr.mxu0 0.0
    %3319 = vmatpush1.xpose.msra.mxu0 0.0
    %3320 = vmatprep.subr.mxu0 0.0
    %3321 = vmatpush1.xpose.msra.mxu0 0.0
    %3322 = vmatprep.subr.mxu0 0.0
    %3323 = vmatpush1.xpose.msra.mxu0 0.0
    %3324 = vmatprep.subr.mxu0 0.0
    %3325 = vmatpush1.xpose.msra.mxu0 0.0
    %3326 = vmatprep.subr.mxu0 0.0
    %3327 = vmatpush1.xpose.msra.mxu0 0.0
    %3328 = vmatprep.subr.mxu0 0.0
    %3329 = vmatpush1.xpose.msra.mxu0 0.0
    %3330 = vmatprep.subr.mxu0 0.0
    %3331 = vmatpush1.xpose.msra.mxu0 0.0
    %3332 = vmatprep.subr.mxu0 0.0
    %3333 = vmatpush1.xpose.msra.mxu0 0.0
    %3334 = vmatprep.subr.mxu0 0.0
    %3335 = vmatpush1.xpose.msra.mxu0 %v3302
    %3336 = vmatprep.subr.mxu0 0.0
    %3337 = vmatpush2.xpose.msra.mxu0 0.0
    %3338 = vmatprep.subr.mxu0 0.0
    %3339 = vmatpush2.xpose.msra.mxu0 0.0
    %3340 = vmatprep.subr.mxu0 0.0
    %3341 = vmatpush2.xpose.msra.mxu0 0.0
    %3342 = vmatprep.subr.mxu0 0.0
    %3343 = vmatpush2.xpose.msra.mxu0 0.0
    %3344 = vmatprep.subr.mxu0 0.0
    %3345 = vmatpush2.xpose.msra.mxu0 0.0
    %3346 = vmatprep.subr.mxu0 0.0
    %3347 = vmatpush2.xpose.msra.mxu0 0.0
    %3348 = vmatprep.subr.mxu0 0.0
    %3349 = vmatpush2.xpose.msra.mxu0 0.0
    %3350 = vmatprep.subr.mxu0 0.0
    %3351 = vmatpush2.xpose.msra.mxu0 0.0
    %3352 = vmatprep.subr.mxu0 0.0
    %3353 = vmatpush2.xpose.msra.mxu0 0.0
    %3354 = vmatprep.subr.mxu0 0.0
    %3355 = vmatpush2.xpose.msra.mxu0 0.0
    %3356 = vmatprep.subr.mxu0 0.0
    %3357 = vmatpush2.xpose.msra.mxu0 0.0
    %3358 = vmatprep.subr.mxu0 0.0
    %3359 = vmatpush2.xpose.msra.mxu0 0.0
    %3360 = vmatprep.subr.mxu0 0.0
    %3361 = vmatpush2.xpose.msra.mxu0 0.0
    %3362 = vmatprep.subr.mxu0 0.0
    %3363 = vmatpush2.xpose.msra.mxu0 0.0
    %3364 = vmatprep.subr.mxu0 0.0
    %3365 = vmatpush2.xpose.msra.mxu0 0.0
    %3366 = vmatprep.subr.mxu0 0.0
    %3367 = vmatpush2.xpose.msra.mxu0 0.0
    %3368 = vmatprep.mubr.f32.mxu0 0.0
    %3369 = vmatmul.mubr.f32.gmra.mxu0 %v3300
    %v3370 = vpop.f32.mrf.mxu0
    %v3371 = vadd.f32 0.0, %v3370
    %v3372 = vpop.f32.mrf.mxu0
    %3373 = vdwg.mxu0
    %3374 = vrot.lane.b32.xlu0 %v2147, 104
    %v3375 = vpop.permute.xlu0 %3374
    %3376 = vrot.lane.b32.xlu0 %v2147, 72
    %v3377 = vpop.permute.xlu0 %3376
    %v3378 = vsel %vm254, %v3375, 0
    %v3380 = vsel %vm254, %v3377, 0
    %3382 = vmatprep.subr.mxu0 0.0
    %3383 = vmatpush1.xpose.msra.mxu0 0.0
    %3384 = vmatprep.subr.mxu0 0.0
    %3385 = vmatpush1.xpose.msra.mxu0 0.0
    %3386 = vmatprep.subr.mxu0 0.0
    %3387 = vmatpush1.xpose.msra.mxu0 0.0
    %3388 = vmatprep.subr.mxu0 0.0
    %3389 = vmatpush1.xpose.msra.mxu0 0.0
    %3390 = vmatprep.subr.mxu0 0.0
    %3391 = vmatpush1.xpose.msra.mxu0 0.0
    %3392 = vmatprep.subr.mxu0 0.0
    %3393 = vmatpush1.xpose.msra.mxu0 0.0
    %3394 = vmatprep.subr.mxu0 0.0
    %3395 = vmatpush1.xpose.msra.mxu0 0.0
    %3396 = vmatprep.subr.mxu0 0.0
    %3397 = vmatpush1.xpose.msra.mxu0 0.0
    %3398 = vmatprep.subr.mxu0 0.0
    %3399 = vmatpush1.xpose.msra.mxu0 0.0
    %3400 = vmatprep.subr.mxu0 0.0
    %3401 = vmatpush1.xpose.msra.mxu0 0.0
    %3402 = vmatprep.subr.mxu0 0.0
    %3403 = vmatpush1.xpose.msra.mxu0 0.0
    %3404 = vmatprep.subr.mxu0 0.0
    %3405 = vmatpush1.xpose.msra.mxu0 0.0
    %3406 = vmatprep.subr.mxu0 0.0
    %3407 = vmatpush1.xpose.msra.mxu0 0.0
    %3408 = vmatprep.subr.mxu0 0.0
    %3409 = vmatpush1.xpose.msra.mxu0 0.0
    %3410 = vmatprep.subr.mxu0 0.0
    %3411 = vmatpush1.xpose.msra.mxu0 0.0
    %3412 = vmatprep.subr.mxu0 0.0
    %3413 = vmatpush1.xpose.msra.mxu0 %v3380
    %3414 = vmatprep.subr.mxu0 0.0
    %3415 = vmatpush2.xpose.msra.mxu0 0.0
    %3416 = vmatprep.subr.mxu0 0.0
    %3417 = vmatpush2.xpose.msra.mxu0 0.0
    %3418 = vmatprep.subr.mxu0 0.0
    %3419 = vmatpush2.xpose.msra.mxu0 0.0
    %3420 = vmatprep.subr.mxu0 0.0
    %3421 = vmatpush2.xpose.msra.mxu0 0.0
    %3422 = vmatprep.subr.mxu0 0.0
    %3423 = vmatpush2.xpose.msra.mxu0 0.0
    %3424 = vmatprep.subr.mxu0 0.0
    %3425 = vmatpush2.xpose.msra.mxu0 0.0
    %3426 = vmatprep.subr.mxu0 0.0
    %3427 = vmatpush2.xpose.msra.mxu0 0.0
    %3428 = vmatprep.subr.mxu0 0.0
    %3429 = vmatpush2.xpose.msra.mxu0 0.0
    %3430 = vmatprep.subr.mxu0 0.0
    %3431 = vmatpush2.xpose.msra.mxu0 0.0
    %3432 = vmatprep.subr.mxu0 0.0
    %3433 = vmatpush2.xpose.msra.mxu0 0.0
    %3434 = vmatprep.subr.mxu0 0.0
    %3435 = vmatpush2.xpose.msra.mxu0 0.0
    %3436 = vmatprep.subr.mxu0 0.0
    %3437 = vmatpush2.xpose.msra.mxu0 0.0
    %3438 = vmatprep.subr.mxu0 0.0
    %3439 = vmatpush2.xpose.msra.mxu0 0.0
    %3440 = vmatprep.subr.mxu0 0.0
    %3441 = vmatpush2.xpose.msra.mxu0 0.0
    %3442 = vmatprep.subr.mxu0 0.0
    %3443 = vmatpush2.xpose.msra.mxu0 0.0
    %3444 = vmatprep.subr.mxu0 0.0
    %3445 = vmatpush2.xpose.msra.mxu0 0.0
    %3446 = vmatprep.mubr.f32.mxu0 0.0
    %3447 = vmatmul.mubr.f32.gmra.mxu0 %v3378
    %v3448 = vpop.f32.mrf.mxu0
    %v3449 = vadd.f32 0.0, %v3448
    %v3450 = vpop.f32.mrf.mxu0
    %3451 = vdwg.mxu0
    %v3452 = vmul.f32 %v3371, 0.35355338
    %v3453 = vmul.f32 %v3449, 0.35355338
    %v3454 = vadd.f32 %v3452, %v434
    %v3455 = vadd.f32 %v3453, %v438
    %v3456 = vsel %vm254, %v3454, -inf
    %3457 = vmax.xlane.f32.xlu0 %v3456
    %v3458 = vpop.xlane.xlu0 %3457
    %v3459 = vsel %vm254, %v3455, -inf
    %3460 = vmax.xlane.f32.xlu0 %v3459
    %v3461 = vpop.xlane.xlu0 %3460
    %v3462 = vsub.f32 %v3454, %v3458
    %v3463 = vsub.f32 %v3455, %v3461
    %v3464 = vmul.f32 %v3462, 1.442695
    %v3465 = vpow.pop %v3464
    %v3466 = vmul.f32 %v3463, 1.442695
    %v3467 = vpow.pop %v3466
    %v3468 = vsel %vm254, %v3465, 0.0
    %3469 = vadd.xlane.f32.xlu0 %v3468
    %v3470 = vpop.xlane.xlu0 %3469
    %v3471 = vsel %vm254, %v3467, 0.0
    %3472 = vadd.xlane.f32.xlu0 %v3471
    %v3473 = vpop.xlane.xlu0 %3472
    %v3474 = vrcp.pop %v3470
    %v3475 = vmul.f32 %v3465, %v3474
    %v3476 = vrcp.pop %v3473
    %v3477 = vmul.f32 %v3467, %v3476
    %3478 = vrot.lane.b32.xlu0 %v2144, 40
    %v3479 = vpop.permute.xlu0 %3478
    %v3482 = vsel %vm254, %v3475, 0
    %3484 = vmatprep.subr.mxu0 0.0
    %3485 = vmatpush1.msra.mxu0 0.0
    %3486 = vmatprep.subr.mxu0 0.0
    %3487 = vmatpush1.msra.mxu0 0.0
    %3488 = vmatprep.subr.mxu0 0.0
    %3489 = vmatpush1.msra.mxu0 0.0
    %3490 = vmatprep.subr.mxu0 0.0
    %3491 = vmatpush1.msra.mxu0 0.0
    %3492 = vmatprep.subr.mxu0 0.0
    %3493 = vmatpush1.msra.mxu0 0.0
    %3494 = vmatprep.subr.mxu0 0.0
    %3495 = vmatpush1.msra.mxu0 0.0
    %3496 = vmatprep.subr.mxu0 0.0
    %3497 = vmatpush1.msra.mxu0 0.0
    %3498 = vmatprep.subr.mxu0 0.0
    %3499 = vmatpush1.msra.mxu0 0.0
    %3500 = vmatprep.subr.mxu0 0.0
    %3501 = vmatpush1.msra.mxu0 0.0
    %3502 = vmatprep.subr.mxu0 0.0
    %3503 = vmatpush1.msra.mxu0 0.0
    %3504 = vmatprep.subr.mxu0 0.0
    %3505 = vmatpush1.msra.mxu0 0.0
    %3506 = vmatprep.subr.mxu0 0.0
    %3507 = vmatpush1.msra.mxu0 0.0
    %3508 = vmatprep.subr.mxu0 0.0
    %3509 = vmatpush1.msra.mxu0 0.0
    %3510 = vmatprep.subr.mxu0 0.0
    %3511 = vmatpush1.msra.mxu0 0.0
    %3512 = vmatprep.subr.mxu0 0.0
    %3513 = vmatpush1.msra.mxu0 0.0
    %3514 = vmatprep.subr.mxu0 0.0
    %3515 = vmatpush1.msra.mxu0 %v3479
    %3516 = vmatprep.subr.mxu0 0.0
    %3517 = vmatpush2.msra.mxu0 0.0
    %3518 = vmatprep.subr.mxu0 0.0
    %3519 = vmatpush2.msra.mxu0 0.0
    %3520 = vmatprep.subr.mxu0 0.0
    %3521 = vmatpush2.msra.mxu0 0.0
    %3522 = vmatprep.subr.mxu0 0.0
    %3523 = vmatpush2.msra.mxu0 0.0
    %3524 = vmatprep.subr.mxu0 0.0
    %3525 = vmatpush2.msra.mxu0 0.0
    %3526 = vmatprep.subr.mxu0 0.0
    %3527 = vmatpush2.msra.mxu0 0.0
    %3528 = vmatprep.subr.mxu0 0.0
    %3529 = vmatpush2.msra.mxu0 0.0
    %3530 = vmatprep.subr.mxu0 0.0
    %3531 = vmatpush2.msra.mxu0 0.0
    %3532 = vmatprep.subr.mxu0 0.0
    %3533 = vmatpush2.msra.mxu0 0.0
    %3534 = vmatprep.subr.mxu0 0.0
    %3535 = vmatpush2.msra.mxu0 0.0
    %3536 = vmatprep.subr.mxu0 0.0
    %3537 = vmatpush2.msra.mxu0 0.0
    %3538 = vmatprep.subr.mxu0 0.0
    %3539 = vmatpush2.msra.mxu0 0.0
    %3540 = vmatprep.subr.mxu0 0.0
    %3541 = vmatpush2.msra.mxu0 0.0
    %3542 = vmatprep.subr.mxu0 0.0
    %3543 = vmatpush2.msra.mxu0 0.0
    %3544 = vmatprep.subr.mxu0 0.0
    %3545 = vmatpush2.msra.mxu0 0.0
    %3546 = vmatprep.subr.mxu0 0.0
    %3547 = vmatpush2.msra.mxu0 0.0
    %3548 = vmatprep.mubr.f32.mxu0 0.0
    %3549 = vmatmul.mubr.f32.gmra.mxu0 %v3482
    %v3550 = vpop.f32.mrf.mxu0
    %v3551 = vadd.f32 0.0, %v3550
    %v3552 = vpop.f32.mrf.mxu0
    %3553 = vdwg.mxu0
    %3554 = vrot.lane.b32.xlu0 %v2147, 40
    %v3555 = vpop.permute.xlu0 %3554
    %v3558 = vsel %vm254, %v3477, 0
    %3560 = vmatprep.subr.mxu0 0.0
    %3561 = vmatpush1.msra.mxu0 0.0
    %3562 = vmatprep.subr.mxu0 0.0
    %3563 = vmatpush1.msra.mxu0 0.0
    %3564 = vmatprep.subr.mxu0 0.0
    %3565 = vmatpush1.msra.mxu0 0.0
    %3566 = vmatprep.subr.mxu0 0.0
    %3567 = vmatpush1.msra.mxu0 0.0
    %3568 = vmatprep.subr.mxu0 0.0
    %3569 = vmatpush1.msra.mxu0 0.0
    %3570 = vmatprep.subr.mxu0 0.0
    %3571 = vmatpush1.msra.mxu0 0.0
    %3572 = vmatprep.subr.mxu0 0.0
    %3573 = vmatpush1.msra.mxu0 0.0
    %3574 = vmatprep.subr.mxu0 0.0
    %3575 = vmatpush1.msra.mxu0 0.0
    %3576 = vmatprep.subr.mxu0 0.0
    %3577 = vmatpush1.msra.mxu0 0.0
    %3578 = vmatprep.subr.mxu0 0.0
    %3579 = vmatpush1.msra.mxu0 0.0
    %3580 = vmatprep.subr.mxu0 0.0
    %3581 = vmatpush1.msra.mxu0 0.0
    %3582 = vmatprep.subr.mxu0 0.0
    %3583 = vmatpush1.msra.mxu0 0.0
    %3584 = vmatprep.subr.mxu0 0.0
    %3585 = vmatpush1.msra.mxu0 0.0
    %3586 = vmatprep.subr.mxu0 0.0
    %3587 = vmatpush1.msra.mxu0 0.0
    %3588 = vmatprep.subr.mxu0 0.0
    %3589 = vmatpush1.msra.mxu0 0.0
    %3590 = vmatprep.subr.mxu0 0.0
    %3591 = vmatpush1.msra.mxu0 %v3555
    %3592 = vmatprep.subr.mxu0 0.0
    %3593 = vmatpush2.msra.mxu0 0.0
    %3594 = vmatprep.subr.mxu0 0.0
    %3595 = vmatpush2.msra.mxu0 0.0
    %3596 = vmatprep.subr.mxu0 0.0
    %3597 = vmatpush2.msra.mxu0 0.0
    %3598 = vmatprep.subr.mxu0 0.0
    %3599 = vmatpush2.msra.mxu0 0.0
    %3600 = vmatprep.subr.mxu0 0.0
    %3601 = vmatpush2.msra.mxu0 0.0
    %3602 = vmatprep.subr.mxu0 0.0
    %3603 = vmatpush2.msra.mxu0 0.0
    %3604 = vmatprep.subr.mxu0 0.0
    %3605 = vmatpush2.msra.mxu0 0.0
    %3606 = vmatprep.subr.mxu0 0.0
    %3607 = vmatpush2.msra.mxu0 0.0
    %3608 = vmatprep.subr.mxu0 0.0
    %3609 = vmatpush2.msra.mxu0 0.0
    %3610 = vmatprep.subr.mxu0 0.0
    %3611 = vmatpush2.msra.mxu0 0.0
    %3612 = vmatprep.subr.mxu0 0.0
    %3613 = vmatpush2.msra.mxu0 0.0
    %3614 = vmatprep.subr.mxu0 0.0
    %3615 = vmatpush2.msra.mxu0 0.0
    %3616 = vmatprep.subr.mxu0 0.0
    %3617 = vmatpush2.msra.mxu0 0.0
    %3618 = vmatprep.subr.mxu0 0.0
    %3619 = vmatpush2.msra.mxu0 0.0
    %3620 = vmatprep.subr.mxu0 0.0
    %3621 = vmatpush2.msra.mxu0 0.0
    %3622 = vmatprep.subr.mxu0 0.0
    %3623 = vmatpush2.msra.mxu0 0.0
    %3624 = vmatprep.mubr.f32.mxu0 0.0
    %3625 = vmatmul.mubr.f32.gmra.mxu0 %v3558
    %v3626 = vpop.f32.mrf.mxu0
    %v3627 = vadd.f32 0.0, %v3626
    %v3628 = vpop.f32.mrf.mxu0
    %3629 = vdwg.mxu0
    %v3630 = vpack.c.bf16 %v3627, %v3551
    %v3632 = vsel %vm254, %v3630, 0
    %v3635 = vsel %vm956, %v2068, 0
    %3637 = vmatprep.subr.bf16.mxu0 0
    %3638 = vmatpush1.bf16.msra.mxu0 0
    %3639 = vmatprep.subr.bf16.mxu0 0
    %3640 = vmatpush1.bf16.msra.mxu0 0
    %3641 = vmatprep.subr.bf16.mxu0 0
    %3642 = vmatpush1.bf16.msra.mxu0 0
    %3643 = vmatprep.subr.bf16.mxu0 0
    %3644 = vmatpush1.bf16.msra.mxu0 0
    %3645 = vmatprep.subr.bf16.mxu0 0
    %3646 = vmatpush1.bf16.msra.mxu0 0
    %3647 = vmatprep.subr.bf16.mxu0 0
    %3648 = vmatpush1.bf16.msra.mxu0 0
    %3649 = vmatprep.subr.bf16.mxu0 0
    %3650 = vmatpush1.bf16.msra.mxu0 0
    %3651 = vmatprep.subr.bf16.mxu0 0
    %3652 = vmatpush1.bf16.msra.mxu0 %v3635
    %3653 = vmatprep.subr.bf16.mxu0 0
    %3654 = vmatpush2.bf16.msra.mxu0 0
    %3655 = vmatprep.subr.bf16.mxu0 0
    %3656 = vmatpush2.bf16.msra.mxu0 0
    %3657 = vmatprep.subr.bf16.mxu0 0
    %3658 = vmatpush2.bf16.msra.mxu0 0
    %3659 = vmatprep.subr.bf16.mxu0 0
    %3660 = vmatpush2.bf16.msra.mxu0 0
    %3661 = vmatprep.subr.bf16.mxu0 0
    %3662 = vmatpush2.bf16.msra.mxu0 0
    %3663 = vmatprep.subr.bf16.mxu0 0
    %3664 = vmatpush2.bf16.msra.mxu0 0
    %3665 = vmatprep.subr.bf16.mxu0 0
    %3666 = vmatpush2.bf16.msra.mxu0 0
    %3667 = vmatprep.subr.bf16.mxu0 0
    %3668 = vmatpush2.bf16.msra.mxu0 0
    %3669 = vmatprep.mubr.bf16.mxu0 0
    %3670 = vmatmul.mubr.bf16.gmra.mxu0 %v3632
    %v3671 = vpop.f32.mrf.mxu0
    %v3672 = vadd.f32 0.0, %v3671
    %v3673 = vpop.f32.mrf.mxu0
    %v3674 = vpop.f32.mrf.mxu0
    %v3675 = vadd.f32 0.0, %v3674
    %v3676 = vpop.f32.mrf.mxu0
    %3677 = vdwg.mxu0
    %v3678 = vadd.f32 %v3294, %v3672
    %v3679 = vadd.f32 %v3295, %v3675
    %v3680 = vlaneseq
    %v3681 = vshrl.u32 %v3680, 7
    %v3682 = vsub.s32 0, %v3681
    %v3683 = vrot.slane %v2086, %v3682
    %v3684 = vadd.f32 %v3678, %v3683
    %v3685 = vadd.f32 %v3679, %v3683
    %v3686 = vadd.f32 %v3684, %v2055
    %v3687 = vadd.f32 %v3685, %v2056
    %v3688 = vsel %vm124, %v3686, 0.0
    %3689 = vadd.xlane.f32.xlu0 %v3688
    %v3690 = vpop.xlane.xlu0 %3689
    %v3691 = vsel %vm124, %v3687, 0.0
    %3692 = vadd.xlane.f32.xlu0 %v3691
    %v3693 = vpop.xlane.xlu0 %3692
    %v3694 = vmul.f32 %v3690, %v131
    %v3695 = vmul.f32 %v3693, %v131
    %v3696 = vsub.f32 %v3686, %v3694
    %v3697 = vsub.f32 %v3687, %v3695
    %v3698 = vmul.f32 %v3696, %v3696
    %v3699 = vmul.f32 %v3697, %v3697
    %v3700 = vsel %vm124, %v3698, 0.0
    %3701 = vadd.xlane.f32.xlu0 %v3700
    %v3702 = vpop.xlane.xlu0 %3701
    %v3703 = vsel %vm124, %v3699, 0.0
    %3704 = vadd.xlane.f32.xlu0 %v3703
    %v3705 = vpop.xlane.xlu0 %3704
    %v3706 = vmul.f32 %v3702, %v131
    %v3707 = vmul.f32 %v3705, %v131
    %v3708 = vadd.f32 %v3706, 1e-12
    %v3709 = vadd.f32 %v3707, 1e-12
    %v3710 = vrsqrt.pop %v3708
    %v3711 = vrsqrt.pop %v3709
    %v3712 = vmul.f32 %v3696, %v3710
    %v3713 = vmul.f32 %v3697, %v3711
    %v3714 = vlaneseq
    %v3715 = vshrl.u32 %v3714, 7
    %v3716 = vsub.s32 1, %v3715
    %v3717 = vrot.slane %v2086, %v3716
    %v3718 = vmul.f32 %v3712, %v3717
    %v3719 = vmul.f32 %v3713, %v3717
    %v3720 = vlaneseq
    %v3721 = vshrl.u32 %v3720, 7
    %v3722 = vsub.s32 2, %v3721
    %v3723 = vrot.slane %v2086, %v3722
    %v3724 = vadd.f32 %v3718, %v3723
    %v3725 = vadd.f32 %v3719, %v3723
    %v3726 = vpack.c.bf16 %v3725, %v3724
    %v3728 = vlaneseq
    %v3729 = vshrl.u32 %v3728, 7
    %v3730 = vsub.s32 0, %v3729
    %v3731 = vrot.slane %v2075, %v3730
    %v3737 = vunpack.c.l.b16 %v2070
    %v3738 = vunpack.c.l.b16 %v2071
    %v3739 = vunpack.c.l.b16 %v2072
    %v3740 = vunpack.c.l.b16 %v2073
    %v3741 = vpack.c.b16 %v3738, %v3737
    %v3742 = vpack.c.b16 %v3740, %v3739
    %v3746 = vsel %vm124, %v3726, 0
    %3748 = vmatprep.subr.bf16.mxu0 0
    %3749 = vmatpush1.bf16.msra.mxu0 0
    %3750 = vmatprep.subr.bf16.mxu0 0
    %3751 = vmatpush1.bf16.msra.mxu0 0
    %3752 = vmatprep.subr.bf16.mxu0 0
    %3753 = vmatpush1.bf16.msra.mxu0 0
    %3754 = vmatprep.subr.bf16.mxu0 0
    %3755 = vmatpush1.bf16.msra.mxu0 0
    %3756 = vmatprep.subr.bf16.mxu0 0
    %3757 = vmatpush1.bf16.msra.mxu0 0
    %3758 = vmatprep.subr.bf16.mxu0 0
    %3759 = vmatpush1.bf16.msra.mxu0 0
    %3760 = vmatprep.subr.bf16.mxu0 0
    %3761 = vmatpush1.bf16.msra.mxu0 %v3742
    %3762 = vmatprep.subr.bf16.mxu0 0
    %3763 = vmatpush1.bf16.msra.mxu0 %v3741
    %3764 = vmatprep.subr.bf16.mxu0 0
    %3765 = vmatpush2.bf16.msra.mxu0 0
    %3766 = vmatprep.subr.bf16.mxu0 0
    %3767 = vmatpush2.bf16.msra.mxu0 0
    %3768 = vmatprep.subr.bf16.mxu0 0
    %3769 = vmatpush2.bf16.msra.mxu0 0
    %3770 = vmatprep.subr.bf16.mxu0 0
    %3771 = vmatpush2.bf16.msra.mxu0 0
    %3772 = vmatprep.subr.bf16.mxu0 0
    %3773 = vmatpush2.bf16.msra.mxu0 0
    %3774 = vmatprep.subr.bf16.mxu0 0
    %3775 = vmatpush2.bf16.msra.mxu0 0
    %3776 = vmatprep.subr.bf16.mxu0 0
    %3777 = vmatpush2.bf16.msra.mxu0 0
    %3778 = vmatprep.subr.bf16.mxu0 0
    %3779 = vmatpush2.bf16.msra.mxu0 0
    %3780 = vmatprep.mubr.bf16.mxu0 0
    %3781 = vmatmul.mubr.bf16.gmra.mxu0 %v3746
    %v3782 = vpop.f32.mrf.mxu0
    %v3783 = vadd.f32 %v3731, %v3782
    %v3784 = vpop.f32.mrf.mxu0
    %v3785 = vpop.f32.mrf.mxu0
    %v3786 = vadd.f32 %v3731, %v3785
    %v3787 = vpop.f32.mrf.mxu0
    %3788 = vdwg.mxu0
    %v3789 = vmul.f32 %v3783, %v3783
    %v3790 = vmul.f32 %v3786, %v3786
    %v3791 = vmul.f32 %v3783, %v3789
    %v3792 = vmul.f32 %v3786, %v3790
    %v3793 = vmul.f32 %v3791, 0.044715
    %v3794 = vmul.f32 %v3792, 0.044715
    %v3795 = vadd.f32 %v3783, %v3793
    %v3796 = vadd.f32 %v3786, %v3794
    %v3797 = vmul.f32 %v3795, 0.7978846
    %v3798 = vmul.f32 %v3796, 0.7978846
    %v3799 = vtanh.pop %v3797
    %v3800 = vtanh.pop %v3798
    %v3801 = vadd.f32 %v3799, 1.0
    %v3802 = vadd.f32 %v3800, 1.0
    %v3803 = vmul.f32 %v3801, 0.5
    %v3804 = vmul.f32 %v3802, 0.5
    %v3805 = vmul.f32 %v3783, %v3803
    %v3806 = vmul.f32 %v3786, %v3804
    %v3807 = vpack.c.bf16 %v3806, %v3805
    %v3808 = vlaneseq
    %v3809 = vshrl.u32 %v3808, 7
    %v3810 = vsub.s32 3, %v3809
    %v3811 = vrot.slane %v2086, %v3810
    %v3820 = vunpack.c.l.b16 %v2077
    %v3821 = vunpack.c.l.b16 %v2078
    %v3822 = vunpack.c.l.b16 %v2079
    %v3823 = vunpack.c.l.b16 %v2080
    %v3824 = vunpack.c.l.b16 %v2081
    %v3825 = vunpack.c.l.b16 %v2082
    %v3826 = vunpack.c.l.b16 %v2083
    %v3827 = vunpack.c.l.b16 %v2084
    %v3828 = vpack.c.b16 %v3821, %v3820
    %v3829 = vpack.c.b16 %v3823, %v3822
    %v3830 = vpack.c.b16 %v3825, %v3824
    %v3831 = vpack.c.b16 %v3827, %v3826
    %v3837 = vsel %vm1972, %v3807, 0
    %3839 = vmatprep.subr.bf16.mxu0 0
    %3840 = vmatpush1.bf16.msra.mxu0 0
    %3841 = vmatprep.subr.bf16.mxu0 0
    %3842 = vmatpush1.bf16.msra.mxu0 0
    %3843 = vmatprep.subr.bf16.mxu0 0
    %3844 = vmatpush1.bf16.msra.mxu0 0
    %3845 = vmatprep.subr.bf16.mxu0 0
    %3846 = vmatpush1.bf16.msra.mxu0 0
    %3847 = vmatprep.subr.bf16.mxu0 0
    %3848 = vmatpush1.bf16.msra.mxu0 %v3831
    %3849 = vmatprep.subr.bf16.mxu0 0
    %3850 = vmatpush1.bf16.msra.mxu0 %v3830
    %3851 = vmatprep.subr.bf16.mxu0 0
    %3852 = vmatpush1.bf16.msra.mxu0 %v3829
    %3853 = vmatprep.subr.bf16.mxu0 0
    %3854 = vmatpush1.bf16.msra.mxu0 %v3828
    %3855 = vmatprep.subr.bf16.mxu0 0
    %3856 = vmatpush2.bf16.msra.mxu0 0
    %3857 = vmatprep.subr.bf16.mxu0 0
    %3858 = vmatpush2.bf16.msra.mxu0 0
    %3859 = vmatprep.subr.bf16.mxu0 0
    %3860 = vmatpush2.bf16.msra.mxu0 0
    %3861 = vmatprep.subr.bf16.mxu0 0
    %3862 = vmatpush2.bf16.msra.mxu0 0
    %3863 = vmatprep.subr.bf16.mxu0 0
    %3864 = vmatpush2.bf16.msra.mxu0 0
    %3865 = vmatprep.subr.bf16.mxu0 0
    %3866 = vmatpush2.bf16.msra.mxu0 0
    %3867 = vmatprep.subr.bf16.mxu0 0
    %3868 = vmatpush2.bf16.msra.mxu0 0
    %3869 = vmatprep.subr.bf16.mxu0 0
    %3870 = vmatpush2.bf16.msra.mxu0 0
    %3871 = vmatprep.mubr.bf16.mxu0 0
    %3872 = vmatmul.mubr.bf16.gmra.mxu0 %v3837
    %v3873 = vpop.f32.mrf.mxu0
    %v3874 = vadd.f32 %v3811, %v3873
    %v3875 = vpop.f32.mrf.mxu0
    %v3876 = vpop.f32.mrf.mxu0
    %v3877 = vadd.f32 %v3811, %v3876
    %v3878 = vpop.f32.mrf.mxu0
    %3879 = vdwg.mxu0
    %v3880 = vadd.f32 %v3874, %v3724
    %v3881 = vadd.f32 %v3877, %v3725
    %v3882 = vsel %vm124, %v3880, 0.0
    %3883 = vadd.xlane.f32.xlu0 %v3882
    %v3884 = vpop.xlane.xlu0 %3883
    %v3885 = vsel %vm124, %v3881, 0.0
    %3886 = vadd.xlane.f32.xlu0 %v3885
    %v3887 = vpop.xlane.xlu0 %3886
    %v3888 = vmul.f32 %v3884, %v131
    %v3889 = vmul.f32 %v3887, %v131
    %v3890 = vsub.f32 %v3880, %v3888
    %v3891 = vsub.f32 %v3881, %v3889
    %v3892 = vmul.f32 %v3890, %v3890
    %v3893 = vmul.f32 %v3891, %v3891
    %v3894 = vsel %vm124, %v3892, 0.0
    %3895 = vadd.xlane.f32.xlu0 %v3894
    %v3896 = vpop.xlane.xlu0 %3895
    %v3897 = vsel %vm124, %v3893, 0.0
    %3898 = vadd.xlane.f32.xlu0 %v3897
    %v3899 = vpop.xlane.xlu0 %3898
    %v3900 = vmul.f32 %v3896, %v131
    %v3901 = vmul.f32 %v3899, %v131
    %v3902 = vadd.f32 %v3900, 1e-12
    %v3903 = vadd.f32 %v3901, 1e-12
    %v3904 = vrsqrt.pop %v3902
    %v3905 = vrsqrt.pop %v3903
    %v3906 = vmul.f32 %v3890, %v3904
    %v3907 = vmul.f32 %v3891, %v3905
    %v3908 = vlaneseq
    %v3909 = vshrl.u32 %v3908, 7
    %v3910 = vsub.s32 4, %v3909
    %v3911 = vrot.slane %v2086, %v3910
    %v3912 = vmul.f32 %v3906, %v3911
    %v3913 = vmul.f32 %v3907, %v3911
    %v3914 = vlaneseq
    %v3915 = vshrl.u32 %v3914, 7
    %v3916 = vsub.s32 5, %v3915
    %v3917 = vrot.slane %v2086, %v3916
    %v3918 = vadd.f32 %v3912, %v3917
    %v3919 = vadd.f32 %v3913, %v3917
    %v3921 = vrot.slane %v3919, 7
    %vm3923 = vcmask 1040384
    %v3924 = vsel %vm3923, %v3918, %v3921
    %v3925 = vpack.c.bf16 %v3924, %v3924
    %v3926 = vld [vmem:[#allocation11] sm:$0xf]
    %v3927 = vld [vmem:[#allocation11 + $0x4] sm:$0xf]
    %v3928 = vld [vmem:[#allocation11 + $0x8] sm:$0xf]
    %v3929 = vld [vmem:[#allocation11 + $0xc] sm:$0xf]
    %v3930 = vld [vmem:[%s11] sm:$0x1]
    %v3932 = vlaneseq
    %v3933 = vshrl.u32 %v3932, 7
    %v3934 = vsub.s32 0, %v3933
    %v3935 = vrot.slane %v3930, %v3934
    %v3941 = vunpack.c.l.b16 %v3926
    %v3942 = vunpack.c.l.b16 %v3927
    %v3943 = vunpack.c.l.b16 %v3928
    %v3944 = vunpack.c.l.b16 %v3929
    %v3945 = vpack.c.b16 %v3942, %v3941
    %v3946 = vpack.c.b16 %v3944, %v3943
    %v3950 = vsel %vm124, %v3925, 0
    %3952 = vmatprep.subr.bf16.mxu0 0
    %3953 = vmatpush1.bf16.msra.mxu0 0
    %3954 = vmatprep.subr.bf16.mxu0 0
    %3955 = vmatpush1.bf16.msra.mxu0 0
    %3956 = vmatprep.subr.bf16.mxu0 0
    %3957 = vmatpush1.bf16.msra.mxu0 0
    %3958 = vmatprep.subr.bf16.mxu0 0
    %3959 = vmatpush1.bf16.msra.mxu0 0
    %3960 = vmatprep.subr.bf16.mxu0 0
    %3961 = vmatpush1.bf16.msra.mxu0 0
    %3962 = vmatprep.subr.bf16.mxu0 0
    %3963 = vmatpush1.bf16.msra.mxu0 0
    %3964 = vmatprep.subr.bf16.mxu0 0
    %3965 = vmatpush1.bf16.msra.mxu0 %v3946
    %3966 = vmatprep.subr.bf16.mxu0 0
    %3967 = vmatpush1.bf16.msra.mxu0 %v3945
    %3968 = vmatprep.subr.bf16.mxu0 0
    %3969 = vmatpush2.bf16.msra.mxu0 0
    %3970 = vmatprep.subr.bf16.mxu0 0
    %3971 = vmatpush2.bf16.msra.mxu0 0
    %3972 = vmatprep.subr.bf16.mxu0 0
    %3973 = vmatpush2.bf16.msra.mxu0 0
    %3974 = vmatprep.subr.bf16.mxu0 0
    %3975 = vmatpush2.bf16.msra.mxu0 0
    %3976 = vmatprep.subr.bf16.mxu0 0
    %3977 = vmatpush2.bf16.msra.mxu0 0
    %3978 = vmatprep.subr.bf16.mxu0 0
    %3979 = vmatpush2.bf16.msra.mxu0 0
    %3980 = vmatprep.subr.bf16.mxu0 0
    %3981 = vmatpush2.bf16.msra.mxu0 0
    %3982 = vmatprep.subr.bf16.mxu0 0
    %3983 = vmatpush2.bf16.msra.mxu0 0
    %3984 = vmatprep.mubr.bf16.mxu0 0
    %3985 = vmatmul.mubr.bf16.gmra.mxu0 %v3950
    %v3986 = vpop.f32.mrf.mxu0
    %v3987 = vadd.f32 %v3935, %v3986
    %v3988 = vpop.f32.mrf.mxu0
    %v3989 = vpop.f32.mrf.mxu0
    %v3990 = vpop.f32.mrf.mxu0
    %3991 = vdwg.mxu0
    %3992 = vst [vmem:[#allocation13] sm:$0x3] %v3987
    // Predicated region
    $region74: #{tpu_custom_call.1} parent=1 // pred_check
      _
    $region75: #{tpu_custom_call.1} parent=1 // pred_check_branch
      %3994 = sbr.rel (0) target = $region77
    $region76: #{tpu_custom_call.1} parent=1 // pred_region
      %s3996 = ssub.s32 32, 32
      %3997 = vsyncadd [#allocation4], %s3996
      %s3999 = sshll.u32 [#allocation13], 4
      %s4000 = int_to_ptr.vmem [resolvable:$true] %s3999
      %4002 = dma.vmem_to_hbm [thread:$0]  %s4000, 32, %s12, [#allocation4]
    $region77: #{tpu_custom_call.1} parent=1 // pred_fallthru
      _
    // Predicated region
    $region78: #{tpu_custom_call.1} parent=1 // pred_check
      _
    $region79: #{tpu_custom_call.1} parent=1 // pred_check_branch
      %4004 = sbr.rel (0) target = $region81
    $region80: #{tpu_custom_call.1} parent=1 // pred_region
      %4005 = dma.done [#allocation4], 32
    $region81: #{tpu_custom_call.1} parent=1 // pred_fallthru
      _
    %4006 = vsyncpa [#allocation3], 1
    %4007 = vsyncpa [#allocation6], 1
    %4008 = vsyncpa [#allocation9], 1
    %4009 = vsyncpa [#allocation12], 1
    %4010 = vsyncpa [#allocation4], 1

</llo_original>
